<compile_context>
chip_gen: v7x
topology: tpu7x:2x2x1
jax: 0.10.0
libtpu: 0.0.40
codegen_flags: <defaults>
</compile_context>

<pallas_src>
import functools

import jax
import jax.numpy as jnp
from jax.experimental import pallas as pl
from jax.experimental.pallas import tpu as pltpu

TM_DEFAULT = 256
TN = 128
GROUPS = 8  # group count inside VargDarkNetBlock's 3x3 group conv


def _rup(x, m):
    return (x + m - 1) // m * m


# ----------------------------------------------------------------------------
# Pallas kernels: single-shot matmul with fused bias / ReLU / residual epilogue
# ----------------------------------------------------------------------------
def _mm_bias_act_kernel(x_ref, w_ref, b_ref, o_ref, *, relu):
    y = jnp.dot(x_ref[...], w_ref[...], preferred_element_type=jnp.float32)
    y = y + b_ref[...]
    if relu:
        y = jnp.maximum(y, 0.0)
    o_ref[...] = y.astype(o_ref.dtype)


def _mm_bias_res_act_kernel(x_ref, w_ref, b_ref, r_ref, o_ref, *, relu):
    y = jnp.dot(x_ref[...], w_ref[...], preferred_element_type=jnp.float32)
    y = y + b_ref[...] + r_ref[...]
    if relu:
        y = jnp.maximum(y, 0.0)
    o_ref[...] = y.astype(o_ref.dtype)


def matmul_bias_act(x, w, b, *, residual=None, relu=False):
    """out = act(x @ w + b [+ residual]).  x:[M,K], w:[K,N], b:[N].

    Single K tile (TK = padded K), bf16 operands, f32 accumulate/epilogue.
    """
    M, K = x.shape
    N = w.shape[1]
    Kp, Np = _rup(K, 128), _rup(N, 128)
    tm = TM_DEFAULT
    Mp = _rup(M, tm) if M > tm else _rup(M, 8)
    tm = min(tm, Mp)
    tn = TN  # Np is always a multiple of 128

    xp = jnp.pad(x.astype(jnp.bfloat16), ((0, Mp - M), (0, Kp - K)))
    wp = jnp.pad(w.astype(jnp.bfloat16), ((0, Kp - K), (0, Np - N)))
    bp = jnp.pad(b.astype(jnp.float32), (0, Np - N)).reshape(1, Np)

    x_spec = pl.BlockSpec((tm, Kp), lambda i, j: (i, 0))
    w_spec = pl.BlockSpec((Kp, tn), lambda i, j: (0, j))
    b_spec = pl.BlockSpec((1, tn), lambda i, j: (0, j))
    o_spec = pl.BlockSpec((tm, tn), lambda i, j: (i, j))

    if residual is None:
        kernel = functools.partial(_mm_bias_act_kernel, relu=relu)
        in_specs = [x_spec, w_spec, b_spec]
        args = (xp, wp, bp)
    else:
        rp = jnp.pad(residual.astype(jnp.float32), ((0, Mp - M), (0, Np - N)))
        r_spec = pl.BlockSpec((tm, tn), lambda i, j: (i, j))
        kernel = functools.partial(_mm_bias_res_act_kernel, relu=relu)
        in_specs = [x_spec, w_spec, b_spec, r_spec]
        args = (xp, wp, bp, rp)

    out = pl.pallas_call(
        kernel,
        out_shape=jax.ShapeDtypeStruct((Mp, Np), jnp.float32),
        grid_spec=pltpu.PrefetchScalarGridSpec(
            num_scalar_prefetch=0,
            grid=(Mp // tm, Np // tn),
            in_specs=in_specs,
            out_specs=o_spec,
        ),
        compiler_params=pltpu.CompilerParams(
            dimension_semantics=("parallel", "parallel"),
        ),
    )(*args)
    return out[:M, :N]


# ----------------------------------------------------------------------------
# Conv glue (im2col, group-weight construction, BN folding)
# ----------------------------------------------------------------------------
def im2col(x, kh, kw, stride, padding):
    B, H, W, C = x.shape
    xp = jnp.pad(x, ((0, 0), (padding, padding), (padding, padding), (0, 0)))
    Ho = (H + 2 * padding - kh) // stride + 1
    Wo = (W + 2 * padding - kw) // stride + 1
    cols = []
    for i in range(kh):
        for j in range(kw):
            cols.append(
                xp[:, i : i + (Ho - 1) * stride + 1 : stride,
                   j : j + (Wo - 1) * stride + 1 : stride, :]
            )
    patches = jnp.concatenate(cols, axis=-1)  # [B, Ho, Wo, kh*kw*C]
    return patches.reshape(B * Ho * Wo, kh * kw * C), (B, Ho, Wo)


def _group_weight_2d(w, groups):
    """Group-conv weight [Cout, Cin/g, kh, kw] -> dense [kh*kw*Cin, Cout].

    Block-diagonal by construction.  With Cout/group <= 2 and N lane-padded to
    128, one dense matmul is strictly cheaper than per-group matmuls here.
    """
    cout, cin_g, kh, kw = w.shape
    cout_g = cout // groups
    cin = cin_g * groups
    wt = jnp.transpose(w, (2, 3, 1, 0)).reshape(kh, kw, cin_g, groups, cout_g)
    eye = jnp.eye(groups, dtype=w.dtype)
    # dense[k,l, gi, ci, go, co] = wt[k,l,ci,go,co] * (gi == go)
    dense = jnp.einsum("klcgo,hg->klhcgo", wt, eye)
    return dense.reshape(kh * kw * cin, cout)


def conv2d(x, w, b, *, stride=1, padding=0, groups=1, relu=False, residual=None):
    """x: NHWC; w: PyTorch layout [Cout, Cin/groups, kh, kw]; b: [Cout] or None.

    residual (NHWC, same shape as output) is fused into the matmul epilogue
    before the ReLU.
    """
    B, H, W, Cin = x.shape
    Cout, _, kh, kw = w.shape
    assert Cin % groups == 0 and Cout % groups == 0

    x = x.astype(jnp.bfloat16)  # matmul operand precision (f32 accumulate)

    if kh == 1 and kw == 1 and stride == 1 and padding == 0 and groups == 1:
        # 1x1 conv: no im2col, plain reshape.
        lhs = x.reshape(B * H * W, Cin)
        w2d = w.reshape(Cout, Cin).T
        Ho, Wo = H, W
    else:
        if groups > 1:
            w2d = _group_weight_2d(w, groups)
        else:
            w2d = jnp.transpose(w, (2, 3, 1, 0)).reshape(kh * kw * Cin, Cout)
        lhs, (B, Ho, Wo) = im2col(x, kh, kw, stride, padding)

    if b is None:
        b = jnp.zeros((Cout,), jnp.float32)
    res2d = None
    if residual is not None:
        res2d = residual.reshape(B * Ho * Wo, Cout)

    out = matmul_bias_act(lhs, w2d, b, residual=res2d, relu=relu)
    return out.reshape(B, Ho, Wo, Cout)


def head_avgpool_fc(x, w, b, num_classes):
    """AvgPool2d(7) + 1x1 conv (BN folded) as one [B, H*W*C] x [H*W*C, nc] matmul."""
    B, H, W, C = x.shape
    lhs = x.reshape(B, H * W * C)
    w2d = w.reshape(num_classes, C).T / float(H * W)      # [C, nc], pre-scaled
    w_full = jnp.tile(w2d, (H * W, 1))                     # [H*W*C, nc]
    return matmul_bias_act(lhs, w_full, b, relu=False)     # [B, nc]


def fold_bn(w, b, gamma, beta, mean, var, eps=1e-5):
    scale = gamma / jnp.sqrt(var + eps)
    w_f = w * scale[:, None, None, None]
    b_f = (b - mean) * scale + beta
    return w_f, b_f


# ----------------------------------------------------------------------------
# Parameter construction (deterministic, synthetic; BN folded into conv)
# ----------------------------------------------------------------------------
def _conv_bn_params(key, cin, cout, k, groups=1, scale=0.1):
    ks = jax.random.split(key, 6)
    w = jax.random.normal(ks[0], (cout, cin // groups, k, k), jnp.float32) * scale
    b = jax.random.normal(ks[1], (cout,), jnp.float32) * scale
    gamma = 1.0 + 0.1 * jax.random.normal(ks[2], (cout,), jnp.float32)
    beta = 0.1 * jax.random.normal(ks[3], (cout,), jnp.float32)
    mean = 0.1 * jax.random.normal(ks[4], (cout,), jnp.float32)
    var = 0.5 + jax.random.uniform(ks[5], (cout,), jnp.float32)
    return fold_bn(w, b, gamma, beta, mean, var)


def init_params(key, layers, filters, num_classes):
    keys = jax.random.split(key, 4 * sum(layers) + len(layers) + 8)
    ki = iter(keys)
    params = {"conv1": _conv_bn_params(next(ki), 3, filters[0], 3)}
    stages = []
    for i, nblk in enumerate(layers):
        cin, cout = filters[i], filters[i + 1]
        stage = {"down": _conv_bn_params(next(ki), cin, cout, 3), "blocks": []}
        mid = cout // 2
        assert mid % GROUPS == 0, "block mid channels must be divisible by GROUPS"
        for _ in range(nblk):
            blk = {
                "conv1": _conv_bn_params(next(ki), cout, mid, 1),
                "dw": _conv_bn_params(next(ki), mid, mid, 3, groups=GROUPS),
                "pw": _conv_bn_params(next(ki), mid, cout, 1),
            }
            stage["blocks"].append(blk)
        stages.append(stage)
    params["stages"] = stages
    params["output"] = _conv_bn_params(next(ki), filters[-1], num_classes, 1)
    return params


# ----------------------------------------------------------------------------
# VarGDarknet forward
# ----------------------------------------------------------------------------
def vargdarknet_forward(params, x_nchw, *, num_classes, include_top=True,
                        flat_output=True):
    x = jnp.transpose(x_nchw, (0, 2, 3, 1)).astype(jnp.float32)  # NCHW -> NHWC
    # QuantStub(scale=1/128) / DeQuantStub are identities in float execution.
    outputs = []

    w, b = params["conv1"]
    x = conv2d(x, w, b, stride=1, padding=1, relu=True)
    outputs.append(x)

    for stage in params["stages"]:
        w, b = stage["down"]
        x = conv2d(x, w, b, stride=2, padding=1, relu=True)
        for blk in stage["blocks"]:
            identity = x
            w1, b1 = blk["conv1"]
            y = conv2d(x, w1, b1, relu=True)                              # 1x1 reduce
            wd, bd = blk["dw"]
            y = conv2d(y, wd, bd, stride=1, padding=1, groups=GROUPS,     # 3x3 group
                       relu=True)
            wp, bp = blk["pw"]
            # 1x1 expand with residual add + ReLU fused into the matmul epilogue.
            x = conv2d(y, wp, bp, relu=True, residual=identity)
        outputs.append(x)

    if not include_top:
        return [jnp.transpose(o, (0, 3, 1, 2)) for o in outputs]  # back to NCHW

    wo, bo = params["output"]
    x = head_avgpool_fc(x, wo, bo, num_classes)  # AvgPool2d(7) + 1x1 conv fused

    if flat_output:
        return x                                  # [B, num_classes]
    return x.reshape(-1, num_classes, 1, 1)       # NCHW [B, nc, 1, 1]


# ----------------------------------------------------------------------------
if __name__ == "__main__":
    key = jax.random.PRNGKey(0)
    kx, kp = jax.random.split(key)

    layers = [1, 1]          # one VargDarkNetBlock per stage
    filters = [8, 16, 32]    # conv1 out, stage0 out, stage1 out
    num_classes = 10

    # 28x28 input -> 28 (conv1) -> 14 -> 7, so AvgPool2d(7) is valid.
    x = jax.random.normal(kx, (2, 3, 28, 28), jnp.float32)  # NCHW, as PyTorch

    params = init_params(kp, layers, filters, num_classes)
    fwd = jax.jit(functools.partial(vargdarknet_forward, num_classes=num_classes))
    out = jax.block_until_ready(fwd(params, x))

    assert out.shape == (2, num_classes), out.shape
    assert bool(jnp.all(jnp.isfinite(out)))
    print("KERNEL_OK")
</pallas_src>

<mosaic_0001>
module attributes {stable_mosaic.version = 11 : i64} {
  func.func @_mm_bias_act_kernel(%arg0: i32, %arg1: i32, %arg2: memref<256x128xbf16, #tpu.memory_space<vmem>>, %arg3: memref<128x128xbf16, #tpu.memory_space<vmem>>, %arg4: memref<1x128xf32, #tpu.memory_space<vmem>>, %arg5: memref<256x128xf32, #tpu.memory_space<vmem>>) attributes {dimension_semantics = [#tpu.dimension_semantics<parallel>, #tpu.dimension_semantics<parallel>], iteration_bounds = array<i64: 7, 1>, scalar_prefetch = 0 : i64, scratch_operands = 0 : i64, tpu.core_type = #tpu.core_type<tc>, window_params = [{transform_indices = @transform_0, window_bounds = array<i64: 256, 128>}, {transform_indices = @transform_1, window_bounds = array<i64: 128, 128>}, {transform_indices = @transform_2, window_bounds = array<i64: 1, 128>}, {transform_indices = @transform_3, window_bounds = array<i64: 256, 128>}]} {
    %c0 = arith.constant 0 : index
    %c0_0 = arith.constant 0 : index
    %0 = vector.load %arg2[%c0, %c0_0] : memref<256x128xbf16, #tpu.memory_space<vmem>>, vector<256x128xbf16>
    %c0_1 = arith.constant 0 : index
    %c0_2 = arith.constant 0 : index
    %1 = vector.load %arg3[%c0_1, %c0_2] : memref<128x128xbf16, #tpu.memory_space<vmem>>, vector<128x128xbf16>
    %cst = arith.constant dense<0.000000e+00> : vector<256x128xf32>
    %2 = tpu.matmul %0, %1, %cst {dimension_numbers = #tpu.dot_dimension_numbers<[1], [0], [0], [1], [0, 0, 1, 1], [], []>} : vector<256x128xbf16>, vector<128x128xbf16>, vector<256x128xf32> -> vector<256x128xf32>
    %c0_3 = arith.constant 0 : index
    %c0_4 = arith.constant 0 : index
    %3 = vector.load %arg4[%c0_3, %c0_4] : memref<1x128xf32, #tpu.memory_space<vmem>>, vector<1x128xf32>
    %4 = vector.broadcast %3 : vector<1x128xf32> to vector<256x128xf32>
    %5 = arith.addf %2, %4 : vector<256x128xf32>
    %cst_5 = arith.constant 0.000000e+00 : f32
    %6 = vector.broadcast %cst_5 : f32 to vector<256x128xf32>
    %7 = arith.maximumf %5, %6 : vector<256x128xf32>
    %c0_6 = arith.constant 0 : index
    %c0_7 = arith.constant 0 : index
    %8 = vector.load %arg5[%c0_6, %c0_7] : memref<256x128xf32, #tpu.memory_space<vmem>>, vector<256x128xf32>
    tpu.vector_store %arg5[%c0_6, %c0_7], %7 {strides = array<i32>} : memref<256x128xf32, #tpu.memory_space<vmem>>, vector<256x128xf32>,
    return
  }
  func.func @transform_0(%arg0: i32, %arg1: i32) -> (i32, i32) {
    %c0_i32 = arith.constant 0 : i32
    %c0_i32_0 = arith.constant 0 : i32
    return %arg0, %c0_i32 : i32, i32
  }
  func.func @transform_1(%arg0: i32, %arg1: i32) -> (i32, i32) {
    %c0_i32 = arith.constant 0 : i32
    %c0_i32_0 = arith.constant 0 : i32
    return %c0_i32, %arg1 : i32, i32
  }
  func.func @transform_2(%arg0: i32, %arg1: i32) -> (i32, i32) {
    %c0_i32 = arith.constant 0 : i32
    %c0_i32_0 = arith.constant 0 : i32
    return %c0_i32, %arg1 : i32, i32
  }
  func.func @transform_3(%arg0: i32, %arg1: i32) -> (i32, i32) {
    %c0_i32 = arith.constant 0 : i32
    return %arg0, %arg1 : i32, i32
  }
}

module attributes {stable_mosaic.version = 11 : i64} {
  func.func @_mm_bias_act_kernel(%arg0: i32, %arg1: i32, %arg2: memref<256x128xbf16, #tpu.memory_space<vmem>>, %arg3: memref<128x128xbf16, #tpu.memory_space<vmem>>, %arg4: memref<1x128xf32, #tpu.memory_space<vmem>>, %arg5: memref<256x128xf32, #tpu.memory_space<vmem>>) attributes {dimension_semantics = [#tpu.dimension_semantics<parallel>, #tpu.dimension_semantics<parallel>], iteration_bounds = array<i64: 2, 1>, scalar_prefetch = 0 : i64, scratch_operands = 0 : i64, tpu.core_type = #tpu.core_type<tc>, window_params = [{transform_indices = @transform_0, window_bounds = array<i64: 256, 128>}, {transform_indices = @transform_1, window_bounds = array<i64: 128, 128>}, {transform_indices = @transform_2, window_bounds = array<i64: 1, 128>}, {transform_indices = @transform_3, window_bounds = array<i64: 256, 128>}]} {
    %c0 = arith.constant 0 : index
    %c0_0 = arith.constant 0 : index
    %0 = vector.load %arg2[%c0, %c0_0] : memref<256x128xbf16, #tpu.memory_space<vmem>>, vector<256x128xbf16>
    %c0_1 = arith.constant 0 : index
    %c0_2 = arith.constant 0 : index
    %1 = vector.load %arg3[%c0_1, %c0_2] : memref<128x128xbf16, #tpu.memory_space<vmem>>, vector<128x128xbf16>
    %cst = arith.constant dense<0.000000e+00> : vector<256x128xf32>
    %2 = tpu.matmul %0, %1, %cst {dimension_numbers = #tpu.dot_dimension_numbers<[1], [0], [0], [1], [0, 0, 1, 1], [], []>} : vector<256x128xbf16>, vector<128x128xbf16>, vector<256x128xf32> -> vector<256x128xf32>
    %c0_3 = arith.constant 0 : index
    %c0_4 = arith.constant 0 : index
    %3 = vector.load %arg4[%c0_3, %c0_4] : memref<1x128xf32, #tpu.memory_space<vmem>>, vector<1x128xf32>
    %4 = vector.broadcast %3 : vector<1x128xf32> to vector<256x128xf32>
    %5 = arith.addf %2, %4 : vector<256x128xf32>
    %cst_5 = arith.constant 0.000000e+00 : f32
    %6 = vector.broadcast %cst_5 : f32 to vector<256x128xf32>
    %7 = arith.maximumf %5, %6 : vector<256x128xf32>
    %c0_6 = arith.constant 0 : index
    %c0_7 = arith.constant 0 : index
    %8 = vector.load %arg5[%c0_6, %c0_7] : memref<256x128xf32, #tpu.memory_space<vmem>>, vector<256x128xf32>
    tpu.vector_store %arg5[%c0_6, %c0_7], %7 {strides = array<i32>} : memref<256x128xf32, #tpu.memory_space<vmem>>, vector<256x128xf32>,
    return
  }
  func.func @transform_0(%arg0: i32, %arg1: i32) -> (i32, i32) {
    %c0_i32 = arith.constant 0 : i32
    %c0_i32_0 = arith.constant 0 : i32
    return %arg0, %c0_i32 : i32, i32
  }
  func.func @transform_1(%arg0: i32, %arg1: i32) -> (i32, i32) {
    %c0_i32 = arith.constant 0 : i32
    %c0_i32_0 = arith.constant 0 : i32
    return %c0_i32, %arg1 : i32, i32
  }
  func.func @transform_2(%arg0: i32, %arg1: i32) -> (i32, i32) {
    %c0_i32 = arith.constant 0 : i32
    %c0_i32_0 = arith.constant 0 : i32
    return %c0_i32, %arg1 : i32, i32
  }
  func.func @transform_3(%arg0: i32, %arg1: i32) -> (i32, i32) {
    %c0_i32 = arith.constant 0 : i32
    return %arg0, %arg1 : i32, i32
  }
}

module attributes {stable_mosaic.version = 11 : i64} {
  func.func @_mm_bias_res_act_kernel(%arg0: i32, %arg1: i32, %arg2: memref<256x128xbf16, #tpu.memory_space<vmem>>, %arg3: memref<128x128xbf16, #tpu.memory_space<vmem>>, %arg4: memref<1x128xf32, #tpu.memory_space<vmem>>, %arg5: memref<256x128xf32, #tpu.memory_space<vmem>>, %arg6: memref<256x128xf32, #tpu.memory_space<vmem>>) attributes {dimension_semantics = [#tpu.dimension_semantics<parallel>, #tpu.dimension_semantics<parallel>], iteration_bounds = array<i64: 2, 1>, scalar_prefetch = 0 : i64, scratch_operands = 0 : i64, tpu.core_type = #tpu.core_type<tc>, window_params = [{transform_indices = @transform_0, window_bounds = array<i64: 256, 128>}, {transform_indices = @transform_1, window_bounds = array<i64: 128, 128>}, {transform_indices = @transform_2, window_bounds = array<i64: 1, 128>}, {transform_indices = @transform_3, window_bounds = array<i64: 256, 128>}, {transform_indices = @transform_4, window_bounds = array<i64: 256, 128>}]} {
    %c0 = arith.constant 0 : index
    %c0_0 = arith.constant 0 : index
    %0 = vector.load %arg2[%c0, %c0_0] : memref<256x128xbf16, #tpu.memory_space<vmem>>, vector<256x128xbf16>
    %c0_1 = arith.constant 0 : index
    %c0_2 = arith.constant 0 : index
    %1 = vector.load %arg3[%c0_1, %c0_2] : memref<128x128xbf16, #tpu.memory_space<vmem>>, vector<128x128xbf16>
    %cst = arith.constant dense<0.000000e+00> : vector<256x128xf32>
    %2 = tpu.matmul %0, %1, %cst {dimension_numbers = #tpu.dot_dimension_numbers<[1], [0], [0], [1], [0, 0, 1, 1], [], []>} : vector<256x128xbf16>, vector<128x128xbf16>, vector<256x128xf32> -> vector<256x128xf32>
    %c0_3 = arith.constant 0 : index
    %c0_4 = arith.constant 0 : index
    %3 = vector.load %arg4[%c0_3, %c0_4] : memref<1x128xf32, #tpu.memory_space<vmem>>, vector<1x128xf32>
    %4 = vector.broadcast %3 : vector<1x128xf32> to vector<256x128xf32>
    %5 = arith.addf %2, %4 : vector<256x128xf32>
    %c0_5 = arith.constant 0 : index
    %c0_6 = arith.constant 0 : index
    %6 = vector.load %arg5[%c0_5, %c0_6] : memref<256x128xf32, #tpu.memory_space<vmem>>, vector<256x128xf32>
    %7 = arith.addf %5, %6 : vector<256x128xf32>
    %cst_7 = arith.constant 0.000000e+00 : f32
    %8 = vector.broadcast %cst_7 : f32 to vector<256x128xf32>
    %9 = arith.maximumf %7, %8 : vector<256x128xf32>
    %c0_8 = arith.constant 0 : index
    %c0_9 = arith.constant 0 : index
    %10 = vector.load %arg6[%c0_8, %c0_9] : memref<256x128xf32, #tpu.memory_space<vmem>>, vector<256x128xf32>
    tpu.vector_store %arg6[%c0_8, %c0_9], %9 {strides = array<i32>} : memref<256x128xf32, #tpu.memory_space<vmem>>, vector<256x128xf32>,
    return
  }
  func.func @transform_0(%arg0: i32, %arg1: i32) -> (i32, i32) {
    %c0_i32 = arith.constant 0 : i32
    %c0_i32_0 = arith.constant 0 : i32
    return %arg0, %c0_i32 : i32, i32
  }
  func.func @transform_1(%arg0: i32, %arg1: i32) -> (i32, i32) {
    %c0_i32 = arith.constant 0 : i32
    %c0_i32_0 = arith.constant 0 : i32
    return %c0_i32, %arg1 : i32, i32
  }
  func.func @transform_2(%arg0: i32, %arg1: i32) -> (i32, i32) {
    %c0_i32 = arith.constant 0 : i32
    %c0_i32_0 = arith.constant 0 : i32
    return %c0_i32, %arg1 : i32, i32
  }
  func.func @transform_3(%arg0: i32, %arg1: i32) -> (i32, i32) {
    %c0_i32 = arith.constant 0 : i32
    return %arg0, %arg1 : i32, i32
  }
  func.func @transform_4(%arg0: i32, %arg1: i32) -> (i32, i32) {
    %c0_i32 = arith.constant 0 : i32
    return %arg0, %arg1 : i32, i32
  }
}

module attributes {stable_mosaic.version = 11 : i64} {
  func.func @_mm_bias_act_kernel(%arg0: i32, %arg1: i32, %arg2: memref<104x256xbf16, #tpu.memory_space<vmem>>, %arg3: memref<256x128xbf16, #tpu.memory_space<vmem>>, %arg4: memref<1x128xf32, #tpu.memory_space<vmem>>, %arg5: memref<104x128xf32, #tpu.memory_space<vmem>>) attributes {dimension_semantics = [#tpu.dimension_semantics<parallel>, #tpu.dimension_semantics<parallel>], iteration_bounds = array<i64: 1, 1>, scalar_prefetch = 0 : i64, scratch_operands = 0 : i64, tpu.core_type = #tpu.core_type<tc>, window_params = [{transform_indices = @transform_0, window_bounds = array<i64: 104, 256>}, {transform_indices = @transform_1, window_bounds = array<i64: 256, 128>}, {transform_indices = @transform_2, window_bounds = array<i64: 1, 128>}, {transform_indices = @transform_3, window_bounds = array<i64: 104, 128>}]} {
    %c0 = arith.constant 0 : index
    %c0_0 = arith.constant 0 : index
    %0 = vector.load %arg2[%c0, %c0_0] : memref<104x256xbf16, #tpu.memory_space<vmem>>, vector<104x256xbf16>
    %c0_1 = arith.constant 0 : index
    %c0_2 = arith.constant 0 : index
    %1 = vector.load %arg3[%c0_1, %c0_2] : memref<256x128xbf16, #tpu.memory_space<vmem>>, vector<256x128xbf16>
    %cst = arith.constant dense<0.000000e+00> : vector<104x128xf32>
    %2 = tpu.matmul %0, %1, %cst {dimension_numbers = #tpu.dot_dimension_numbers<[1], [0], [0], [1], [0, 0, 1, 1], [], []>} : vector<104x256xbf16>, vector<256x128xbf16>, vector<104x128xf32> -> vector<104x128xf32>
    %c0_3 = arith.constant 0 : index
    %c0_4 = arith.constant 0 : index
    %3 = vector.load %arg4[%c0_3, %c0_4] : memref<1x128xf32, #tpu.memory_space<vmem>>, vector<1x128xf32>
    %4 = vector.broadcast %3 : vector<1x128xf32> to vector<104x128xf32>
    %5 = arith.addf %2, %4 : vector<104x128xf32>
    %cst_5 = arith.constant 0.000000e+00 : f32
    %6 = vector.broadcast %cst_5 : f32 to vector<104x128xf32>
    %7 = arith.maximumf %5, %6 : vector<104x128xf32>
    %c0_6 = arith.constant 0 : index
    %c0_7 = arith.constant 0 : index
    %8 = vector.load %arg5[%c0_6, %c0_7] : memref<104x128xf32, #tpu.memory_space<vmem>>, vector<104x128xf32>
    tpu.vector_store %arg5[%c0_6, %c0_7], %7 {strides = array<i32>} : memref<104x128xf32, #tpu.memory_space<vmem>>, vector<104x128xf32>,
    return
  }
  func.func @transform_0(%arg0: i32, %arg1: i32) -> (i32, i32) {
    %c0_i32 = arith.constant 0 : i32
    %c0_i32_0 = arith.constant 0 : i32
    return %arg0, %c0_i32 : i32, i32
  }
  func.func @transform_1(%arg0: i32, %arg1: i32) -> (i32, i32) {
    %c0_i32 = arith.constant 0 : i32
    %c0_i32_0 = arith.constant 0 : i32
    return %c0_i32, %arg1 : i32, i32
  }
  func.func @transform_2(%arg0: i32, %arg1: i32) -> (i32, i32) {
    %c0_i32 = arith.constant 0 : i32
    %c0_i32_0 = arith.constant 0 : i32
    return %c0_i32, %arg1 : i32, i32
  }
  func.func @transform_3(%arg0: i32, %arg1: i32) -> (i32, i32) {
    %c0_i32 = arith.constant 0 : i32
    return %arg0, %arg1 : i32, i32
  }
}

module attributes {stable_mosaic.version = 11 : i64} {
  func.func @_mm_bias_act_kernel(%arg0: i32, %arg1: i32, %arg2: memref<104x128xbf16, #tpu.memory_space<vmem>>, %arg3: memref<128x128xbf16, #tpu.memory_space<vmem>>, %arg4: memref<1x128xf32, #tpu.memory_space<vmem>>, %arg5: memref<104x128xf32, #tpu.memory_space<vmem>>) attributes {dimension_semantics = [#tpu.dimension_semantics<parallel>, #tpu.dimension_semantics<parallel>], iteration_bounds = array<i64: 1, 1>, scalar_prefetch = 0 : i64, scratch_operands = 0 : i64, tpu.core_type = #tpu.core_type<tc>, window_params = [{transform_indices = @transform_0, window_bounds = array<i64: 104, 128>}, {transform_indices = @transform_1, window_bounds = array<i64: 128, 128>}, {transform_indices = @transform_2, window_bounds = array<i64: 1, 128>}, {transform_indices = @transform_3, window_bounds = array<i64: 104, 128>}]} {
    %c0 = arith.constant 0 : index
    %c0_0 = arith.constant 0 : index
    %0 = vector.load %arg2[%c0, %c0_0] : memref<104x128xbf16, #tpu.memory_space<vmem>>, vector<104x128xbf16>
    %c0_1 = arith.constant 0 : index
    %c0_2 = arith.constant 0 : index
    %1 = vector.load %arg3[%c0_1, %c0_2] : memref<128x128xbf16, #tpu.memory_space<vmem>>, vector<128x128xbf16>
    %cst = arith.constant dense<0.000000e+00> : vector<104x128xf32>
    %2 = tpu.matmul %0, %1, %cst {dimension_numbers = #tpu.dot_dimension_numbers<[1], [0], [0], [1], [0, 0, 1, 1], [], []>} : vector<104x128xbf16>, vector<128x128xbf16>, vector<104x128xf32> -> vector<104x128xf32>
    %c0_3 = arith.constant 0 : index
    %c0_4 = arith.constant 0 : index
    %3 = vector.load %arg4[%c0_3, %c0_4] : memref<1x128xf32, #tpu.memory_space<vmem>>, vector<1x128xf32>
    %4 = vector.broadcast %3 : vector<1x128xf32> to vector<104x128xf32>
    %5 = arith.addf %2, %4 : vector<104x128xf32>
    %cst_5 = arith.constant 0.000000e+00 : f32
    %6 = vector.broadcast %cst_5 : f32 to vector<104x128xf32>
    %7 = arith.maximumf %5, %6 : vector<104x128xf32>
    %c0_6 = arith.constant 0 : index
    %c0_7 = arith.constant 0 : index
    %8 = vector.load %arg5[%c0_6, %c0_7] : memref<104x128xf32, #tpu.memory_space<vmem>>, vector<104x128xf32>
    tpu.vector_store %arg5[%c0_6, %c0_7], %7 {strides = array<i32>} : memref<104x128xf32, #tpu.memory_space<vmem>>, vector<104x128xf32>,
    return
  }
  func.func @transform_0(%arg0: i32, %arg1: i32) -> (i32, i32) {
    %c0_i32 = arith.constant 0 : i32
    %c0_i32_0 = arith.constant 0 : i32
    return %arg0, %c0_i32 : i32, i32
  }
  func.func @transform_1(%arg0: i32, %arg1: i32) -> (i32, i32) {
    %c0_i32 = arith.constant 0 : i32
    %c0_i32_0 = arith.constant 0 : i32
    return %c0_i32, %arg1 : i32, i32
  }
  func.func @transform_2(%arg0: i32, %arg1: i32) -> (i32, i32) {
    %c0_i32 = arith.constant 0 : i32
    %c0_i32_0 = arith.constant 0 : i32
    return %c0_i32, %arg1 : i32, i32
  }
  func.func @transform_3(%arg0: i32, %arg1: i32) -> (i32, i32) {
    %c0_i32 = arith.constant 0 : i32
    return %arg0, %arg1 : i32, i32
  }
}

module attributes {stable_mosaic.version = 11 : i64} {
  func.func @_mm_bias_res_act_kernel(%arg0: i32, %arg1: i32, %arg2: memref<104x128xbf16, #tpu.memory_space<vmem>>, %arg3: memref<128x128xbf16, #tpu.memory_space<vmem>>, %arg4: memref<1x128xf32, #tpu.memory_space<vmem>>, %arg5: memref<104x128xf32, #tpu.memory_space<vmem>>, %arg6: memref<104x128xf32, #tpu.memory_space<vmem>>) attributes {dimension_semantics = [#tpu.dimension_semantics<parallel>, #tpu.dimension_semantics<parallel>], iteration_bounds = array<i64: 1, 1>, scalar_prefetch = 0 : i64, scratch_operands = 0 : i64, tpu.core_type = #tpu.core_type<tc>, window_params = [{transform_indices = @transform_0, window_bounds = array<i64: 104, 128>}, {transform_indices = @transform_1, window_bounds = array<i64: 128, 128>}, {transform_indices = @transform_2, window_bounds = array<i64: 1, 128>}, {transform_indices = @transform_3, window_bounds = array<i64: 104, 128>}, {transform_indices = @transform_4, window_bounds = array<i64: 104, 128>}]} {
    %c0 = arith.constant 0 : index
    %c0_0 = arith.constant 0 : index
    %0 = vector.load %arg2[%c0, %c0_0] : memref<104x128xbf16, #tpu.memory_space<vmem>>, vector<104x128xbf16>
    %c0_1 = arith.constant 0 : index
    %c0_2 = arith.constant 0 : index
    %1 = vector.load %arg3[%c0_1, %c0_2] : memref<128x128xbf16, #tpu.memory_space<vmem>>, vector<128x128xbf16>
    %cst = arith.constant dense<0.000000e+00> : vector<104x128xf32>
    %2 = tpu.matmul %0, %1, %cst {dimension_numbers = #tpu.dot_dimension_numbers<[1], [0], [0], [1], [0, 0, 1, 1], [], []>} : vector<104x128xbf16>, vector<128x128xbf16>, vector<104x128xf32> -> vector<104x128xf32>
    %c0_3 = arith.constant 0 : index
    %c0_4 = arith.constant 0 : index
    %3 = vector.load %arg4[%c0_3, %c0_4] : memref<1x128xf32, #tpu.memory_space<vmem>>, vector<1x128xf32>
    %4 = vector.broadcast %3 : vector<1x128xf32> to vector<104x128xf32>
    %5 = arith.addf %2, %4 : vector<104x128xf32>
    %c0_5 = arith.constant 0 : index
    %c0_6 = arith.constant 0 : index
    %6 = vector.load %arg5[%c0_5, %c0_6] : memref<104x128xf32, #tpu.memory_space<vmem>>, vector<104x128xf32>
    %7 = arith.addf %5, %6 : vector<104x128xf32>
    %cst_7 = arith.constant 0.000000e+00 : f32
    %8 = vector.broadcast %cst_7 : f32 to vector<104x128xf32>
    %9 = arith.maximumf %7, %8 : vector<104x128xf32>
    %c0_8 = arith.constant 0 : index
    %c0_9 = arith.constant 0 : index
    %10 = vector.load %arg6[%c0_8, %c0_9] : memref<104x128xf32, #tpu.memory_space<vmem>>, vector<104x128xf32>
    tpu.vector_store %arg6[%c0_8, %c0_9], %9 {strides = array<i32>} : memref<104x128xf32, #tpu.memory_space<vmem>>, vector<104x128xf32>,
    return
  }
  func.func @transform_0(%arg0: i32, %arg1: i32) -> (i32, i32) {
    %c0_i32 = arith.constant 0 : i32
    %c0_i32_0 = arith.constant 0 : i32
    return %arg0, %c0_i32 : i32, i32
  }
  func.func @transform_1(%arg0: i32, %arg1: i32) -> (i32, i32) {
    %c0_i32 = arith.constant 0 : i32
    %c0_i32_0 = arith.constant 0 : i32
    return %c0_i32, %arg1 : i32, i32
  }
  func.func @transform_2(%arg0: i32, %arg1: i32) -> (i32, i32) {
    %c0_i32 = arith.constant 0 : i32
    %c0_i32_0 = arith.constant 0 : i32
    return %c0_i32, %arg1 : i32, i32
  }
  func.func @transform_3(%arg0: i32, %arg1: i32) -> (i32, i32) {
    %c0_i32 = arith.constant 0 : i32
    return %arg0, %arg1 : i32, i32
  }
  func.func @transform_4(%arg0: i32, %arg1: i32) -> (i32, i32) {
    %c0_i32 = arith.constant 0 : i32
    return %arg0, %arg1 : i32, i32
  }
}

module attributes {stable_mosaic.version = 11 : i64} {
  func.func @_mm_bias_act_kernel(%arg0: i32, %arg1: i32, %arg2: memref<8x1664xbf16, #tpu.memory_space<vmem>>, %arg3: memref<1664x128xbf16, #tpu.memory_space<vmem>>, %arg4: memref<1x128xf32, #tpu.memory_space<vmem>>, %arg5: memref<8x128xf32, #tpu.memory_space<vmem>>) attributes {dimension_semantics = [#tpu.dimension_semantics<parallel>, #tpu.dimension_semantics<parallel>], iteration_bounds = array<i64: 1, 1>, scalar_prefetch = 0 : i64, scratch_operands = 0 : i64, tpu.core_type = #tpu.core_type<tc>, window_params = [{transform_indices = @transform_0, window_bounds = array<i64: 8, 1664>}, {transform_indices = @transform_1, window_bounds = array<i64: 1664, 128>}, {transform_indices = @transform_2, window_bounds = array<i64: 1, 128>}, {transform_indices = @transform_3, window_bounds = array<i64: 8, 128>}]} {
    %c0 = arith.constant 0 : index
    %c0_0 = arith.constant 0 : index
    %0 = vector.load %arg2[%c0, %c0_0] : memref<8x1664xbf16, #tpu.memory_space<vmem>>, vector<8x1664xbf16>
    %c0_1 = arith.constant 0 : index
    %c0_2 = arith.constant 0 : index
    %1 = vector.load %arg3[%c0_1, %c0_2] : memref<1664x128xbf16, #tpu.memory_space<vmem>>, vector<1664x128xbf16>
    %cst = arith.constant dense<0.000000e+00> : vector<8x128xf32>
    %2 = tpu.matmul %0, %1, %cst {dimension_numbers = #tpu.dot_dimension_numbers<[1], [0], [0], [1], [0, 0, 1, 1], [], []>} : vector<8x1664xbf16>, vector<1664x128xbf16>, vector<8x128xf32> -> vector<8x128xf32>
    %c0_3 = arith.constant 0 : index
    %c0_4 = arith.constant 0 : index
    %3 = vector.load %arg4[%c0_3, %c0_4] : memref<1x128xf32, #tpu.memory_space<vmem>>, vector<1x128xf32>
    %4 = vector.broadcast %3 : vector<1x128xf32> to vector<8x128xf32>
    %5 = arith.addf %2, %4 : vector<8x128xf32>
    %c0_5 = arith.constant 0 : index
    %c0_6 = arith.constant 0 : index
    %6 = vector.load %arg5[%c0_5, %c0_6] : memref<8x128xf32, #tpu.memory_space<vmem>>, vector<8x128xf32>
    tpu.vector_store %arg5[%c0_5, %c0_6], %5 {strides = array<i32>} : memref<8x128xf32, #tpu.memory_space<vmem>>, vector<8x128xf32>,
    return
  }
  func.func @transform_0(%arg0: i32, %arg1: i32) -> (i32, i32) {
    %c0_i32 = arith.constant 0 : i32
    %c0_i32_0 = arith.constant 0 : i32
    return %arg0, %c0_i32 : i32, i32
  }
  func.func @transform_1(%arg0: i32, %arg1: i32) -> (i32, i32) {
    %c0_i32 = arith.constant 0 : i32
    %c0_i32_0 = arith.constant 0 : i32
    return %c0_i32, %arg1 : i32, i32
  }
  func.func @transform_2(%arg0: i32, %arg1: i32) -> (i32, i32) {
    %c0_i32 = arith.constant 0 : i32
    %c0_i32_0 = arith.constant 0 : i32
    return %c0_i32, %arg1 : i32, i32
  }
  func.func @transform_3(%arg0: i32, %arg1: i32) -> (i32, i32) {
    %c0_i32 = arith.constant 0 : i32
    return %arg0, %arg1 : i32, i32
  }
}

</mosaic_0001>

<llo_original>
// kernel: vargdarknet_forward.10
$region0: #{vargdarknet_forward.10}
  #allocation0 [shape = 'u32[]', space=smem, size = 0x4, offset = 0x4, fixed_abs, tag = 'smem constant byte address 0x4 - core index']
  #allocation1 [shape = 'u32[144,128]{1,0:T(1,128)}', space=vmem, size = 0x12000, scoped, tag = 'internal scratch']
  %s0 = inlined_call_operand.vmem [shape: bf16[1792,128], index: 0, kind: input, shape index: {}]
  %s1 = inlined_call_operand.vmem [shape: bf16[128,128], index: 1, kind: input, shape index: {}]
  %s2 = inlined_call_operand.vmem [shape: f32[1,128], index: 2, kind: input, shape index: {}]
  %s3 = inlined_call_operand.vmem [shape: f32[1792,128], index: 3, kind: output, shape index: {}]
  %s4 = sld [smem:[#allocation0]]
  $region45: #{vargdarknet_forward.10} parent=0
    _
  %s6 = ssub.s32 1, %s4
  %s7 = scalar_select 0, %s6, %s4
  loop: start=0, step=1, limit=9
  $region2: #{vargdarknet_forward.10} parent=0 // loop_pre_header
    _
  $region3: #{vargdarknet_forward.10} parent=0 // loop_header
    %s9 = sphi 0, %s13
    %p10 = scmp.ge.s32.totalorder %s9, 9
    %s16 = sphi 0, %s28
    %s17 = sphi 0, %s24
    %s18 = sphi 0, %s16
    %s19 = sphi 0, %s17
    %s20 = sphi 0, %s18
    %s21 = sphi 0, %s19
    %s31 = sphi 0, %s33
    %s34 = sphi 0, %s31
    %s35 = sphi 0, %s34
    %s51 = sphi 0, %s35
    %s57 = sphi 0, %s59
    %s60 = sphi 0, %s57
    %s61 = sphi 0, %s60
    %s77 = sphi 0, %s61
    %s83 = sphi 0, %s85
    %s86 = sphi 0, %s83
    %s87 = sphi 0, %s86
    %s103 = sphi 0, %s87
    %s111 = sphi 0, %s113
    %s114 = sphi 0, %s111
    %s115 = sphi 0, %s114
    %s131 = sphi 0, %s115
  $region4: #{vargdarknet_forward.10} parent=0 // loop_header_branch
    %12 = sbr.rel (%p10) target = $region8
  $region5: #{vargdarknet_forward.10} parent=0 // loop_body
    %s14 = ssub.s32 %s9, 1
    %s15 = ssub.s32 %s9, 2
    %s22 = sadd.s32 1, %s17
    %p23 = scmp.ge.s32.totalorder %s22, 1
    %s24 = scalar_select %p23, 0, %s22
    %s25 = sadd.s32 1, %s16
    %s26 = scalar_select %p23, %s25, %s16
    %p27 = scmp.ge.s32.totalorder %s26, 7
    %s28 = scalar_select %p27, 0, %s26
    %s29 = ssub.s32 %s16, %s28
    %p30 = scmp.eq.s32.totalorder %s29, 0
    %s32 = sadd.s32 %s31, 1
    %s33 = scalar_select %p30, %s31, %s32
    %p36 = pneg %p30
    %p37 = scmp.eq.s32.totalorder %s9, 6
    %p38 = por %p36, %p37
    %p39 = scmp.ne.s32.totalorder %s31, %s34
    %p40 = scmp.eq.s32.totalorder %s9, 0
    %p41 = por %p39, %p40
    %p42 = scmp.ne.s32.totalorder %s31, %s34
    %p43 = scmp.eq.s32.totalorder %s14, 6
    %p44 = por %p42, %p43
    %p45 = scmp.ne.s32.totalorder %s34, %s35
    %p46 = scmp.eq.s32.totalorder %s14, 0
    %p47 = por %p45, %p46
    %p48 = scmp.ne.s32.totalorder %s34, %s35
    %p49 = scmp.eq.s32.totalorder %s15, 6
    %p50 = por %p48, %p49
    %p52 = scmp.ne.s32.totalorder %s35, %s51
    %p53 = scmp.eq.s32.totalorder %s15, 0
    %p54 = por %p52, %p53
    %s55 = ssub.s32 %s17, %s24
    %p56 = scmp.eq.s32.totalorder %s55, 0
    %s58 = sadd.s32 %s57, 1
    %s59 = scalar_select %p56, %s57, %s58
    %p62 = pneg %p56
    %p63 = scmp.eq.s32.totalorder %s9, 6
    %p64 = por %p62, %p63
    %p65 = scmp.ne.s32.totalorder %s57, %s60
    %p66 = scmp.eq.s32.totalorder %s9, 0
    %p67 = por %p65, %p66
    %p68 = scmp.ne.s32.totalorder %s57, %s60
    %p69 = scmp.eq.s32.totalorder %s14, 6
    %p70 = por %p68, %p69
    %p71 = scmp.ne.s32.totalorder %s60, %s61
    %p72 = scmp.eq.s32.totalorder %s14, 0
    %p73 = por %p71, %p72
    %p74 = scmp.ne.s32.totalorder %s60, %s61
    %p75 = scmp.eq.s32.totalorder %s15, 6
    %p76 = por %p74, %p75
    %p78 = scmp.ne.s32.totalorder %s61, %s77
    %p79 = scmp.eq.s32.totalorder %s15, 0
    %p80 = por %p78, %p79
    %s81 = ssub.s32 %s17, %s24
    %p82 = scmp.eq.s32.totalorder %s81, 0
    %s84 = sadd.s32 %s83, 1
    %s85 = scalar_select %p82, %s83, %s84
    %p88 = pneg %p82
    %p89 = scmp.eq.s32.totalorder %s9, 6
    %p90 = por %p88, %p89
    %p91 = scmp.ne.s32.totalorder %s83, %s86
    %p92 = scmp.eq.s32.totalorder %s9, 0
    %p93 = por %p91, %p92
    %p94 = scmp.ne.s32.totalorder %s83, %s86
    %p95 = scmp.eq.s32.totalorder %s14, 6
    %p96 = por %p94, %p95
    %p97 = scmp.ne.s32.totalorder %s86, %s87
    %p98 = scmp.eq.s32.totalorder %s14, 0
    %p99 = por %p97, %p98
    %p100 = scmp.ne.s32.totalorder %s86, %s87
    %p101 = scmp.eq.s32.totalorder %s15, 6
    %p102 = por %p100, %p101
    %p104 = scmp.ne.s32.totalorder %s87, %s103
    %p105 = scmp.eq.s32.totalorder %s15, 0
    %p106 = por %p104, %p105
    %s107 = ssub.s32 %s16, %s28
    %s108 = ssub.s32 %s17, %s24
    %s109 = sor.u32 %s107, %s108
    %p110 = scmp.eq.s32.totalorder %s109, 0
    %s112 = sadd.s32 %s111, 1
    %s113 = scalar_select %p110, %s111, %s112
    %p116 = pneg %p110
    %p117 = scmp.eq.s32.totalorder %s9, 6
    %p118 = por %p116, %p117
    %p119 = scmp.ne.s32.totalorder %s111, %s114
    %p120 = scmp.eq.s32.totalorder %s9, 0
    %p121 = por %p119, %p120
    %p122 = scmp.ne.s32.totalorder %s111, %s114
    %p123 = scmp.eq.s32.totalorder %s14, 6
    %p124 = por %p122, %p123
    %p125 = scmp.ne.s32.totalorder %s114, %s115
    %p126 = scmp.eq.s32.totalorder %s14, 0
    %p127 = por %p125, %p126
    %p128 = scmp.ne.s32.totalorder %s114, %s115
    %p129 = scmp.eq.s32.totalorder %s15, 6
    %p130 = por %p128, %p129
    %p132 = scmp.ne.s32.totalorder %s115, %s131
    %p133 = scmp.eq.s32.totalorder %s15, 0
    %p134 = por %p132, %p133
    %p135 = scmp.le.s32.totalorder 1, %s9
    %p136 = scmp.lt.s32.totalorder %s9, 8
    %p137 = pnand %p135, %p136
    %p138 = pneg %p137
    // Predicated region
    $region9: #{vargdarknet_forward.10} parent=5 // pred_check
      _
    $region10: #{vargdarknet_forward.10} parent=5 // pred_check_branch
      %140 = sbr.rel (%p137) target = $region12
    $region11: #{vargdarknet_forward.10} parent=5 // pred_region
      %s141 = ssub.s32 %s9, 1
      // Predicated region
      $region13: #{vargdarknet_forward.10} parent=11 // pred_check
        %p142 = pneg %p73
      $region14: #{vargdarknet_forward.10} parent=11 // pred_check_branch
        %144 = sbr.rel (%p142) target = $region16
      $region15: #{vargdarknet_forward.10} parent=11 // pred_region
        %p145 = scmp.lt.s32.totalorder %s19, 0
        %s146 = scalar_select %p145, %s19, 0
        %s147 = smul.addr %s146, 4
        %s148 = scalar_lea.vmem %s1, %s147
      $region16: #{vargdarknet_forward.10} parent=11 // pred_fallthru
        _
      // Predicated region
      $region17: #{vargdarknet_forward.10} parent=11 // pred_check
        %p149 = pneg %p99
      $region18: #{vargdarknet_forward.10} parent=11 // pred_check_branch
        %151 = sbr.rel (%p149) target = $region20
      $region19: #{vargdarknet_forward.10} parent=11 // pred_region
        %p152 = scmp.lt.s32.totalorder %s19, 0
        %s153 = scalar_select %p152, %s19, 0
        %s154 = scalar_lea.vmem %s2, %s153
      $region20: #{vargdarknet_forward.10} parent=11 // pred_fallthru
        _
    $region12: #{vargdarknet_forward.10} parent=5 // pred_fallthru
      _
    %p155 = scmp.lt.s32.totalorder %s9, 7
    // Predicated region
    $region21: #{vargdarknet_forward.10} parent=5 // pred_check
      %p156 = pneg %p155
    $region22: #{vargdarknet_forward.10} parent=5 // pred_check_branch
      %158 = sbr.rel (%p156) target = $region24
    $region23: #{vargdarknet_forward.10} parent=5 // pred_region
      // Predicated region
      $region25: #{vargdarknet_forward.10} parent=23 // pred_check
        %p159 = pneg %p41
      $region26: #{vargdarknet_forward.10} parent=23 // pred_check_branch
        %161 = sbr.rel (%p159) target = $region28
      $region27: #{vargdarknet_forward.10} parent=23 // pred_region
        %s162 = smul.u32 32, %s16
        %p163 = scmp.lt.s32.totalorder %s162, 223
        %s164 = scalar_select %p163, %s162, 223
        %s165 = smul.addr %s164, 4
        %s166 = scalar_lea.vmem %s0, %s165
        %s167 = smul.u32 32, %s16
      $region28: #{vargdarknet_forward.10} parent=23 // pred_fallthru
        _
    $region24: #{vargdarknet_forward.10} parent=5 // pred_fallthru
      _
    %p168 = scmp.le.s32.totalorder 1, %s9
    %p169 = scmp.lt.s32.totalorder %s9, 8
    %p170 = pnand %p168, %p169
    %p171 = pneg %p170
    // Predicated region
    $region29: #{vargdarknet_forward.10} parent=5 // pred_check
      _
    $region30: #{vargdarknet_forward.10} parent=5 // pred_check_branch
      %173 = sbr.rel (%p170) target = $region32
    $region31: #{vargdarknet_forward.10} parent=5 // pred_region
      %s174 = ssub.s32 %s9, 1
      %s175 = smul.u32 32, %s18
      %p176 = scmp.lt.s32.totalorder %s175, 223
      %s177 = scalar_select %p176, %s175, 223
      %s178 = smul.addr %s177, 4
      %s179 = scalar_lea.vmem %s0, %s178
      %p180 = pneg %p47
      %p181 = pneg %p44
      %p182 = scmp.lt.s32.totalorder %s19, 0
      %s183 = scalar_select %p182, %s19, 0
      %s184 = smul.addr %s183, 4
      %s185 = scalar_lea.vmem %s1, %s184
      %p186 = pneg %p73
      %p187 = pneg %p70
      %p188 = scmp.lt.s32.totalorder %s19, 0
      %s189 = scalar_select %p188, %s19, 0
      %s190 = scalar_lea.vmem %s2, %s189
      %p191 = pneg %p99
      %p192 = pneg %p96
      %p193 = pneg %p127
      %p194 = pneg %p124
      %s195 = smul.u32 32, %s18
      %p196 = scmp.lt.s32.totalorder %s195, 223
      %s197 = scalar_select %p196, %s195, 223
      %p198 = scmp.lt.s32.totalorder %s19, 0
      %s199 = scalar_select %p198, %s19, 0
      %s200 = sadd.s32 %s199, %s197
      %s201 = smul.addr %s200, 8
      %s202 = scalar_lea.vmem %s3, %s201
      %s203 = smul.u32 32, %s18
      %p204 = scmp.lt.s32.totalorder %s203, 223
      %s205 = scalar_select %p204, %s203, 223
      %s206 = smul.addr %s205, 4
      %s207 = scalar_lea.vmem %s0, %s206
      %s208 = smul.u32 32, %s18
      %p209 = scmp.lt.s32.totalorder %s19, 0
      %s210 = scalar_select %p209, %s19, 0
      %s211 = smul.addr %s210, 4
      %s212 = scalar_lea.vmem %s1, %s211
      %p213 = scmp.lt.s32.totalorder %s19, 0
      %s214 = scalar_select %p213, %s19, 0
      %s215 = scalar_lea.vmem %s2, %s214
      %s216 = smul.u32 32, %s18
      %p217 = scmp.lt.s32.totalorder %s216, 223
      %s218 = scalar_select %p217, %s216, 223
      %p219 = scmp.lt.s32.totalorder %s19, 0
      %s220 = scalar_select %p219, %s19, 0
      %s221 = sadd.s32 %s220, %s218
      %s222 = smul.addr %s221, 8
      %s223 = scalar_lea.vmem %s3, %s222
      %s224 = smul.u32 32, %s18
      %v226 = vld [vmem:[%s207] sm:$0xf]
      %v227 = vld [vmem:[%s207 + $0x4] sm:$0xf]
      %v228 = vld [vmem:[%s207 + $0x8] sm:$0xf]
      %v229 = vld [vmem:[%s207 + $0xc] sm:$0xf]
      %v230 = vld [vmem:[%s207 + $0x10] sm:$0xf]
      %v231 = vld [vmem:[%s207 + $0x14] sm:$0xf]
      %v232 = vld [vmem:[%s207 + $0x18] sm:$0xf]
      %v233 = vld [vmem:[%s207 + $0x1c] sm:$0xf]
      %v234 = vld [vmem:[%s207 + $0x20] sm:$0xf]
      %v235 = vld [vmem:[%s207 + $0x24] sm:$0xf]
      %v236 = vld [vmem:[%s207 + $0x28] sm:$0xf]
      %v237 = vld [vmem:[%s207 + $0x2c] sm:$0xf]
      %v238 = vld [vmem:[%s207 + $0x30] sm:$0xf]
      %v239 = vld [vmem:[%s207 + $0x34] sm:$0xf]
      %v240 = vld [vmem:[%s207 + $0x38] sm:$0xf]
      %v241 = vld [vmem:[%s207 + $0x3c] sm:$0xf]
      %v242 = vld [vmem:[%s207 + $0x40] sm:$0xf]
      %v243 = vld [vmem:[%s207 + $0x44] sm:$0xf]
      %v244 = vld [vmem:[%s207 + $0x48] sm:$0xf]
      %v245 = vld [vmem:[%s207 + $0x4c] sm:$0xf]
      %v246 = vld [vmem:[%s207 + $0x50] sm:$0xf]
      %v247 = vld [vmem:[%s207 + $0x54] sm:$0xf]
      %v248 = vld [vmem:[%s207 + $0x58] sm:$0xf]
      %v249 = vld [vmem:[%s207 + $0x5c] sm:$0xf]
      %v250 = vld [vmem:[%s207 + $0x60] sm:$0xf]
      %v251 = vld [vmem:[%s207 + $0x64] sm:$0xf]
      %v252 = vld [vmem:[%s207 + $0x68] sm:$0xf]
      %v253 = vld [vmem:[%s207 + $0x6c] sm:$0xf]
      %v254 = vld [vmem:[%s207 + $0x70] sm:$0xf]
      %v255 = vld [vmem:[%s207 + $0x74] sm:$0xf]
      %v256 = vld [vmem:[%s207 + $0x78] sm:$0xf]
      %v257 = vld [vmem:[%s207 + $0x7c] sm:$0xf]
      %v258 = vld [vmem:[%s212] sm:$0xf]
      %v259 = vld [vmem:[%s212 + $0x4] sm:$0xf]
      %v260 = vld [vmem:[%s212 + $0x8] sm:$0xf]
      %v261 = vld [vmem:[%s212 + $0xc] sm:$0xf]
      %v262 = vld [vmem:[%s212 + $0x10] sm:$0xf]
      %v263 = vld [vmem:[%s212 + $0x14] sm:$0xf]
      %v264 = vld [vmem:[%s212 + $0x18] sm:$0xf]
      %v265 = vld [vmem:[%s212 + $0x1c] sm:$0xf]
      %v266 = vld [vmem:[%s212 + $0x20] sm:$0xf]
      %v267 = vld [vmem:[%s212 + $0x24] sm:$0xf]
      %v268 = vld [vmem:[%s212 + $0x28] sm:$0xf]
      %v269 = vld [vmem:[%s212 + $0x2c] sm:$0xf]
      %v270 = vld [vmem:[%s212 + $0x30] sm:$0xf]
      %v271 = vld [vmem:[%s212 + $0x34] sm:$0xf]
      %v272 = vld [vmem:[%s212 + $0x38] sm:$0xf]
      %v273 = vld [vmem:[%s212 + $0x3c] sm:$0xf]
      %v274 = vld [vmem:[%s215] sm:$0x1]
      %v276 = vlaneseq
      %v277 = vshrl.u32 %v276, 7
      %v278 = vsub.s32 0, %v277
      %v279 = vrot.slane %v274, %v278
      %v313 = vunpack.c.l.b16 %v226
      %v314 = vunpack.c.l.b16 %v227
      %v315 = vunpack.c.l.b16 %v228
      %v316 = vunpack.c.l.b16 %v229
      %v317 = vunpack.c.l.b16 %v230
      %v318 = vunpack.c.l.b16 %v231
      %v319 = vunpack.c.l.b16 %v232
      %v320 = vunpack.c.l.b16 %v233
      %v321 = vunpack.c.l.b16 %v234
      %v322 = vunpack.c.l.b16 %v235
      %v323 = vunpack.c.l.b16 %v236
      %v324 = vunpack.c.l.b16 %v237
      %v325 = vunpack.c.l.b16 %v238
      %v326 = vunpack.c.l.b16 %v239
      %v327 = vunpack.c.l.b16 %v240
      %v328 = vunpack.c.l.b16 %v241
      %v329 = vunpack.c.l.b16 %v242
      %v330 = vunpack.c.l.b16 %v243
      %v331 = vunpack.c.l.b16 %v244
      %v332 = vunpack.c.l.b16 %v245
      %v333 = vunpack.c.l.b16 %v246
      %v334 = vunpack.c.l.b16 %v247
      %v335 = vunpack.c.l.b16 %v248
      %v336 = vunpack.c.l.b16 %v249
      %v337 = vunpack.c.l.b16 %v250
      %v338 = vunpack.c.l.b16 %v251
      %v339 = vunpack.c.l.b16 %v252
      %v340 = vunpack.c.l.b16 %v253
      %v341 = vunpack.c.l.b16 %v254
      %v342 = vunpack.c.l.b16 %v255
      %v343 = vunpack.c.l.b16 %v256
      %v344 = vunpack.c.l.b16 %v257
      %v345 = vpack.c.b16 %v314, %v313
      %v346 = vpack.c.b16 %v316, %v315
      %v347 = vpack.c.b16 %v318, %v317
      %v348 = vpack.c.b16 %v320, %v319
      %v349 = vpack.c.b16 %v322, %v321
      %v350 = vpack.c.b16 %v324, %v323
      %v351 = vpack.c.b16 %v326, %v325
      %v352 = vpack.c.b16 %v328, %v327
      %v353 = vpack.c.b16 %v330, %v329
      %v354 = vpack.c.b16 %v332, %v331
      %v355 = vpack.c.b16 %v334, %v333
      %v356 = vpack.c.b16 %v336, %v335
      %v357 = vpack.c.b16 %v338, %v337
      %v358 = vpack.c.b16 %v340, %v339
      %v359 = vpack.c.b16 %v342, %v341
      %v360 = vpack.c.b16 %v344, %v343
      %v393 = vunpack.c.l.b16 %v258
      %v394 = vunpack.c.l.b16 %v259
      %v395 = vunpack.c.l.b16 %v260
      %v396 = vunpack.c.l.b16 %v261
      %v397 = vunpack.c.l.b16 %v262
      %v398 = vunpack.c.l.b16 %v263
      %v399 = vunpack.c.l.b16 %v264
      %v400 = vunpack.c.l.b16 %v265
      %v401 = vunpack.c.l.b16 %v266
      %v402 = vunpack.c.l.b16 %v267
      %v403 = vunpack.c.l.b16 %v268
      %v404 = vunpack.c.l.b16 %v269
      %v405 = vunpack.c.l.b16 %v270
      %v406 = vunpack.c.l.b16 %v271
      %v407 = vunpack.c.l.b16 %v272
      %v408 = vunpack.c.l.b16 %v273
      %v409 = vpack.c.b16 %v394, %v393
      %v410 = vpack.c.b16 %v396, %v395
      %v411 = vpack.c.b16 %v398, %v397
      %v412 = vpack.c.b16 %v400, %v399
      %v413 = vpack.c.b16 %v402, %v401
      %v414 = vpack.c.b16 %v404, %v403
      %v415 = vpack.c.b16 %v406, %v405
      %v416 = vpack.c.b16 %v408, %v407
      %425 = vmatprep.subr.bf16.mxu0 0
      %426 = vmatpush1.bf16.msra.mxu0 %v409
      %427 = vmatprep.subr.bf16.mxu0 0
      %428 = vmatpush1.bf16.msra.mxu0 %v410
      %429 = vmatprep.subr.bf16.mxu0 0
      %430 = vmatpush1.bf16.msra.mxu0 %v411
      %431 = vmatprep.subr.bf16.mxu0 0
      %432 = vmatpush1.bf16.msra.mxu0 %v412
      %433 = vmatprep.subr.bf16.mxu0 0
      %434 = vmatpush1.bf16.msra.mxu0 %v413
      %435 = vmatprep.subr.bf16.mxu0 0
      %436 = vmatpush1.bf16.msra.mxu0 %v414
      %437 = vmatprep.subr.bf16.mxu0 0
      %438 = vmatpush1.bf16.msra.mxu0 %v415
      %439 = vmatprep.subr.bf16.mxu0 0
      %440 = vmatpush1.bf16.msra.mxu0 %v416
      %441 = vmatprep.subr.bf16.mxu0 0
      %442 = vmatpush1.bf16.msra.mxu0 0
      %443 = vmatprep.subr.bf16.mxu0 0
      %444 = vmatpush1.bf16.msra.mxu0 0
      %445 = vmatprep.subr.bf16.mxu0 0
      %446 = vmatpush1.bf16.msra.mxu0 0
      %447 = vmatprep.subr.bf16.mxu0 0
      %448 = vmatpush1.bf16.msra.mxu0 0
      %449 = vmatprep.subr.bf16.mxu0 0
      %450 = vmatpush1.bf16.msra.mxu0 0
      %451 = vmatprep.subr.bf16.mxu0 0
      %452 = vmatpush1.bf16.msra.mxu0 0
      %453 = vmatprep.subr.bf16.mxu0 0
      %454 = vmatpush1.bf16.msra.mxu0 0
      %455 = vmatprep.subr.bf16.mxu0 0
      %456 = vmatpush1.bf16.msra.mxu0 0
      %457 = vmatprep.mubr.bf16.mxu0 0
      %458 = vmatmul.mubr.bf16.gmra.mrb[0].mxu0 %v345
      %v459 = vpop.f32.mrb[0].mxu0
      %v460 = vadd.f32 %v279, %v459
      %v461 = vpop.f32.mrb[0].mxu0
      %v462 = vpop.f32.mrb[0].mxu0
      %v463 = vadd.f32 %v279, %v462
      %v464 = vpop.f32.mrb[0].mxu0
      %465 = vmatprep.mubr.bf16.mxu0 0
      %466 = vmatmul.mubr.bf16.gmra.mrb[0].mxu0 %v346
      %v467 = vpop.f32.mrb[0].mxu0
      %v468 = vadd.f32 %v279, %v467
      %v469 = vpop.f32.mrb[0].mxu0
      %v470 = vpop.f32.mrb[0].mxu0
      %v471 = vadd.f32 %v279, %v470
      %v472 = vpop.f32.mrb[0].mxu0
      %473 = vmatprep.mubr.bf16.mxu0 0
      %474 = vmatmul.mubr.bf16.gmra.mrb[0].mxu0 %v347
      %v475 = vpop.f32.mrb[0].mxu0
      %v476 = vadd.f32 %v279, %v475
      %v477 = vpop.f32.mrb[0].mxu0
      %v478 = vpop.f32.mrb[0].mxu0
      %v479 = vadd.f32 %v279, %v478
      %v480 = vpop.f32.mrb[0].mxu0
      %481 = vmatprep.mubr.bf16.mxu0 0
      %482 = vmatmul.mubr.bf16.gmra.mrb[0].mxu0 %v348
      %v483 = vpop.f32.mrb[0].mxu0
      %v484 = vadd.f32 %v279, %v483
      %v485 = vpop.f32.mrb[0].mxu0
      %v486 = vpop.f32.mrb[0].mxu0
      %v487 = vadd.f32 %v279, %v486
      %v488 = vpop.f32.mrb[0].mxu0
      %489 = vmatprep.mubr.bf16.mxu0 0
      %490 = vmatmul.mubr.bf16.gmra.mrb[0].mxu0 %v349
      %v491 = vpop.f32.mrb[0].mxu0
      %v492 = vadd.f32 %v279, %v491
      %v493 = vpop.f32.mrb[0].mxu0
      %v494 = vpop.f32.mrb[0].mxu0
      %v495 = vadd.f32 %v279, %v494
      %v496 = vpop.f32.mrb[0].mxu0
      %497 = vmatprep.mubr.bf16.mxu0 0
      %498 = vmatmul.mubr.bf16.gmra.mrb[0].mxu0 %v350
      %v499 = vpop.f32.mrb[0].mxu0
      %v500 = vadd.f32 %v279, %v499
      %v501 = vpop.f32.mrb[0].mxu0
      %v502 = vpop.f32.mrb[0].mxu0
      %v503 = vadd.f32 %v279, %v502
      %v504 = vpop.f32.mrb[0].mxu0
      %505 = vmatprep.mubr.bf16.mxu0 0
      %506 = vmatmul.mubr.bf16.gmra.mrb[0].mxu0 %v351
      %v507 = vpop.f32.mrb[0].mxu0
      %v508 = vadd.f32 %v279, %v507
      %v509 = vpop.f32.mrb[0].mxu0
      %v510 = vpop.f32.mrb[0].mxu0
      %v511 = vadd.f32 %v279, %v510
      %v512 = vpop.f32.mrb[0].mxu0
      %513 = vmatprep.mubr.bf16.mxu0 0
      %514 = vmatmul.mubr.bf16.gmra.mrb[0].mxu0 %v352
      %v515 = vpop.f32.mrb[0].mxu0
      %v516 = vadd.f32 %v279, %v515
      %v517 = vpop.f32.mrb[0].mxu0
      %v518 = vpop.f32.mrb[0].mxu0
      %v519 = vadd.f32 %v279, %v518
      %v520 = vpop.f32.mrb[0].mxu0
      %521 = vmatprep.mubr.bf16.mxu0 0
      %522 = vmatmul.mubr.bf16.gmra.mrb[0].mxu0 %v353
      %v523 = vpop.f32.mrb[0].mxu0
      %v524 = vadd.f32 %v279, %v523
      %v525 = vpop.f32.mrb[0].mxu0
      %v526 = vpop.f32.mrb[0].mxu0
      %v527 = vadd.f32 %v279, %v526
      %v528 = vpop.f32.mrb[0].mxu0
      %529 = vmatprep.mubr.bf16.mxu0 0
      %530 = vmatmul.mubr.bf16.gmra.mrb[0].mxu0 %v354
      %v531 = vpop.f32.mrb[0].mxu0
      %v532 = vadd.f32 %v279, %v531
      %v533 = vpop.f32.mrb[0].mxu0
      %v534 = vpop.f32.mrb[0].mxu0
      %v535 = vadd.f32 %v279, %v534
      %v536 = vpop.f32.mrb[0].mxu0
      %537 = vmatprep.mubr.bf16.mxu0 0
      %538 = vmatmul.mubr.bf16.gmra.mrb[0].mxu0 %v355
      %v539 = vpop.f32.mrb[0].mxu0
      %v540 = vadd.f32 %v279, %v539
      %v541 = vpop.f32.mrb[0].mxu0
      %v542 = vpop.f32.mrb[0].mxu0
      %v543 = vadd.f32 %v279, %v542
      %v544 = vpop.f32.mrb[0].mxu0
      %545 = vmatprep.mubr.bf16.mxu0 0
      %546 = vmatmul.mubr.bf16.gmra.mrb[0].mxu0 %v356
      %v547 = vpop.f32.mrb[0].mxu0
      %v548 = vadd.f32 %v279, %v547
      %v549 = vpop.f32.mrb[0].mxu0
      %v550 = vpop.f32.mrb[0].mxu0
      %v551 = vadd.f32 %v279, %v550
      %v552 = vpop.f32.mrb[0].mxu0
      %553 = vmatprep.mubr.bf16.mxu0 0
      %554 = vmatmul.mubr.bf16.gmra.mrb[0].mxu0 %v357
      %v555 = vpop.f32.mrb[0].mxu0
      %v556 = vadd.f32 %v279, %v555
      %v557 = vpop.f32.mrb[0].mxu0
      %v558 = vpop.f32.mrb[0].mxu0
      %v559 = vadd.f32 %v279, %v558
      %v560 = vpop.f32.mrb[0].mxu0
      %561 = vmatprep.mubr.bf16.mxu0 0
      %562 = vmatmul.mubr.bf16.gmra.mrb[0].mxu0 %v358
      %v563 = vpop.f32.mrb[0].mxu0
      %v564 = vadd.f32 %v279, %v563
      %v565 = vpop.f32.mrb[0].mxu0
      %v566 = vpop.f32.mrb[0].mxu0
      %v567 = vadd.f32 %v279, %v566
      %v568 = vpop.f32.mrb[0].mxu0
      %569 = vmatprep.mubr.bf16.mxu0 0
      %570 = vmatmul.mubr.bf16.gmra.mrb[0].mxu0 %v359
      %v571 = vpop.f32.mrb[0].mxu0
      %v572 = vadd.f32 %v279, %v571
      %v573 = vpop.f32.mrb[0].mxu0
      %v574 = vpop.f32.mrb[0].mxu0
      %v575 = vadd.f32 %v279, %v574
      %v576 = vpop.f32.mrb[0].mxu0
      %577 = vmatprep.mubr.bf16.mxu0 0
      %578 = vmatmul.mubr.bf16.gmra.mrb[0].mxu0 %v360
      %v579 = vpop.f32.mrb[0].mxu0
      %v580 = vadd.f32 %v279, %v579
      %v581 = vpop.f32.mrb[0].mxu0
      %v582 = vpop.f32.mrb[0].mxu0
      %v583 = vadd.f32 %v279, %v582
      %v584 = vpop.f32.mrb[0].mxu0
      %585 = vdwg.mxu0
      %v586 = vmax.f32 %v460, 0.0
      %v587 = vmax.f32 %v463, 0.0
      %v588 = vmax.f32 %v468, 0.0
      %v589 = vmax.f32 %v471, 0.0
      %v590 = vmax.f32 %v476, 0.0
      %v591 = vmax.f32 %v479, 0.0
      %v592 = vmax.f32 %v484, 0.0
      %v593 = vmax.f32 %v487, 0.0
      %v594 = vmax.f32 %v492, 0.0
      %v595 = vmax.f32 %v495, 0.0
      %v596 = vmax.f32 %v500, 0.0
      %v597 = vmax.f32 %v503, 0.0
      %v598 = vmax.f32 %v508, 0.0
      %v599 = vmax.f32 %v511, 0.0
      %v600 = vmax.f32 %v516, 0.0
      %v601 = vmax.f32 %v519, 0.0
      %v602 = vmax.f32 %v524, 0.0
      %v603 = vmax.f32 %v527, 0.0
      %v604 = vmax.f32 %v532, 0.0
      %v605 = vmax.f32 %v535, 0.0
      %v606 = vmax.f32 %v540, 0.0
      %v607 = vmax.f32 %v543, 0.0
      %v608 = vmax.f32 %v548, 0.0
      %v609 = vmax.f32 %v551, 0.0
      %v610 = vmax.f32 %v556, 0.0
      %v611 = vmax.f32 %v559, 0.0
      %v612 = vmax.f32 %v564, 0.0
      %v613 = vmax.f32 %v567, 0.0
      %v614 = vmax.f32 %v572, 0.0
      %v615 = vmax.f32 %v575, 0.0
      %v616 = vmax.f32 %v580, 0.0
      %v617 = vmax.f32 %v583, 0.0
      %618 = vst [vmem:[%s223] sm:$0xff] %v586
      %619 = vst [vmem:[%s223 + $0x8] sm:$0xff] %v587
      %620 = vst [vmem:[%s223 + $0x10] sm:$0xff] %v588
      %621 = vst [vmem:[%s223 + $0x18] sm:$0xff] %v589
      %622 = vst [vmem:[%s223 + $0x20] sm:$0xff] %v590
      %623 = vst [vmem:[%s223 + $0x28] sm:$0xff] %v591
      %624 = vst [vmem:[%s223 + $0x30] sm:$0xff] %v592
      %625 = vst [vmem:[%s223 + $0x38] sm:$0xff] %v593
      %626 = vst [vmem:[%s223 + $0x40] sm:$0xff] %v594
      %627 = vst [vmem:[%s223 + $0x48] sm:$0xff] %v595
      %628 = vst [vmem:[%s223 + $0x50] sm:$0xff] %v596
      %629 = vst [vmem:[%s223 + $0x58] sm:$0xff] %v597
      %630 = vst [vmem:[%s223 + $0x60] sm:$0xff] %v598
      %631 = vst [vmem:[%s223 + $0x68] sm:$0xff] %v599
      %632 = vst [vmem:[%s223 + $0x70] sm:$0xff] %v600
      %633 = vst [vmem:[%s223 + $0x78] sm:$0xff] %v601
      %634 = vst [vmem:[%s223 + $0x80] sm:$0xff] %v602
      %635 = vst [vmem:[%s223 + $0x88] sm:$0xff] %v603
      %636 = vst [vmem:[%s223 + $0x90] sm:$0xff] %v604
      %637 = vst [vmem:[%s223 + $0x98] sm:$0xff] %v605
      %638 = vst [vmem:[%s223 + $0xa0] sm:$0xff] %v606
      %639 = vst [vmem:[%s223 + $0xa8] sm:$0xff] %v607
      %640 = vst [vmem:[%s223 + $0xb0] sm:$0xff] %v608
      %641 = vst [vmem:[%s223 + $0xb8] sm:$0xff] %v609
      %642 = vst [vmem:[%s223 + $0xc0] sm:$0xff] %v610
      %643 = vst [vmem:[%s223 + $0xc8] sm:$0xff] %v611
      %644 = vst [vmem:[%s223 + $0xd0] sm:$0xff] %v612
      %645 = vst [vmem:[%s223 + $0xd8] sm:$0xff] %v613
      %646 = vst [vmem:[%s223 + $0xe0] sm:$0xff] %v614
      %647 = vst [vmem:[%s223 + $0xe8] sm:$0xff] %v615
      %648 = vst [vmem:[%s223 + $0xf0] sm:$0xff] %v616
      %649 = vst [vmem:[%s223 + $0xf8] sm:$0xff] %v617
      %s650 = smul.u32 32, %s18
      %p651 = scmp.lt.s32.totalorder %s650, 223
      %s652 = scalar_select %p651, %s650, 223
      %p653 = scmp.lt.s32.totalorder %s19, 0
      %s654 = scalar_select %p653, %s19, 0
      %s655 = sadd.s32 %s654, %s652
      %s656 = smul.addr %s655, 8
      %s657 = scalar_lea.vmem %s3, %s656
      // Predicated region
      $region33: #{vargdarknet_forward.10} parent=31 // pred_check
        %p658 = pneg %p124
      $region34: #{vargdarknet_forward.10} parent=31 // pred_check_branch
        %660 = sbr.rel (%p658) target = $region36
      $region35: #{vargdarknet_forward.10} parent=31 // pred_region
        %s661 = smul.u32 32, %s18
      $region36: #{vargdarknet_forward.10} parent=31 // pred_fallthru
        _
    $region32: #{vargdarknet_forward.10} parent=5 // pred_fallthru
      _
    %p662 = scmp.le.s32.totalorder 2, %s9
    // Predicated region
    $region37: #{vargdarknet_forward.10} parent=5 // pred_check
      %p663 = pneg %p662
    $region38: #{vargdarknet_forward.10} parent=5 // pred_check_branch
      %665 = sbr.rel (%p663) target = $region40
    $region39: #{vargdarknet_forward.10} parent=5 // pred_region
      %s666 = ssub.s32 %s9, 2
      // Predicated region
      $region41: #{vargdarknet_forward.10} parent=39 // pred_check
        %p667 = pneg %p130
      $region42: #{vargdarknet_forward.10} parent=39 // pred_check_branch
        %669 = sbr.rel (%p667) target = $region44
      $region43: #{vargdarknet_forward.10} parent=39 // pred_region
        %s670 = smul.u32 32, %s20
        %p671 = scmp.lt.s32.totalorder %s670, 223
        %s672 = scalar_select %p671, %s670, 223
        %p673 = scmp.lt.s32.totalorder %s21, 0
        %s674 = scalar_select %p673, %s21, 0
        %s675 = sadd.s32 %s674, %s672
        %s676 = smul.addr %s675, 8
        %s677 = scalar_lea.vmem %s3, %s676
      $region44: #{vargdarknet_forward.10} parent=39 // pred_fallthru
        _
    $region40: #{vargdarknet_forward.10} parent=5 // pred_fallthru
      _
  $region6: #{vargdarknet_forward.10} parent=0 // loop_footer
    %s13 = sadd.s32 1, %s9
  $region7: #{vargdarknet_forward.10} parent=0 // loop_footer_branch
    %8 = sbr.rel target = $region3
  $region8: #{vargdarknet_forward.10} parent=0 // loop_exit
    _

// kernel: vargdarknet_forward.11
$region0: #{vargdarknet_forward.11}
  #allocation0 [shape = 'u32[]', space=smem, size = 0x4, offset = 0x4, fixed_abs, tag = 'smem constant byte address 0x4 - core index']
  #allocation1 [shape = 'u32[144,128]{1,0:T(1,128)}', space=vmem, size = 0x12000, scoped, tag = 'internal scratch']
  %s0 = inlined_call_operand.vmem [shape: bf16[512,128], index: 0, kind: input, shape index: {}]
  %s1 = inlined_call_operand.vmem [shape: bf16[128,128], index: 1, kind: input, shape index: {}]
  %s2 = inlined_call_operand.vmem [shape: f32[1,128], index: 2, kind: input, shape index: {}]
  %s3 = inlined_call_operand.vmem [shape: f32[512,128], index: 3, kind: output, shape index: {}]
  %s4 = sld [smem:[#allocation0]]
  $region45: #{vargdarknet_forward.11} parent=0
    _
  %s6 = ssub.s32 1, %s4
  %s7 = scalar_select 0, %s6, %s4
  loop: start=0, step=1, limit=4
  $region2: #{vargdarknet_forward.11} parent=0 // loop_pre_header
    _
  $region3: #{vargdarknet_forward.11} parent=0 // loop_header
    %s9 = sphi 0, %s13
    %p10 = scmp.ge.s32.totalorder %s9, 4
    %s16 = sphi 0, %s28
    %s17 = sphi 0, %s24
    %s18 = sphi 0, %s16
    %s19 = sphi 0, %s17
    %s20 = sphi 0, %s18
    %s21 = sphi 0, %s19
    %s31 = sphi 0, %s33
    %s34 = sphi 0, %s31
    %s35 = sphi 0, %s34
    %s51 = sphi 0, %s35
    %s57 = sphi 0, %s59
    %s60 = sphi 0, %s57
    %s61 = sphi 0, %s60
    %s77 = sphi 0, %s61
    %s83 = sphi 0, %s85
    %s86 = sphi 0, %s83
    %s87 = sphi 0, %s86
    %s103 = sphi 0, %s87
    %s111 = sphi 0, %s113
    %s114 = sphi 0, %s111
    %s115 = sphi 0, %s114
    %s131 = sphi 0, %s115
  $region4: #{vargdarknet_forward.11} parent=0 // loop_header_branch
    %12 = sbr.rel (%p10) target = $region8
  $region5: #{vargdarknet_forward.11} parent=0 // loop_body
    %s14 = ssub.s32 %s9, 1
    %s15 = ssub.s32 %s9, 2
    %s22 = sadd.s32 1, %s17
    %p23 = scmp.ge.s32.totalorder %s22, 1
    %s24 = scalar_select %p23, 0, %s22
    %s25 = sadd.s32 1, %s16
    %s26 = scalar_select %p23, %s25, %s16
    %p27 = scmp.ge.s32.totalorder %s26, 2
    %s28 = scalar_select %p27, 0, %s26
    %s29 = ssub.s32 %s16, %s28
    %p30 = scmp.eq.s32.totalorder %s29, 0
    %s32 = sadd.s32 %s31, 1
    %s33 = scalar_select %p30, %s31, %s32
    %p36 = pneg %p30
    %p37 = scmp.eq.s32.totalorder %s9, 1
    %p38 = por %p36, %p37
    %p39 = scmp.ne.s32.totalorder %s31, %s34
    %p40 = scmp.eq.s32.totalorder %s9, 0
    %p41 = por %p39, %p40
    %p42 = scmp.ne.s32.totalorder %s31, %s34
    %p43 = scmp.eq.s32.totalorder %s14, 1
    %p44 = por %p42, %p43
    %p45 = scmp.ne.s32.totalorder %s34, %s35
    %p46 = scmp.eq.s32.totalorder %s14, 0
    %p47 = por %p45, %p46
    %p48 = scmp.ne.s32.totalorder %s34, %s35
    %p49 = scmp.eq.s32.totalorder %s15, 1
    %p50 = por %p48, %p49
    %p52 = scmp.ne.s32.totalorder %s35, %s51
    %p53 = scmp.eq.s32.totalorder %s15, 0
    %p54 = por %p52, %p53
    %s55 = ssub.s32 %s17, %s24
    %p56 = scmp.eq.s32.totalorder %s55, 0
    %s58 = sadd.s32 %s57, 1
    %s59 = scalar_select %p56, %s57, %s58
    %p62 = pneg %p56
    %p63 = scmp.eq.s32.totalorder %s9, 1
    %p64 = por %p62, %p63
    %p65 = scmp.ne.s32.totalorder %s57, %s60
    %p66 = scmp.eq.s32.totalorder %s9, 0
    %p67 = por %p65, %p66
    %p68 = scmp.ne.s32.totalorder %s57, %s60
    %p69 = scmp.eq.s32.totalorder %s14, 1
    %p70 = por %p68, %p69
    %p71 = scmp.ne.s32.totalorder %s60, %s61
    %p72 = scmp.eq.s32.totalorder %s14, 0
    %p73 = por %p71, %p72
    %p74 = scmp.ne.s32.totalorder %s60, %s61
    %p75 = scmp.eq.s32.totalorder %s15, 1
    %p76 = por %p74, %p75
    %p78 = scmp.ne.s32.totalorder %s61, %s77
    %p79 = scmp.eq.s32.totalorder %s15, 0
    %p80 = por %p78, %p79
    %s81 = ssub.s32 %s17, %s24
    %p82 = scmp.eq.s32.totalorder %s81, 0
    %s84 = sadd.s32 %s83, 1
    %s85 = scalar_select %p82, %s83, %s84
    %p88 = pneg %p82
    %p89 = scmp.eq.s32.totalorder %s9, 1
    %p90 = por %p88, %p89
    %p91 = scmp.ne.s32.totalorder %s83, %s86
    %p92 = scmp.eq.s32.totalorder %s9, 0
    %p93 = por %p91, %p92
    %p94 = scmp.ne.s32.totalorder %s83, %s86
    %p95 = scmp.eq.s32.totalorder %s14, 1
    %p96 = por %p94, %p95
    %p97 = scmp.ne.s32.totalorder %s86, %s87
    %p98 = scmp.eq.s32.totalorder %s14, 0
    %p99 = por %p97, %p98
    %p100 = scmp.ne.s32.totalorder %s86, %s87
    %p101 = scmp.eq.s32.totalorder %s15, 1
    %p102 = por %p100, %p101
    %p104 = scmp.ne.s32.totalorder %s87, %s103
    %p105 = scmp.eq.s32.totalorder %s15, 0
    %p106 = por %p104, %p105
    %s107 = ssub.s32 %s16, %s28
    %s108 = ssub.s32 %s17, %s24
    %s109 = sor.u32 %s107, %s108
    %p110 = scmp.eq.s32.totalorder %s109, 0
    %s112 = sadd.s32 %s111, 1
    %s113 = scalar_select %p110, %s111, %s112
    %p116 = pneg %p110
    %p117 = scmp.eq.s32.totalorder %s9, 1
    %p118 = por %p116, %p117
    %p119 = scmp.ne.s32.totalorder %s111, %s114
    %p120 = scmp.eq.s32.totalorder %s9, 0
    %p121 = por %p119, %p120
    %p122 = scmp.ne.s32.totalorder %s111, %s114
    %p123 = scmp.eq.s32.totalorder %s14, 1
    %p124 = por %p122, %p123
    %p125 = scmp.ne.s32.totalorder %s114, %s115
    %p126 = scmp.eq.s32.totalorder %s14, 0
    %p127 = por %p125, %p126
    %p128 = scmp.ne.s32.totalorder %s114, %s115
    %p129 = scmp.eq.s32.totalorder %s15, 1
    %p130 = por %p128, %p129
    %p132 = scmp.ne.s32.totalorder %s115, %s131
    %p133 = scmp.eq.s32.totalorder %s15, 0
    %p134 = por %p132, %p133
    %p135 = scmp.le.s32.totalorder 1, %s9
    %p136 = scmp.lt.s32.totalorder %s9, 3
    %p137 = pnand %p135, %p136
    %p138 = pneg %p137
    // Predicated region
    $region9: #{vargdarknet_forward.11} parent=5 // pred_check
      _
    $region10: #{vargdarknet_forward.11} parent=5 // pred_check_branch
      %140 = sbr.rel (%p137) target = $region12
    $region11: #{vargdarknet_forward.11} parent=5 // pred_region
      %s141 = ssub.s32 %s9, 1
      // Predicated region
      $region13: #{vargdarknet_forward.11} parent=11 // pred_check
        %p142 = pneg %p73
      $region14: #{vargdarknet_forward.11} parent=11 // pred_check_branch
        %144 = sbr.rel (%p142) target = $region16
      $region15: #{vargdarknet_forward.11} parent=11 // pred_region
        %p145 = scmp.lt.s32.totalorder %s19, 0
        %s146 = scalar_select %p145, %s19, 0
        %s147 = smul.addr %s146, 4
        %s148 = scalar_lea.vmem %s1, %s147
      $region16: #{vargdarknet_forward.11} parent=11 // pred_fallthru
        _
      // Predicated region
      $region17: #{vargdarknet_forward.11} parent=11 // pred_check
        %p149 = pneg %p99
      $region18: #{vargdarknet_forward.11} parent=11 // pred_check_branch
        %151 = sbr.rel (%p149) target = $region20
      $region19: #{vargdarknet_forward.11} parent=11 // pred_region
        %p152 = scmp.lt.s32.totalorder %s19, 0
        %s153 = scalar_select %p152, %s19, 0
        %s154 = scalar_lea.vmem %s2, %s153
      $region20: #{vargdarknet_forward.11} parent=11 // pred_fallthru
        _
    $region12: #{vargdarknet_forward.11} parent=5 // pred_fallthru
      _
    %p155 = scmp.lt.s32.totalorder %s9, 2
    // Predicated region
    $region21: #{vargdarknet_forward.11} parent=5 // pred_check
      %p156 = pneg %p155
    $region22: #{vargdarknet_forward.11} parent=5 // pred_check_branch
      %158 = sbr.rel (%p156) target = $region24
    $region23: #{vargdarknet_forward.11} parent=5 // pred_region
      // Predicated region
      $region25: #{vargdarknet_forward.11} parent=23 // pred_check
        %p159 = pneg %p41
      $region26: #{vargdarknet_forward.11} parent=23 // pred_check_branch
        %161 = sbr.rel (%p159) target = $region28
      $region27: #{vargdarknet_forward.11} parent=23 // pred_region
        %s162 = smul.u32 32, %s16
        %p163 = scmp.lt.s32.totalorder %s162, 63
        %s164 = scalar_select %p163, %s162, 63
        %s165 = smul.addr %s164, 4
        %s166 = scalar_lea.vmem %s0, %s165
        %s167 = smul.u32 32, %s16
      $region28: #{vargdarknet_forward.11} parent=23 // pred_fallthru
        _
    $region24: #{vargdarknet_forward.11} parent=5 // pred_fallthru
      _
    %p168 = scmp.le.s32.totalorder 1, %s9
    %p169 = scmp.lt.s32.totalorder %s9, 3
    %p170 = pnand %p168, %p169
    %p171 = pneg %p170
    // Predicated region
    $region29: #{vargdarknet_forward.11} parent=5 // pred_check
      _
    $region30: #{vargdarknet_forward.11} parent=5 // pred_check_branch
      %173 = sbr.rel (%p170) target = $region32
    $region31: #{vargdarknet_forward.11} parent=5 // pred_region
      %s174 = ssub.s32 %s9, 1
      %s175 = smul.u32 32, %s18
      %p176 = scmp.lt.s32.totalorder %s175, 63
      %s177 = scalar_select %p176, %s175, 63
      %s178 = smul.addr %s177, 4
      %s179 = scalar_lea.vmem %s0, %s178
      %p180 = pneg %p47
      %p181 = pneg %p44
      %p182 = scmp.lt.s32.totalorder %s19, 0
      %s183 = scalar_select %p182, %s19, 0
      %s184 = smul.addr %s183, 4
      %s185 = scalar_lea.vmem %s1, %s184
      %p186 = pneg %p73
      %p187 = pneg %p70
      %p188 = scmp.lt.s32.totalorder %s19, 0
      %s189 = scalar_select %p188, %s19, 0
      %s190 = scalar_lea.vmem %s2, %s189
      %p191 = pneg %p99
      %p192 = pneg %p96
      %p193 = pneg %p127
      %p194 = pneg %p124
      %s195 = smul.u32 32, %s18
      %p196 = scmp.lt.s32.totalorder %s195, 63
      %s197 = scalar_select %p196, %s195, 63
      %p198 = scmp.lt.s32.totalorder %s19, 0
      %s199 = scalar_select %p198, %s19, 0
      %s200 = sadd.s32 %s199, %s197
      %s201 = smul.addr %s200, 8
      %s202 = scalar_lea.vmem %s3, %s201
      %s203 = smul.u32 32, %s18
      %p204 = scmp.lt.s32.totalorder %s203, 63
      %s205 = scalar_select %p204, %s203, 63
      %s206 = smul.addr %s205, 4
      %s207 = scalar_lea.vmem %s0, %s206
      %s208 = smul.u32 32, %s18
      %p209 = scmp.lt.s32.totalorder %s19, 0
      %s210 = scalar_select %p209, %s19, 0
      %s211 = smul.addr %s210, 4
      %s212 = scalar_lea.vmem %s1, %s211
      %p213 = scmp.lt.s32.totalorder %s19, 0
      %s214 = scalar_select %p213, %s19, 0
      %s215 = scalar_lea.vmem %s2, %s214
      %s216 = smul.u32 32, %s18
      %p217 = scmp.lt.s32.totalorder %s216, 63
      %s218 = scalar_select %p217, %s216, 63
      %p219 = scmp.lt.s32.totalorder %s19, 0
      %s220 = scalar_select %p219, %s19, 0
      %s221 = sadd.s32 %s220, %s218
      %s222 = smul.addr %s221, 8
      %s223 = scalar_lea.vmem %s3, %s222
      %s224 = smul.u32 32, %s18
      %v226 = vld [vmem:[%s207] sm:$0xf]
      %v227 = vld [vmem:[%s207 + $0x4] sm:$0xf]
      %v228 = vld [vmem:[%s207 + $0x8] sm:$0xf]
      %v229 = vld [vmem:[%s207 + $0xc] sm:$0xf]
      %v230 = vld [vmem:[%s207 + $0x10] sm:$0xf]
      %v231 = vld [vmem:[%s207 + $0x14] sm:$0xf]
      %v232 = vld [vmem:[%s207 + $0x18] sm:$0xf]
      %v233 = vld [vmem:[%s207 + $0x1c] sm:$0xf]
      %v234 = vld [vmem:[%s207 + $0x20] sm:$0xf]
      %v235 = vld [vmem:[%s207 + $0x24] sm:$0xf]
      %v236 = vld [vmem:[%s207 + $0x28] sm:$0xf]
      %v237 = vld [vmem:[%s207 + $0x2c] sm:$0xf]
      %v238 = vld [vmem:[%s207 + $0x30] sm:$0xf]
      %v239 = vld [vmem:[%s207 + $0x34] sm:$0xf]
      %v240 = vld [vmem:[%s207 + $0x38] sm:$0xf]
      %v241 = vld [vmem:[%s207 + $0x3c] sm:$0xf]
      %v242 = vld [vmem:[%s207 + $0x40] sm:$0xf]
      %v243 = vld [vmem:[%s207 + $0x44] sm:$0xf]
      %v244 = vld [vmem:[%s207 + $0x48] sm:$0xf]
      %v245 = vld [vmem:[%s207 + $0x4c] sm:$0xf]
      %v246 = vld [vmem:[%s207 + $0x50] sm:$0xf]
      %v247 = vld [vmem:[%s207 + $0x54] sm:$0xf]
      %v248 = vld [vmem:[%s207 + $0x58] sm:$0xf]
      %v249 = vld [vmem:[%s207 + $0x5c] sm:$0xf]
      %v250 = vld [vmem:[%s207 + $0x60] sm:$0xf]
      %v251 = vld [vmem:[%s207 + $0x64] sm:$0xf]
      %v252 = vld [vmem:[%s207 + $0x68] sm:$0xf]
      %v253 = vld [vmem:[%s207 + $0x6c] sm:$0xf]
      %v254 = vld [vmem:[%s207 + $0x70] sm:$0xf]
      %v255 = vld [vmem:[%s207 + $0x74] sm:$0xf]
      %v256 = vld [vmem:[%s207 + $0x78] sm:$0xf]
      %v257 = vld [vmem:[%s207 + $0x7c] sm:$0xf]
      %v258 = vld [vmem:[%s212] sm:$0xf]
      %v259 = vld [vmem:[%s212 + $0x4] sm:$0xf]
      %v260 = vld [vmem:[%s212 + $0x8] sm:$0xf]
      %v261 = vld [vmem:[%s212 + $0xc] sm:$0xf]
      %v262 = vld [vmem:[%s212 + $0x10] sm:$0xf]
      %v263 = vld [vmem:[%s212 + $0x14] sm:$0xf]
      %v264 = vld [vmem:[%s212 + $0x18] sm:$0xf]
      %v265 = vld [vmem:[%s212 + $0x1c] sm:$0xf]
      %v266 = vld [vmem:[%s212 + $0x20] sm:$0xf]
      %v267 = vld [vmem:[%s212 + $0x24] sm:$0xf]
      %v268 = vld [vmem:[%s212 + $0x28] sm:$0xf]
      %v269 = vld [vmem:[%s212 + $0x2c] sm:$0xf]
      %v270 = vld [vmem:[%s212 + $0x30] sm:$0xf]
      %v271 = vld [vmem:[%s212 + $0x34] sm:$0xf]
      %v272 = vld [vmem:[%s212 + $0x38] sm:$0xf]
      %v273 = vld [vmem:[%s212 + $0x3c] sm:$0xf]
      %v274 = vld [vmem:[%s215] sm:$0x1]
      %v276 = vlaneseq
      %v277 = vshrl.u32 %v276, 7
      %v278 = vsub.s32 0, %v277
      %v279 = vrot.slane %v274, %v278
      %v313 = vunpack.c.l.b16 %v226
      %v314 = vunpack.c.l.b16 %v227
      %v315 = vunpack.c.l.b16 %v228
      %v316 = vunpack.c.l.b16 %v229
      %v317 = vunpack.c.l.b16 %v230
      %v318 = vunpack.c.l.b16 %v231
      %v319 = vunpack.c.l.b16 %v232
      %v320 = vunpack.c.l.b16 %v233
      %v321 = vunpack.c.l.b16 %v234
      %v322 = vunpack.c.l.b16 %v235
      %v323 = vunpack.c.l.b16 %v236
      %v324 = vunpack.c.l.b16 %v237
      %v325 = vunpack.c.l.b16 %v238
      %v326 = vunpack.c.l.b16 %v239
      %v327 = vunpack.c.l.b16 %v240
      %v328 = vunpack.c.l.b16 %v241
      %v329 = vunpack.c.l.b16 %v242
      %v330 = vunpack.c.l.b16 %v243
      %v331 = vunpack.c.l.b16 %v244
      %v332 = vunpack.c.l.b16 %v245
      %v333 = vunpack.c.l.b16 %v246
      %v334 = vunpack.c.l.b16 %v247
      %v335 = vunpack.c.l.b16 %v248
      %v336 = vunpack.c.l.b16 %v249
      %v337 = vunpack.c.l.b16 %v250
      %v338 = vunpack.c.l.b16 %v251
      %v339 = vunpack.c.l.b16 %v252
      %v340 = vunpack.c.l.b16 %v253
      %v341 = vunpack.c.l.b16 %v254
      %v342 = vunpack.c.l.b16 %v255
      %v343 = vunpack.c.l.b16 %v256
      %v344 = vunpack.c.l.b16 %v257
      %v345 = vpack.c.b16 %v314, %v313
      %v346 = vpack.c.b16 %v316, %v315
      %v347 = vpack.c.b16 %v318, %v317
      %v348 = vpack.c.b16 %v320, %v319
      %v349 = vpack.c.b16 %v322, %v321
      %v350 = vpack.c.b16 %v324, %v323
      %v351 = vpack.c.b16 %v326, %v325
      %v352 = vpack.c.b16 %v328, %v327
      %v353 = vpack.c.b16 %v330, %v329
      %v354 = vpack.c.b16 %v332, %v331
      %v355 = vpack.c.b16 %v334, %v333
      %v356 = vpack.c.b16 %v336, %v335
      %v357 = vpack.c.b16 %v338, %v337
      %v358 = vpack.c.b16 %v340, %v339
      %v359 = vpack.c.b16 %v342, %v341
      %v360 = vpack.c.b16 %v344, %v343
      %v393 = vunpack.c.l.b16 %v258
      %v394 = vunpack.c.l.b16 %v259
      %v395 = vunpack.c.l.b16 %v260
      %v396 = vunpack.c.l.b16 %v261
      %v397 = vunpack.c.l.b16 %v262
      %v398 = vunpack.c.l.b16 %v263
      %v399 = vunpack.c.l.b16 %v264
      %v400 = vunpack.c.l.b16 %v265
      %v401 = vunpack.c.l.b16 %v266
      %v402 = vunpack.c.l.b16 %v267
      %v403 = vunpack.c.l.b16 %v268
      %v404 = vunpack.c.l.b16 %v269
      %v405 = vunpack.c.l.b16 %v270
      %v406 = vunpack.c.l.b16 %v271
      %v407 = vunpack.c.l.b16 %v272
      %v408 = vunpack.c.l.b16 %v273
      %v409 = vpack.c.b16 %v394, %v393
      %v410 = vpack.c.b16 %v396, %v395
      %v411 = vpack.c.b16 %v398, %v397
      %v412 = vpack.c.b16 %v400, %v399
      %v413 = vpack.c.b16 %v402, %v401
      %v414 = vpack.c.b16 %v404, %v403
      %v415 = vpack.c.b16 %v406, %v405
      %v416 = vpack.c.b16 %v408, %v407
      %425 = vmatprep.subr.bf16.mxu0 0
      %426 = vmatpush1.bf16.msra.mxu0 %v409
      %427 = vmatprep.subr.bf16.mxu0 0
      %428 = vmatpush1.bf16.msra.mxu0 %v410
      %429 = vmatprep.subr.bf16.mxu0 0
      %430 = vmatpush1.bf16.msra.mxu0 %v411
      %431 = vmatprep.subr.bf16.mxu0 0
      %432 = vmatpush1.bf16.msra.mxu0 %v412
      %433 = vmatprep.subr.bf16.mxu0 0
      %434 = vmatpush1.bf16.msra.mxu0 %v413
      %435 = vmatprep.subr.bf16.mxu0 0
      %436 = vmatpush1.bf16.msra.mxu0 %v414
      %437 = vmatprep.subr.bf16.mxu0 0
      %438 = vmatpush1.bf16.msra.mxu0 %v415
      %439 = vmatprep.subr.bf16.mxu0 0
      %440 = vmatpush1.bf16.msra.mxu0 %v416
      %441 = vmatprep.subr.bf16.mxu0 0
      %442 = vmatpush1.bf16.msra.mxu0 0
      %443 = vmatprep.subr.bf16.mxu0 0
      %444 = vmatpush1.bf16.msra.mxu0 0
      %445 = vmatprep.subr.bf16.mxu0 0
      %446 = vmatpush1.bf16.msra.mxu0 0
      %447 = vmatprep.subr.bf16.mxu0 0
      %448 = vmatpush1.bf16.msra.mxu0 0
      %449 = vmatprep.subr.bf16.mxu0 0
      %450 = vmatpush1.bf16.msra.mxu0 0
      %451 = vmatprep.subr.bf16.mxu0 0
      %452 = vmatpush1.bf16.msra.mxu0 0
      %453 = vmatprep.subr.bf16.mxu0 0
      %454 = vmatpush1.bf16.msra.mxu0 0
      %455 = vmatprep.subr.bf16.mxu0 0
      %456 = vmatpush1.bf16.msra.mxu0 0
      %457 = vmatprep.mubr.bf16.mxu0 0
      %458 = vmatmul.mubr.bf16.gmra.mrb[0].mxu0 %v345
      %v459 = vpop.f32.mrb[0].mxu0
      %v460 = vadd.f32 %v279, %v459
      %v461 = vpop.f32.mrb[0].mxu0
      %v462 = vpop.f32.mrb[0].mxu0
      %v463 = vadd.f32 %v279, %v462
      %v464 = vpop.f32.mrb[0].mxu0
      %465 = vmatprep.mubr.bf16.mxu0 0
      %466 = vmatmul.mubr.bf16.gmra.mrb[0].mxu0 %v346
      %v467 = vpop.f32.mrb[0].mxu0
      %v468 = vadd.f32 %v279, %v467
      %v469 = vpop.f32.mrb[0].mxu0
      %v470 = vpop.f32.mrb[0].mxu0
      %v471 = vadd.f32 %v279, %v470
      %v472 = vpop.f32.mrb[0].mxu0
      %473 = vmatprep.mubr.bf16.mxu0 0
      %474 = vmatmul.mubr.bf16.gmra.mrb[0].mxu0 %v347
      %v475 = vpop.f32.mrb[0].mxu0
      %v476 = vadd.f32 %v279, %v475
      %v477 = vpop.f32.mrb[0].mxu0
      %v478 = vpop.f32.mrb[0].mxu0
      %v479 = vadd.f32 %v279, %v478
      %v480 = vpop.f32.mrb[0].mxu0
      %481 = vmatprep.mubr.bf16.mxu0 0
      %482 = vmatmul.mubr.bf16.gmra.mrb[0].mxu0 %v348
      %v483 = vpop.f32.mrb[0].mxu0
      %v484 = vadd.f32 %v279, %v483
      %v485 = vpop.f32.mrb[0].mxu0
      %v486 = vpop.f32.mrb[0].mxu0
      %v487 = vadd.f32 %v279, %v486
      %v488 = vpop.f32.mrb[0].mxu0
      %489 = vmatprep.mubr.bf16.mxu0 0
      %490 = vmatmul.mubr.bf16.gmra.mrb[0].mxu0 %v349
      %v491 = vpop.f32.mrb[0].mxu0
      %v492 = vadd.f32 %v279, %v491
      %v493 = vpop.f32.mrb[0].mxu0
      %v494 = vpop.f32.mrb[0].mxu0
      %v495 = vadd.f32 %v279, %v494
      %v496 = vpop.f32.mrb[0].mxu0
      %497 = vmatprep.mubr.bf16.mxu0 0
      %498 = vmatmul.mubr.bf16.gmra.mrb[0].mxu0 %v350
      %v499 = vpop.f32.mrb[0].mxu0
      %v500 = vadd.f32 %v279, %v499
      %v501 = vpop.f32.mrb[0].mxu0
      %v502 = vpop.f32.mrb[0].mxu0
      %v503 = vadd.f32 %v279, %v502
      %v504 = vpop.f32.mrb[0].mxu0
      %505 = vmatprep.mubr.bf16.mxu0 0
      %506 = vmatmul.mubr.bf16.gmra.mrb[0].mxu0 %v351
      %v507 = vpop.f32.mrb[0].mxu0
      %v508 = vadd.f32 %v279, %v507
      %v509 = vpop.f32.mrb[0].mxu0
      %v510 = vpop.f32.mrb[0].mxu0
      %v511 = vadd.f32 %v279, %v510
      %v512 = vpop.f32.mrb[0].mxu0
      %513 = vmatprep.mubr.bf16.mxu0 0
      %514 = vmatmul.mubr.bf16.gmra.mrb[0].mxu0 %v352
      %v515 = vpop.f32.mrb[0].mxu0
      %v516 = vadd.f32 %v279, %v515
      %v517 = vpop.f32.mrb[0].mxu0
      %v518 = vpop.f32.mrb[0].mxu0
      %v519 = vadd.f32 %v279, %v518
      %v520 = vpop.f32.mrb[0].mxu0
      %521 = vmatprep.mubr.bf16.mxu0 0
      %522 = vmatmul.mubr.bf16.gmra.mrb[0].mxu0 %v353
      %v523 = vpop.f32.mrb[0].mxu0
      %v524 = vadd.f32 %v279, %v523
      %v525 = vpop.f32.mrb[0].mxu0
      %v526 = vpop.f32.mrb[0].mxu0
      %v527 = vadd.f32 %v279, %v526
      %v528 = vpop.f32.mrb[0].mxu0
      %529 = vmatprep.mubr.bf16.mxu0 0
      %530 = vmatmul.mubr.bf16.gmra.mrb[0].mxu0 %v354
      %v531 = vpop.f32.mrb[0].mxu0
      %v532 = vadd.f32 %v279, %v531
      %v533 = vpop.f32.mrb[0].mxu0
      %v534 = vpop.f32.mrb[0].mxu0
      %v535 = vadd.f32 %v279, %v534
      %v536 = vpop.f32.mrb[0].mxu0
      %537 = vmatprep.mubr.bf16.mxu0 0
      %538 = vmatmul.mubr.bf16.gmra.mrb[0].mxu0 %v355
      %v539 = vpop.f32.mrb[0].mxu0
      %v540 = vadd.f32 %v279, %v539
      %v541 = vpop.f32.mrb[0].mxu0
      %v542 = vpop.f32.mrb[0].mxu0
      %v543 = vadd.f32 %v279, %v542
      %v544 = vpop.f32.mrb[0].mxu0
      %545 = vmatprep.mubr.bf16.mxu0 0
      %546 = vmatmul.mubr.bf16.gmra.mrb[0].mxu0 %v356
      %v547 = vpop.f32.mrb[0].mxu0
      %v548 = vadd.f32 %v279, %v547
      %v549 = vpop.f32.mrb[0].mxu0
      %v550 = vpop.f32.mrb[0].mxu0
      %v551 = vadd.f32 %v279, %v550
      %v552 = vpop.f32.mrb[0].mxu0
      %553 = vmatprep.mubr.bf16.mxu0 0
      %554 = vmatmul.mubr.bf16.gmra.mrb[0].mxu0 %v357
      %v555 = vpop.f32.mrb[0].mxu0
      %v556 = vadd.f32 %v279, %v555
      %v557 = vpop.f32.mrb[0].mxu0
      %v558 = vpop.f32.mrb[0].mxu0
      %v559 = vadd.f32 %v279, %v558
      %v560 = vpop.f32.mrb[0].mxu0
      %561 = vmatprep.mubr.bf16.mxu0 0
      %562 = vmatmul.mubr.bf16.gmra.mrb[0].mxu0 %v358
      %v563 = vpop.f32.mrb[0].mxu0
      %v564 = vadd.f32 %v279, %v563
      %v565 = vpop.f32.mrb[0].mxu0
      %v566 = vpop.f32.mrb[0].mxu0
      %v567 = vadd.f32 %v279, %v566
      %v568 = vpop.f32.mrb[0].mxu0
      %569 = vmatprep.mubr.bf16.mxu0 0
      %570 = vmatmul.mubr.bf16.gmra.mrb[0].mxu0 %v359
      %v571 = vpop.f32.mrb[0].mxu0
      %v572 = vadd.f32 %v279, %v571
      %v573 = vpop.f32.mrb[0].mxu0
      %v574 = vpop.f32.mrb[0].mxu0
      %v575 = vadd.f32 %v279, %v574
      %v576 = vpop.f32.mrb[0].mxu0
      %577 = vmatprep.mubr.bf16.mxu0 0
      %578 = vmatmul.mubr.bf16.gmra.mrb[0].mxu0 %v360
      %v579 = vpop.f32.mrb[0].mxu0
      %v580 = vadd.f32 %v279, %v579
      %v581 = vpop.f32.mrb[0].mxu0
      %v582 = vpop.f32.mrb[0].mxu0
      %v583 = vadd.f32 %v279, %v582
      %v584 = vpop.f32.mrb[0].mxu0
      %585 = vdwg.mxu0
      %v586 = vmax.f32 %v460, 0.0
      %v587 = vmax.f32 %v463, 0.0
      %v588 = vmax.f32 %v468, 0.0
      %v589 = vmax.f32 %v471, 0.0
      %v590 = vmax.f32 %v476, 0.0
      %v591 = vmax.f32 %v479, 0.0
      %v592 = vmax.f32 %v484, 0.0
      %v593 = vmax.f32 %v487, 0.0
      %v594 = vmax.f32 %v492, 0.0
      %v595 = vmax.f32 %v495, 0.0
      %v596 = vmax.f32 %v500, 0.0
      %v597 = vmax.f32 %v503, 0.0
      %v598 = vmax.f32 %v508, 0.0
      %v599 = vmax.f32 %v511, 0.0
      %v600 = vmax.f32 %v516, 0.0
      %v601 = vmax.f32 %v519, 0.0
      %v602 = vmax.f32 %v524, 0.0
      %v603 = vmax.f32 %v527, 0.0
      %v604 = vmax.f32 %v532, 0.0
      %v605 = vmax.f32 %v535, 0.0
      %v606 = vmax.f32 %v540, 0.0
      %v607 = vmax.f32 %v543, 0.0
      %v608 = vmax.f32 %v548, 0.0
      %v609 = vmax.f32 %v551, 0.0
      %v610 = vmax.f32 %v556, 0.0
      %v611 = vmax.f32 %v559, 0.0
      %v612 = vmax.f32 %v564, 0.0
      %v613 = vmax.f32 %v567, 0.0
      %v614 = vmax.f32 %v572, 0.0
      %v615 = vmax.f32 %v575, 0.0
      %v616 = vmax.f32 %v580, 0.0
      %v617 = vmax.f32 %v583, 0.0
      %618 = vst [vmem:[%s223] sm:$0xff] %v586
      %619 = vst [vmem:[%s223 + $0x8] sm:$0xff] %v587
      %620 = vst [vmem:[%s223 + $0x10] sm:$0xff] %v588
      %621 = vst [vmem:[%s223 + $0x18] sm:$0xff] %v589
      %622 = vst [vmem:[%s223 + $0x20] sm:$0xff] %v590
      %623 = vst [vmem:[%s223 + $0x28] sm:$0xff] %v591
      %624 = vst [vmem:[%s223 + $0x30] sm:$0xff] %v592
      %625 = vst [vmem:[%s223 + $0x38] sm:$0xff] %v593
      %626 = vst [vmem:[%s223 + $0x40] sm:$0xff] %v594
      %627 = vst [vmem:[%s223 + $0x48] sm:$0xff] %v595
      %628 = vst [vmem:[%s223 + $0x50] sm:$0xff] %v596
      %629 = vst [vmem:[%s223 + $0x58] sm:$0xff] %v597
      %630 = vst [vmem:[%s223 + $0x60] sm:$0xff] %v598
      %631 = vst [vmem:[%s223 + $0x68] sm:$0xff] %v599
      %632 = vst [vmem:[%s223 + $0x70] sm:$0xff] %v600
      %633 = vst [vmem:[%s223 + $0x78] sm:$0xff] %v601
      %634 = vst [vmem:[%s223 + $0x80] sm:$0xff] %v602
      %635 = vst [vmem:[%s223 + $0x88] sm:$0xff] %v603
      %636 = vst [vmem:[%s223 + $0x90] sm:$0xff] %v604
      %637 = vst [vmem:[%s223 + $0x98] sm:$0xff] %v605
      %638 = vst [vmem:[%s223 + $0xa0] sm:$0xff] %v606
      %639 = vst [vmem:[%s223 + $0xa8] sm:$0xff] %v607
      %640 = vst [vmem:[%s223 + $0xb0] sm:$0xff] %v608
      %641 = vst [vmem:[%s223 + $0xb8] sm:$0xff] %v609
      %642 = vst [vmem:[%s223 + $0xc0] sm:$0xff] %v610
      %643 = vst [vmem:[%s223 + $0xc8] sm:$0xff] %v611
      %644 = vst [vmem:[%s223 + $0xd0] sm:$0xff] %v612
      %645 = vst [vmem:[%s223 + $0xd8] sm:$0xff] %v613
      %646 = vst [vmem:[%s223 + $0xe0] sm:$0xff] %v614
      %647 = vst [vmem:[%s223 + $0xe8] sm:$0xff] %v615
      %648 = vst [vmem:[%s223 + $0xf0] sm:$0xff] %v616
      %649 = vst [vmem:[%s223 + $0xf8] sm:$0xff] %v617
      %s650 = smul.u32 32, %s18
      %p651 = scmp.lt.s32.totalorder %s650, 63
      %s652 = scalar_select %p651, %s650, 63
      %p653 = scmp.lt.s32.totalorder %s19, 0
      %s654 = scalar_select %p653, %s19, 0
      %s655 = sadd.s32 %s654, %s652
      %s656 = smul.addr %s655, 8
      %s657 = scalar_lea.vmem %s3, %s656
      // Predicated region
      $region33: #{vargdarknet_forward.11} parent=31 // pred_check
        %p658 = pneg %p124
      $region34: #{vargdarknet_forward.11} parent=31 // pred_check_branch
        %660 = sbr.rel (%p658) target = $region36
      $region35: #{vargdarknet_forward.11} parent=31 // pred_region
        %s661 = smul.u32 32, %s18
      $region36: #{vargdarknet_forward.11} parent=31 // pred_fallthru
        _
    $region32: #{vargdarknet_forward.11} parent=5 // pred_fallthru
      _
    %p662 = scmp.le.s32.totalorder 2, %s9
    // Predicated region
    $region37: #{vargdarknet_forward.11} parent=5 // pred_check
      %p663 = pneg %p662
    $region38: #{vargdarknet_forward.11} parent=5 // pred_check_branch
      %665 = sbr.rel (%p663) target = $region40
    $region39: #{vargdarknet_forward.11} parent=5 // pred_region
      %s666 = ssub.s32 %s9, 2
      // Predicated region
      $region41: #{vargdarknet_forward.11} parent=39 // pred_check
        %p667 = pneg %p130
      $region42: #{vargdarknet_forward.11} parent=39 // pred_check_branch
        %669 = sbr.rel (%p667) target = $region44
      $region43: #{vargdarknet_forward.11} parent=39 // pred_region
        %s670 = smul.u32 32, %s20
        %p671 = scmp.lt.s32.totalorder %s670, 63
        %s672 = scalar_select %p671, %s670, 63
        %p673 = scmp.lt.s32.totalorder %s21, 0
        %s674 = scalar_select %p673, %s21, 0
        %s675 = sadd.s32 %s674, %s672
        %s676 = smul.addr %s675, 8
        %s677 = scalar_lea.vmem %s3, %s676
      $region44: #{vargdarknet_forward.11} parent=39 // pred_fallthru
        _
    $region40: #{vargdarknet_forward.11} parent=5 // pred_fallthru
      _
  $region6: #{vargdarknet_forward.11} parent=0 // loop_footer
    %s13 = sadd.s32 1, %s9
  $region7: #{vargdarknet_forward.11} parent=0 // loop_footer_branch
    %8 = sbr.rel target = $region3
  $region8: #{vargdarknet_forward.11} parent=0 // loop_exit
    _

// kernel: vargdarknet_forward.14
$region0: #{vargdarknet_forward.14}
  #allocation0 [shape = 'u32[]', space=smem, size = 0x4, offset = 0x4, fixed_abs, tag = 'smem constant byte address 0x4 - core index']
  #allocation1 [shape = 'u32[144,128]{1,0:T(1,128)}', space=vmem, size = 0x12000, scoped, tag = 'internal scratch']
  %s0 = inlined_call_operand.vmem [shape: bf16[512,128], index: 0, kind: input, shape index: {}]
  %s1 = inlined_call_operand.vmem [shape: bf16[128,128], index: 1, kind: input, shape index: {}]
  %s2 = inlined_call_operand.vmem [shape: f32[1,128], index: 2, kind: input, shape index: {}]
  %s3 = inlined_call_operand.vmem [shape: f32[512,128], index: 3, kind: input, shape index: {}]
  %s4 = inlined_call_operand.vmem [shape: f32[512,128], index: 4, kind: output, shape index: {}]
  %s5 = sld [smem:[#allocation0]]
  $region49: #{vargdarknet_forward.14} parent=0
    _
  %s7 = ssub.s32 1, %s5
  %s8 = scalar_select 0, %s7, %s5
  loop: start=0, step=1, limit=4
  $region2: #{vargdarknet_forward.14} parent=0 // loop_pre_header
    _
  $region3: #{vargdarknet_forward.14} parent=0 // loop_header
    %s10 = sphi 0, %s14
    %p11 = scmp.ge.s32.totalorder %s10, 4
    %s17 = sphi 0, %s29
    %s18 = sphi 0, %s25
    %s19 = sphi 0, %s17
    %s20 = sphi 0, %s18
    %s21 = sphi 0, %s19
    %s22 = sphi 0, %s20
    %s32 = sphi 0, %s34
    %s35 = sphi 0, %s32
    %s36 = sphi 0, %s35
    %s52 = sphi 0, %s36
    %s58 = sphi 0, %s60
    %s61 = sphi 0, %s58
    %s62 = sphi 0, %s61
    %s78 = sphi 0, %s62
    %s84 = sphi 0, %s86
    %s87 = sphi 0, %s84
    %s88 = sphi 0, %s87
    %s104 = sphi 0, %s88
    %s112 = sphi 0, %s114
    %s115 = sphi 0, %s112
    %s116 = sphi 0, %s115
    %s132 = sphi 0, %s116
    %s140 = sphi 0, %s142
    %s143 = sphi 0, %s140
    %s144 = sphi 0, %s143
    %s160 = sphi 0, %s144
  $region4: #{vargdarknet_forward.14} parent=0 // loop_header_branch
    %13 = sbr.rel (%p11) target = $region8
  $region5: #{vargdarknet_forward.14} parent=0 // loop_body
    %s15 = ssub.s32 %s10, 1
    %s16 = ssub.s32 %s10, 2
    %s23 = sadd.s32 1, %s18
    %p24 = scmp.ge.s32.totalorder %s23, 1
    %s25 = scalar_select %p24, 0, %s23
    %s26 = sadd.s32 1, %s17
    %s27 = scalar_select %p24, %s26, %s17
    %p28 = scmp.ge.s32.totalorder %s27, 2
    %s29 = scalar_select %p28, 0, %s27
    %s30 = ssub.s32 %s17, %s29
    %p31 = scmp.eq.s32.totalorder %s30, 0
    %s33 = sadd.s32 %s32, 1
    %s34 = scalar_select %p31, %s32, %s33
    %p37 = pneg %p31
    %p38 = scmp.eq.s32.totalorder %s10, 1
    %p39 = por %p37, %p38
    %p40 = scmp.ne.s32.totalorder %s32, %s35
    %p41 = scmp.eq.s32.totalorder %s10, 0
    %p42 = por %p40, %p41
    %p43 = scmp.ne.s32.totalorder %s32, %s35
    %p44 = scmp.eq.s32.totalorder %s15, 1
    %p45 = por %p43, %p44
    %p46 = scmp.ne.s32.totalorder %s35, %s36
    %p47 = scmp.eq.s32.totalorder %s15, 0
    %p48 = por %p46, %p47
    %p49 = scmp.ne.s32.totalorder %s35, %s36
    %p50 = scmp.eq.s32.totalorder %s16, 1
    %p51 = por %p49, %p50
    %p53 = scmp.ne.s32.totalorder %s36, %s52
    %p54 = scmp.eq.s32.totalorder %s16, 0
    %p55 = por %p53, %p54
    %s56 = ssub.s32 %s18, %s25
    %p57 = scmp.eq.s32.totalorder %s56, 0
    %s59 = sadd.s32 %s58, 1
    %s60 = scalar_select %p57, %s58, %s59
    %p63 = pneg %p57
    %p64 = scmp.eq.s32.totalorder %s10, 1
    %p65 = por %p63, %p64
    %p66 = scmp.ne.s32.totalorder %s58, %s61
    %p67 = scmp.eq.s32.totalorder %s10, 0
    %p68 = por %p66, %p67
    %p69 = scmp.ne.s32.totalorder %s58, %s61
    %p70 = scmp.eq.s32.totalorder %s15, 1
    %p71 = por %p69, %p70
    %p72 = scmp.ne.s32.totalorder %s61, %s62
    %p73 = scmp.eq.s32.totalorder %s15, 0
    %p74 = por %p72, %p73
    %p75 = scmp.ne.s32.totalorder %s61, %s62
    %p76 = scmp.eq.s32.totalorder %s16, 1
    %p77 = por %p75, %p76
    %p79 = scmp.ne.s32.totalorder %s62, %s78
    %p80 = scmp.eq.s32.totalorder %s16, 0
    %p81 = por %p79, %p80
    %s82 = ssub.s32 %s18, %s25
    %p83 = scmp.eq.s32.totalorder %s82, 0
    %s85 = sadd.s32 %s84, 1
    %s86 = scalar_select %p83, %s84, %s85
    %p89 = pneg %p83
    %p90 = scmp.eq.s32.totalorder %s10, 1
    %p91 = por %p89, %p90
    %p92 = scmp.ne.s32.totalorder %s84, %s87
    %p93 = scmp.eq.s32.totalorder %s10, 0
    %p94 = por %p92, %p93
    %p95 = scmp.ne.s32.totalorder %s84, %s87
    %p96 = scmp.eq.s32.totalorder %s15, 1
    %p97 = por %p95, %p96
    %p98 = scmp.ne.s32.totalorder %s87, %s88
    %p99 = scmp.eq.s32.totalorder %s15, 0
    %p100 = por %p98, %p99
    %p101 = scmp.ne.s32.totalorder %s87, %s88
    %p102 = scmp.eq.s32.totalorder %s16, 1
    %p103 = por %p101, %p102
    %p105 = scmp.ne.s32.totalorder %s88, %s104
    %p106 = scmp.eq.s32.totalorder %s16, 0
    %p107 = por %p105, %p106
    %s108 = ssub.s32 %s17, %s29
    %s109 = ssub.s32 %s18, %s25
    %s110 = sor.u32 %s108, %s109
    %p111 = scmp.eq.s32.totalorder %s110, 0
    %s113 = sadd.s32 %s112, 1
    %s114 = scalar_select %p111, %s112, %s113
    %p117 = pneg %p111
    %p118 = scmp.eq.s32.totalorder %s10, 1
    %p119 = por %p117, %p118
    %p120 = scmp.ne.s32.totalorder %s112, %s115
    %p121 = scmp.eq.s32.totalorder %s10, 0
    %p122 = por %p120, %p121
    %p123 = scmp.ne.s32.totalorder %s112, %s115
    %p124 = scmp.eq.s32.totalorder %s15, 1
    %p125 = por %p123, %p124
    %p126 = scmp.ne.s32.totalorder %s115, %s116
    %p127 = scmp.eq.s32.totalorder %s15, 0
    %p128 = por %p126, %p127
    %p129 = scmp.ne.s32.totalorder %s115, %s116
    %p130 = scmp.eq.s32.totalorder %s16, 1
    %p131 = por %p129, %p130
    %p133 = scmp.ne.s32.totalorder %s116, %s132
    %p134 = scmp.eq.s32.totalorder %s16, 0
    %p135 = por %p133, %p134
    %s136 = ssub.s32 %s17, %s29
    %s137 = ssub.s32 %s18, %s25
    %s138 = sor.u32 %s136, %s137
    %p139 = scmp.eq.s32.totalorder %s138, 0
    %s141 = sadd.s32 %s140, 1
    %s142 = scalar_select %p139, %s140, %s141
    %p145 = pneg %p139
    %p146 = scmp.eq.s32.totalorder %s10, 1
    %p147 = por %p145, %p146
    %p148 = scmp.ne.s32.totalorder %s140, %s143
    %p149 = scmp.eq.s32.totalorder %s10, 0
    %p150 = por %p148, %p149
    %p151 = scmp.ne.s32.totalorder %s140, %s143
    %p152 = scmp.eq.s32.totalorder %s15, 1
    %p153 = por %p151, %p152
    %p154 = scmp.ne.s32.totalorder %s143, %s144
    %p155 = scmp.eq.s32.totalorder %s15, 0
    %p156 = por %p154, %p155
    %p157 = scmp.ne.s32.totalorder %s143, %s144
    %p158 = scmp.eq.s32.totalorder %s16, 1
    %p159 = por %p157, %p158
    %p161 = scmp.ne.s32.totalorder %s144, %s160
    %p162 = scmp.eq.s32.totalorder %s16, 0
    %p163 = por %p161, %p162
    %p164 = scmp.le.s32.totalorder 1, %s10
    %p165 = scmp.lt.s32.totalorder %s10, 3
    %p166 = pnand %p164, %p165
    %p167 = pneg %p166
    // Predicated region
    $region9: #{vargdarknet_forward.14} parent=5 // pred_check
      _
    $region10: #{vargdarknet_forward.14} parent=5 // pred_check_branch
      %169 = sbr.rel (%p166) target = $region12
    $region11: #{vargdarknet_forward.14} parent=5 // pred_region
      %s170 = ssub.s32 %s10, 1
      // Predicated region
      $region13: #{vargdarknet_forward.14} parent=11 // pred_check
        %p171 = pneg %p74
      $region14: #{vargdarknet_forward.14} parent=11 // pred_check_branch
        %173 = sbr.rel (%p171) target = $region16
      $region15: #{vargdarknet_forward.14} parent=11 // pred_region
        %p174 = scmp.lt.s32.totalorder %s20, 0
        %s175 = scalar_select %p174, %s20, 0
        %s176 = smul.addr %s175, 4
        %s177 = scalar_lea.vmem %s1, %s176
      $region16: #{vargdarknet_forward.14} parent=11 // pred_fallthru
        _
      // Predicated region
      $region17: #{vargdarknet_forward.14} parent=11 // pred_check
        %p178 = pneg %p100
      $region18: #{vargdarknet_forward.14} parent=11 // pred_check_branch
        %180 = sbr.rel (%p178) target = $region20
      $region19: #{vargdarknet_forward.14} parent=11 // pred_region
        %p181 = scmp.lt.s32.totalorder %s20, 0
        %s182 = scalar_select %p181, %s20, 0
        %s183 = scalar_lea.vmem %s2, %s182
      $region20: #{vargdarknet_forward.14} parent=11 // pred_fallthru
        _
    $region12: #{vargdarknet_forward.14} parent=5 // pred_fallthru
      _
    %p184 = scmp.lt.s32.totalorder %s10, 2
    // Predicated region
    $region21: #{vargdarknet_forward.14} parent=5 // pred_check
      %p185 = pneg %p184
    $region22: #{vargdarknet_forward.14} parent=5 // pred_check_branch
      %187 = sbr.rel (%p185) target = $region24
    $region23: #{vargdarknet_forward.14} parent=5 // pred_region
      // Predicated region
      $region25: #{vargdarknet_forward.14} parent=23 // pred_check
        %p188 = pneg %p42
      $region26: #{vargdarknet_forward.14} parent=23 // pred_check_branch
        %190 = sbr.rel (%p188) target = $region28
      $region27: #{vargdarknet_forward.14} parent=23 // pred_region
        %s191 = smul.u32 32, %s17
        %p192 = scmp.lt.s32.totalorder %s191, 63
        %s193 = scalar_select %p192, %s191, 63
        %s194 = smul.addr %s193, 4
        %s195 = scalar_lea.vmem %s0, %s194
        %s196 = smul.u32 32, %s17
      $region28: #{vargdarknet_forward.14} parent=23 // pred_fallthru
        _
      // Predicated region
      $region29: #{vargdarknet_forward.14} parent=23 // pred_check
        %p197 = pneg %p122
      $region30: #{vargdarknet_forward.14} parent=23 // pred_check_branch
        %199 = sbr.rel (%p197) target = $region32
      $region31: #{vargdarknet_forward.14} parent=23 // pred_region
        %s200 = smul.u32 32, %s17
        %p201 = scmp.lt.s32.totalorder %s200, 63
        %s202 = scalar_select %p201, %s200, 63
        %p203 = scmp.lt.s32.totalorder %s18, 0
        %s204 = scalar_select %p203, %s18, 0
        %s205 = sadd.s32 %s204, %s202
        %s206 = smul.addr %s205, 8
        %s207 = scalar_lea.vmem %s3, %s206
        %s208 = smul.u32 32, %s17
      $region32: #{vargdarknet_forward.14} parent=23 // pred_fallthru
        _
    $region24: #{vargdarknet_forward.14} parent=5 // pred_fallthru
      _
    %p209 = scmp.le.s32.totalorder 1, %s10
    %p210 = scmp.lt.s32.totalorder %s10, 3
    %p211 = pnand %p209, %p210
    %p212 = pneg %p211
    // Predicated region
    $region33: #{vargdarknet_forward.14} parent=5 // pred_check
      _
    $region34: #{vargdarknet_forward.14} parent=5 // pred_check_branch
      %214 = sbr.rel (%p211) target = $region36
    $region35: #{vargdarknet_forward.14} parent=5 // pred_region
      %s215 = ssub.s32 %s10, 1
      %s216 = smul.u32 32, %s19
      %p217 = scmp.lt.s32.totalorder %s216, 63
      %s218 = scalar_select %p217, %s216, 63
      %s219 = smul.addr %s218, 4
      %s220 = scalar_lea.vmem %s0, %s219
      %p221 = pneg %p48
      %p222 = pneg %p45
      %p223 = scmp.lt.s32.totalorder %s20, 0
      %s224 = scalar_select %p223, %s20, 0
      %s225 = smul.addr %s224, 4
      %s226 = scalar_lea.vmem %s1, %s225
      %p227 = pneg %p74
      %p228 = pneg %p71
      %p229 = scmp.lt.s32.totalorder %s20, 0
      %s230 = scalar_select %p229, %s20, 0
      %s231 = scalar_lea.vmem %s2, %s230
      %p232 = pneg %p100
      %p233 = pneg %p97
      %s234 = smul.u32 32, %s19
      %p235 = scmp.lt.s32.totalorder %s234, 63
      %s236 = scalar_select %p235, %s234, 63
      %p237 = scmp.lt.s32.totalorder %s20, 0
      %s238 = scalar_select %p237, %s20, 0
      %s239 = sadd.s32 %s238, %s236
      %s240 = smul.addr %s239, 8
      %s241 = scalar_lea.vmem %s3, %s240
      %p242 = pneg %p128
      %p243 = pneg %p125
      %p244 = pneg %p156
      %p245 = pneg %p153
      %s246 = smul.u32 32, %s19
      %p247 = scmp.lt.s32.totalorder %s246, 63
      %s248 = scalar_select %p247, %s246, 63
      %p249 = scmp.lt.s32.totalorder %s20, 0
      %s250 = scalar_select %p249, %s20, 0
      %s251 = sadd.s32 %s250, %s248
      %s252 = smul.addr %s251, 8
      %s253 = scalar_lea.vmem %s4, %s252
      %s254 = smul.u32 32, %s19
      %p255 = scmp.lt.s32.totalorder %s254, 63
      %s256 = scalar_select %p255, %s254, 63
      %s257 = smul.addr %s256, 4
      %s258 = scalar_lea.vmem %s0, %s257
      %s259 = smul.u32 32, %s19
      %p260 = scmp.lt.s32.totalorder %s20, 0
      %s261 = scalar_select %p260, %s20, 0
      %s262 = smul.addr %s261, 4
      %s263 = scalar_lea.vmem %s1, %s262
      %p264 = scmp.lt.s32.totalorder %s20, 0
      %s265 = scalar_select %p264, %s20, 0
      %s266 = scalar_lea.vmem %s2, %s265
      %s267 = smul.u32 32, %s19
      %p268 = scmp.lt.s32.totalorder %s267, 63
      %s269 = scalar_select %p268, %s267, 63
      %p270 = scmp.lt.s32.totalorder %s20, 0
      %s271 = scalar_select %p270, %s20, 0
      %s272 = sadd.s32 %s271, %s269
      %s273 = smul.addr %s272, 8
      %s274 = scalar_lea.vmem %s3, %s273
      %s275 = smul.u32 32, %s19
      %s276 = smul.u32 32, %s19
      %p277 = scmp.lt.s32.totalorder %s276, 63
      %s278 = scalar_select %p277, %s276, 63
      %p279 = scmp.lt.s32.totalorder %s20, 0
      %s280 = scalar_select %p279, %s20, 0
      %s281 = sadd.s32 %s280, %s278
      %s282 = smul.addr %s281, 8
      %s283 = scalar_lea.vmem %s4, %s282
      %s284 = smul.u32 32, %s19
      %v286 = vld [vmem:[%s258] sm:$0xf]
      %v287 = vld [vmem:[%s258 + $0x4] sm:$0xf]
      %v288 = vld [vmem:[%s258 + $0x8] sm:$0xf]
      %v289 = vld [vmem:[%s258 + $0xc] sm:$0xf]
      %v290 = vld [vmem:[%s258 + $0x10] sm:$0xf]
      %v291 = vld [vmem:[%s258 + $0x14] sm:$0xf]
      %v292 = vld [vmem:[%s258 + $0x18] sm:$0xf]
      %v293 = vld [vmem:[%s258 + $0x1c] sm:$0xf]
      %v294 = vld [vmem:[%s258 + $0x20] sm:$0xf]
      %v295 = vld [vmem:[%s258 + $0x24] sm:$0xf]
      %v296 = vld [vmem:[%s258 + $0x28] sm:$0xf]
      %v297 = vld [vmem:[%s258 + $0x2c] sm:$0xf]
      %v298 = vld [vmem:[%s258 + $0x30] sm:$0xf]
      %v299 = vld [vmem:[%s258 + $0x34] sm:$0xf]
      %v300 = vld [vmem:[%s258 + $0x38] sm:$0xf]
      %v301 = vld [vmem:[%s258 + $0x3c] sm:$0xf]
      %v302 = vld [vmem:[%s258 + $0x40] sm:$0xf]
      %v303 = vld [vmem:[%s258 + $0x44] sm:$0xf]
      %v304 = vld [vmem:[%s258 + $0x48] sm:$0xf]
      %v305 = vld [vmem:[%s258 + $0x4c] sm:$0xf]
      %v306 = vld [vmem:[%s258 + $0x50] sm:$0xf]
      %v307 = vld [vmem:[%s258 + $0x54] sm:$0xf]
      %v308 = vld [vmem:[%s258 + $0x58] sm:$0xf]
      %v309 = vld [vmem:[%s258 + $0x5c] sm:$0xf]
      %v310 = vld [vmem:[%s258 + $0x60] sm:$0xf]
      %v311 = vld [vmem:[%s258 + $0x64] sm:$0xf]
      %v312 = vld [vmem:[%s258 + $0x68] sm:$0xf]
      %v313 = vld [vmem:[%s258 + $0x6c] sm:$0xf]
      %v314 = vld [vmem:[%s258 + $0x70] sm:$0xf]
      %v315 = vld [vmem:[%s258 + $0x74] sm:$0xf]
      %v316 = vld [vmem:[%s258 + $0x78] sm:$0xf]
      %v317 = vld [vmem:[%s258 + $0x7c] sm:$0xf]
      %v318 = vld [vmem:[%s263] sm:$0xf]
      %v319 = vld [vmem:[%s263 + $0x4] sm:$0xf]
      %v320 = vld [vmem:[%s263 + $0x8] sm:$0xf]
      %v321 = vld [vmem:[%s263 + $0xc] sm:$0xf]
      %v322 = vld [vmem:[%s263 + $0x10] sm:$0xf]
      %v323 = vld [vmem:[%s263 + $0x14] sm:$0xf]
      %v324 = vld [vmem:[%s263 + $0x18] sm:$0xf]
      %v325 = vld [vmem:[%s263 + $0x1c] sm:$0xf]
      %v326 = vld [vmem:[%s263 + $0x20] sm:$0xf]
      %v327 = vld [vmem:[%s263 + $0x24] sm:$0xf]
      %v328 = vld [vmem:[%s263 + $0x28] sm:$0xf]
      %v329 = vld [vmem:[%s263 + $0x2c] sm:$0xf]
      %v330 = vld [vmem:[%s263 + $0x30] sm:$0xf]
      %v331 = vld [vmem:[%s263 + $0x34] sm:$0xf]
      %v332 = vld [vmem:[%s263 + $0x38] sm:$0xf]
      %v333 = vld [vmem:[%s263 + $0x3c] sm:$0xf]
      %v334 = vld [vmem:[%s266] sm:$0x1]
      %v336 = vlaneseq
      %v337 = vshrl.u32 %v336, 7
      %v338 = vsub.s32 0, %v337
      %v339 = vrot.slane %v334, %v338
      %v373 = vunpack.c.l.b16 %v286
      %v374 = vunpack.c.l.b16 %v287
      %v375 = vunpack.c.l.b16 %v288
      %v376 = vunpack.c.l.b16 %v289
      %v377 = vunpack.c.l.b16 %v290
      %v378 = vunpack.c.l.b16 %v291
      %v379 = vunpack.c.l.b16 %v292
      %v380 = vunpack.c.l.b16 %v293
      %v381 = vunpack.c.l.b16 %v294
      %v382 = vunpack.c.l.b16 %v295
      %v383 = vunpack.c.l.b16 %v296
      %v384 = vunpack.c.l.b16 %v297
      %v385 = vunpack.c.l.b16 %v298
      %v386 = vunpack.c.l.b16 %v299
      %v387 = vunpack.c.l.b16 %v300
      %v388 = vunpack.c.l.b16 %v301
      %v389 = vunpack.c.l.b16 %v302
      %v390 = vunpack.c.l.b16 %v303
      %v391 = vunpack.c.l.b16 %v304
      %v392 = vunpack.c.l.b16 %v305
      %v393 = vunpack.c.l.b16 %v306
      %v394 = vunpack.c.l.b16 %v307
      %v395 = vunpack.c.l.b16 %v308
      %v396 = vunpack.c.l.b16 %v309
      %v397 = vunpack.c.l.b16 %v310
      %v398 = vunpack.c.l.b16 %v311
      %v399 = vunpack.c.l.b16 %v312
      %v400 = vunpack.c.l.b16 %v313
      %v401 = vunpack.c.l.b16 %v314
      %v402 = vunpack.c.l.b16 %v315
      %v403 = vunpack.c.l.b16 %v316
      %v404 = vunpack.c.l.b16 %v317
      %v405 = vpack.c.b16 %v374, %v373
      %v406 = vpack.c.b16 %v376, %v375
      %v407 = vpack.c.b16 %v378, %v377
      %v408 = vpack.c.b16 %v380, %v379
      %v409 = vpack.c.b16 %v382, %v381
      %v410 = vpack.c.b16 %v384, %v383
      %v411 = vpack.c.b16 %v386, %v385
      %v412 = vpack.c.b16 %v388, %v387
      %v413 = vpack.c.b16 %v390, %v389
      %v414 = vpack.c.b16 %v392, %v391
      %v415 = vpack.c.b16 %v394, %v393
      %v416 = vpack.c.b16 %v396, %v395
      %v417 = vpack.c.b16 %v398, %v397
      %v418 = vpack.c.b16 %v400, %v399
      %v419 = vpack.c.b16 %v402, %v401
      %v420 = vpack.c.b16 %v404, %v403
      %v453 = vunpack.c.l.b16 %v318
      %v454 = vunpack.c.l.b16 %v319
      %v455 = vunpack.c.l.b16 %v320
      %v456 = vunpack.c.l.b16 %v321
      %v457 = vunpack.c.l.b16 %v322
      %v458 = vunpack.c.l.b16 %v323
      %v459 = vunpack.c.l.b16 %v324
      %v460 = vunpack.c.l.b16 %v325
      %v461 = vunpack.c.l.b16 %v326
      %v462 = vunpack.c.l.b16 %v327
      %v463 = vunpack.c.l.b16 %v328
      %v464 = vunpack.c.l.b16 %v329
      %v465 = vunpack.c.l.b16 %v330
      %v466 = vunpack.c.l.b16 %v331
      %v467 = vunpack.c.l.b16 %v332
      %v468 = vunpack.c.l.b16 %v333
      %v469 = vpack.c.b16 %v454, %v453
      %v470 = vpack.c.b16 %v456, %v455
      %v471 = vpack.c.b16 %v458, %v457
      %v472 = vpack.c.b16 %v460, %v459
      %v473 = vpack.c.b16 %v462, %v461
      %v474 = vpack.c.b16 %v464, %v463
      %v475 = vpack.c.b16 %v466, %v465
      %v476 = vpack.c.b16 %v468, %v467
      %485 = vmatprep.subr.bf16.mxu0 0
      %486 = vmatpush1.bf16.msra.mxu0 %v469
      %487 = vmatprep.subr.bf16.mxu0 0
      %488 = vmatpush1.bf16.msra.mxu0 %v470
      %489 = vmatprep.subr.bf16.mxu0 0
      %490 = vmatpush1.bf16.msra.mxu0 %v471
      %491 = vmatprep.subr.bf16.mxu0 0
      %492 = vmatpush1.bf16.msra.mxu0 %v472
      %493 = vmatprep.subr.bf16.mxu0 0
      %494 = vmatpush1.bf16.msra.mxu0 %v473
      %495 = vmatprep.subr.bf16.mxu0 0
      %496 = vmatpush1.bf16.msra.mxu0 %v474
      %497 = vmatprep.subr.bf16.mxu0 0
      %498 = vmatpush1.bf16.msra.mxu0 %v475
      %499 = vmatprep.subr.bf16.mxu0 0
      %500 = vmatpush1.bf16.msra.mxu0 %v476
      %501 = vmatprep.subr.bf16.mxu0 0
      %502 = vmatpush1.bf16.msra.mxu0 0
      %503 = vmatprep.subr.bf16.mxu0 0
      %504 = vmatpush1.bf16.msra.mxu0 0
      %505 = vmatprep.subr.bf16.mxu0 0
      %506 = vmatpush1.bf16.msra.mxu0 0
      %507 = vmatprep.subr.bf16.mxu0 0
      %508 = vmatpush1.bf16.msra.mxu0 0
      %509 = vmatprep.subr.bf16.mxu0 0
      %510 = vmatpush1.bf16.msra.mxu0 0
      %511 = vmatprep.subr.bf16.mxu0 0
      %512 = vmatpush1.bf16.msra.mxu0 0
      %513 = vmatprep.subr.bf16.mxu0 0
      %514 = vmatpush1.bf16.msra.mxu0 0
      %515 = vmatprep.subr.bf16.mxu0 0
      %516 = vmatpush1.bf16.msra.mxu0 0
      %517 = vmatprep.mubr.bf16.mxu0 0
      %518 = vmatmul.mubr.bf16.gmra.mrb[0].mxu0 %v405
      %v519 = vpop.f32.mrb[0].mxu0
      %v520 = vadd.f32 %v339, %v519
      %v521 = vpop.f32.mrb[0].mxu0
      %v522 = vpop.f32.mrb[0].mxu0
      %v523 = vadd.f32 %v339, %v522
      %v524 = vpop.f32.mrb[0].mxu0
      %525 = vmatprep.mubr.bf16.mxu0 0
      %526 = vmatmul.mubr.bf16.gmra.mrb[0].mxu0 %v406
      %v527 = vpop.f32.mrb[0].mxu0
      %v528 = vadd.f32 %v339, %v527
      %v529 = vpop.f32.mrb[0].mxu0
      %v530 = vpop.f32.mrb[0].mxu0
      %v531 = vadd.f32 %v339, %v530
      %v532 = vpop.f32.mrb[0].mxu0
      %533 = vmatprep.mubr.bf16.mxu0 0
      %534 = vmatmul.mubr.bf16.gmra.mrb[0].mxu0 %v407
      %v535 = vpop.f32.mrb[0].mxu0
      %v536 = vadd.f32 %v339, %v535
      %v537 = vpop.f32.mrb[0].mxu0
      %v538 = vpop.f32.mrb[0].mxu0
      %v539 = vadd.f32 %v339, %v538
      %v540 = vpop.f32.mrb[0].mxu0
      %541 = vmatprep.mubr.bf16.mxu0 0
      %542 = vmatmul.mubr.bf16.gmra.mrb[0].mxu0 %v408
      %v543 = vpop.f32.mrb[0].mxu0
      %v544 = vadd.f32 %v339, %v543
      %v545 = vpop.f32.mrb[0].mxu0
      %v546 = vpop.f32.mrb[0].mxu0
      %v547 = vadd.f32 %v339, %v546
      %v548 = vpop.f32.mrb[0].mxu0
      %549 = vmatprep.mubr.bf16.mxu0 0
      %550 = vmatmul.mubr.bf16.gmra.mrb[0].mxu0 %v409
      %v551 = vpop.f32.mrb[0].mxu0
      %v552 = vadd.f32 %v339, %v551
      %v553 = vpop.f32.mrb[0].mxu0
      %v554 = vpop.f32.mrb[0].mxu0
      %v555 = vadd.f32 %v339, %v554
      %v556 = vpop.f32.mrb[0].mxu0
      %557 = vmatprep.mubr.bf16.mxu0 0
      %558 = vmatmul.mubr.bf16.gmra.mrb[0].mxu0 %v410
      %v559 = vpop.f32.mrb[0].mxu0
      %v560 = vadd.f32 %v339, %v559
      %v561 = vpop.f32.mrb[0].mxu0
      %v562 = vpop.f32.mrb[0].mxu0
      %v563 = vadd.f32 %v339, %v562
      %v564 = vpop.f32.mrb[0].mxu0
      %565 = vmatprep.mubr.bf16.mxu0 0
      %566 = vmatmul.mubr.bf16.gmra.mrb[0].mxu0 %v411
      %v567 = vpop.f32.mrb[0].mxu0
      %v568 = vadd.f32 %v339, %v567
      %v569 = vpop.f32.mrb[0].mxu0
      %v570 = vpop.f32.mrb[0].mxu0
      %v571 = vadd.f32 %v339, %v570
      %v572 = vpop.f32.mrb[0].mxu0
      %573 = vmatprep.mubr.bf16.mxu0 0
      %574 = vmatmul.mubr.bf16.gmra.mrb[0].mxu0 %v412
      %v575 = vpop.f32.mrb[0].mxu0
      %v576 = vadd.f32 %v339, %v575
      %v577 = vpop.f32.mrb[0].mxu0
      %v578 = vpop.f32.mrb[0].mxu0
      %v579 = vadd.f32 %v339, %v578
      %v580 = vpop.f32.mrb[0].mxu0
      %581 = vmatprep.mubr.bf16.mxu0 0
      %582 = vmatmul.mubr.bf16.gmra.mrb[0].mxu0 %v413
      %v583 = vpop.f32.mrb[0].mxu0
      %v584 = vadd.f32 %v339, %v583
      %v585 = vpop.f32.mrb[0].mxu0
      %v586 = vpop.f32.mrb[0].mxu0
      %v587 = vadd.f32 %v339, %v586
      %v588 = vpop.f32.mrb[0].mxu0
      %589 = vmatprep.mubr.bf16.mxu0 0
      %590 = vmatmul.mubr.bf16.gmra.mrb[0].mxu0 %v414
      %v591 = vpop.f32.mrb[0].mxu0
      %v592 = vadd.f32 %v339, %v591
      %v593 = vpop.f32.mrb[0].mxu0
      %v594 = vpop.f32.mrb[0].mxu0
      %v595 = vadd.f32 %v339, %v594
      %v596 = vpop.f32.mrb[0].mxu0
      %597 = vmatprep.mubr.bf16.mxu0 0
      %598 = vmatmul.mubr.bf16.gmra.mrb[0].mxu0 %v415
      %v599 = vpop.f32.mrb[0].mxu0
      %v600 = vadd.f32 %v339, %v599
      %v601 = vpop.f32.mrb[0].mxu0
      %v602 = vpop.f32.mrb[0].mxu0
      %v603 = vadd.f32 %v339, %v602
      %v604 = vpop.f32.mrb[0].mxu0
      %605 = vmatprep.mubr.bf16.mxu0 0
      %606 = vmatmul.mubr.bf16.gmra.mrb[0].mxu0 %v416
      %v607 = vpop.f32.mrb[0].mxu0
      %v608 = vadd.f32 %v339, %v607
      %v609 = vpop.f32.mrb[0].mxu0
      %v610 = vpop.f32.mrb[0].mxu0
      %v611 = vadd.f32 %v339, %v610
      %v612 = vpop.f32.mrb[0].mxu0
      %613 = vmatprep.mubr.bf16.mxu0 0
      %614 = vmatmul.mubr.bf16.gmra.mrb[0].mxu0 %v417
      %v615 = vpop.f32.mrb[0].mxu0
      %v616 = vadd.f32 %v339, %v615
      %v617 = vpop.f32.mrb[0].mxu0
      %v618 = vpop.f32.mrb[0].mxu0
      %v619 = vadd.f32 %v339, %v618
      %v620 = vpop.f32.mrb[0].mxu0
      %621 = vmatprep.mubr.bf16.mxu0 0
      %622 = vmatmul.mubr.bf16.gmra.mrb[0].mxu0 %v418
      %v623 = vpop.f32.mrb[0].mxu0
      %v624 = vadd.f32 %v339, %v623
      %v625 = vpop.f32.mrb[0].mxu0
      %v626 = vpop.f32.mrb[0].mxu0
      %v627 = vadd.f32 %v339, %v626
      %v628 = vpop.f32.mrb[0].mxu0
      %629 = vmatprep.mubr.bf16.mxu0 0
      %630 = vmatmul.mubr.bf16.gmra.mrb[0].mxu0 %v419
      %v631 = vpop.f32.mrb[0].mxu0
      %v632 = vadd.f32 %v339, %v631
      %v633 = vpop.f32.mrb[0].mxu0
      %v634 = vpop.f32.mrb[0].mxu0
      %v635 = vadd.f32 %v339, %v634
      %v636 = vpop.f32.mrb[0].mxu0
      %637 = vmatprep.mubr.bf16.mxu0 0
      %638 = vmatmul.mubr.bf16.gmra.mrb[0].mxu0 %v420
      %v639 = vpop.f32.mrb[0].mxu0
      %v640 = vadd.f32 %v339, %v639
      %v641 = vpop.f32.mrb[0].mxu0
      %v642 = vpop.f32.mrb[0].mxu0
      %v643 = vadd.f32 %v339, %v642
      %v644 = vpop.f32.mrb[0].mxu0
      %645 = vdwg.mxu0
      %v646 = vld [vmem:[%s274] sm:$0xff]
      %v647 = vld [vmem:[%s274 + $0x8] sm:$0xff]
      %v648 = vld [vmem:[%s274 + $0x10] sm:$0xff]
      %v649 = vld [vmem:[%s274 + $0x18] sm:$0xff]
      %v650 = vld [vmem:[%s274 + $0x20] sm:$0xff]
      %v651 = vld [vmem:[%s274 + $0x28] sm:$0xff]
      %v652 = vld [vmem:[%s274 + $0x30] sm:$0xff]
      %v653 = vld [vmem:[%s274 + $0x38] sm:$0xff]
      %v654 = vld [vmem:[%s274 + $0x40] sm:$0xff]
      %v655 = vld [vmem:[%s274 + $0x48] sm:$0xff]
      %v656 = vld [vmem:[%s274 + $0x50] sm:$0xff]
      %v657 = vld [vmem:[%s274 + $0x58] sm:$0xff]
      %v658 = vld [vmem:[%s274 + $0x60] sm:$0xff]
      %v659 = vld [vmem:[%s274 + $0x68] sm:$0xff]
      %v660 = vld [vmem:[%s274 + $0x70] sm:$0xff]
      %v661 = vld [vmem:[%s274 + $0x78] sm:$0xff]
      %v662 = vld [vmem:[%s274 + $0x80] sm:$0xff]
      %v663 = vld [vmem:[%s274 + $0x88] sm:$0xff]
      %v664 = vld [vmem:[%s274 + $0x90] sm:$0xff]
      %v665 = vld [vmem:[%s274 + $0x98] sm:$0xff]
      %v666 = vld [vmem:[%s274 + $0xa0] sm:$0xff]
      %v667 = vld [vmem:[%s274 + $0xa8] sm:$0xff]
      %v668 = vld [vmem:[%s274 + $0xb0] sm:$0xff]
      %v669 = vld [vmem:[%s274 + $0xb8] sm:$0xff]
      %v670 = vld [vmem:[%s274 + $0xc0] sm:$0xff]
      %v671 = vld [vmem:[%s274 + $0xc8] sm:$0xff]
      %v672 = vld [vmem:[%s274 + $0xd0] sm:$0xff]
      %v673 = vld [vmem:[%s274 + $0xd8] sm:$0xff]
      %v674 = vld [vmem:[%s274 + $0xe0] sm:$0xff]
      %v675 = vld [vmem:[%s274 + $0xe8] sm:$0xff]
      %v676 = vld [vmem:[%s274 + $0xf0] sm:$0xff]
      %v677 = vld [vmem:[%s274 + $0xf8] sm:$0xff]
      %v678 = vadd.f32 %v520, %v646
      %v679 = vadd.f32 %v523, %v647
      %v680 = vadd.f32 %v528, %v648
      %v681 = vadd.f32 %v531, %v649
      %v682 = vadd.f32 %v536, %v650
      %v683 = vadd.f32 %v539, %v651
      %v684 = vadd.f32 %v544, %v652
      %v685 = vadd.f32 %v547, %v653
      %v686 = vadd.f32 %v552, %v654
      %v687 = vadd.f32 %v555, %v655
      %v688 = vadd.f32 %v560, %v656
      %v689 = vadd.f32 %v563, %v657
      %v690 = vadd.f32 %v568, %v658
      %v691 = vadd.f32 %v571, %v659
      %v692 = vadd.f32 %v576, %v660
      %v693 = vadd.f32 %v579, %v661
      %v694 = vadd.f32 %v584, %v662
      %v695 = vadd.f32 %v587, %v663
      %v696 = vadd.f32 %v592, %v664
      %v697 = vadd.f32 %v595, %v665
      %v698 = vadd.f32 %v600, %v666
      %v699 = vadd.f32 %v603, %v667
      %v700 = vadd.f32 %v608, %v668
      %v701 = vadd.f32 %v611, %v669
      %v702 = vadd.f32 %v616, %v670
      %v703 = vadd.f32 %v619, %v671
      %v704 = vadd.f32 %v624, %v672
      %v705 = vadd.f32 %v627, %v673
      %v706 = vadd.f32 %v632, %v674
      %v707 = vadd.f32 %v635, %v675
      %v708 = vadd.f32 %v640, %v676
      %v709 = vadd.f32 %v643, %v677
      %v710 = vmax.f32 %v678, 0.0
      %v711 = vmax.f32 %v679, 0.0
      %v712 = vmax.f32 %v680, 0.0
      %v713 = vmax.f32 %v681, 0.0
      %v714 = vmax.f32 %v682, 0.0
      %v715 = vmax.f32 %v683, 0.0
      %v716 = vmax.f32 %v684, 0.0
      %v717 = vmax.f32 %v685, 0.0
      %v718 = vmax.f32 %v686, 0.0
      %v719 = vmax.f32 %v687, 0.0
      %v720 = vmax.f32 %v688, 0.0
      %v721 = vmax.f32 %v689, 0.0
      %v722 = vmax.f32 %v690, 0.0
      %v723 = vmax.f32 %v691, 0.0
      %v724 = vmax.f32 %v692, 0.0
      %v725 = vmax.f32 %v693, 0.0
      %v726 = vmax.f32 %v694, 0.0
      %v727 = vmax.f32 %v695, 0.0
      %v728 = vmax.f32 %v696, 0.0
      %v729 = vmax.f32 %v697, 0.0
      %v730 = vmax.f32 %v698, 0.0
      %v731 = vmax.f32 %v699, 0.0
      %v732 = vmax.f32 %v700, 0.0
      %v733 = vmax.f32 %v701, 0.0
      %v734 = vmax.f32 %v702, 0.0
      %v735 = vmax.f32 %v703, 0.0
      %v736 = vmax.f32 %v704, 0.0
      %v737 = vmax.f32 %v705, 0.0
      %v738 = vmax.f32 %v706, 0.0
      %v739 = vmax.f32 %v707, 0.0
      %v740 = vmax.f32 %v708, 0.0
      %v741 = vmax.f32 %v709, 0.0
      %742 = vst [vmem:[%s283] sm:$0xff] %v710
      %743 = vst [vmem:[%s283 + $0x8] sm:$0xff] %v711
      %744 = vst [vmem:[%s283 + $0x10] sm:$0xff] %v712
      %745 = vst [vmem:[%s283 + $0x18] sm:$0xff] %v713
      %746 = vst [vmem:[%s283 + $0x20] sm:$0xff] %v714
      %747 = vst [vmem:[%s283 + $0x28] sm:$0xff] %v715
      %748 = vst [vmem:[%s283 + $0x30] sm:$0xff] %v716
      %749 = vst [vmem:[%s283 + $0x38] sm:$0xff] %v717
      %750 = vst [vmem:[%s283 + $0x40] sm:$0xff] %v718
      %751 = vst [vmem:[%s283 + $0x48] sm:$0xff] %v719
      %752 = vst [vmem:[%s283 + $0x50] sm:$0xff] %v720
      %753 = vst [vmem:[%s283 + $0x58] sm:$0xff] %v721
      %754 = vst [vmem:[%s283 + $0x60] sm:$0xff] %v722
      %755 = vst [vmem:[%s283 + $0x68] sm:$0xff] %v723
      %756 = vst [vmem:[%s283 + $0x70] sm:$0xff] %v724
      %757 = vst [vmem:[%s283 + $0x78] sm:$0xff] %v725
      %758 = vst [vmem:[%s283 + $0x80] sm:$0xff] %v726
      %759 = vst [vmem:[%s283 + $0x88] sm:$0xff] %v727
      %760 = vst [vmem:[%s283 + $0x90] sm:$0xff] %v728
      %761 = vst [vmem:[%s283 + $0x98] sm:$0xff] %v729
      %762 = vst [vmem:[%s283 + $0xa0] sm:$0xff] %v730
      %763 = vst [vmem:[%s283 + $0xa8] sm:$0xff] %v731
      %764 = vst [vmem:[%s283 + $0xb0] sm:$0xff] %v732
      %765 = vst [vmem:[%s283 + $0xb8] sm:$0xff] %v733
      %766 = vst [vmem:[%s283 + $0xc0] sm:$0xff] %v734
      %767 = vst [vmem:[%s283 + $0xc8] sm:$0xff] %v735
      %768 = vst [vmem:[%s283 + $0xd0] sm:$0xff] %v736
      %769 = vst [vmem:[%s283 + $0xd8] sm:$0xff] %v737
      %770 = vst [vmem:[%s283 + $0xe0] sm:$0xff] %v738
      %771 = vst [vmem:[%s283 + $0xe8] sm:$0xff] %v739
      %772 = vst [vmem:[%s283 + $0xf0] sm:$0xff] %v740
      %773 = vst [vmem:[%s283 + $0xf8] sm:$0xff] %v741
      %s774 = smul.u32 32, %s19
      %p775 = scmp.lt.s32.totalorder %s774, 63
      %s776 = scalar_select %p775, %s774, 63
      %p777 = scmp.lt.s32.totalorder %s20, 0
      %s778 = scalar_select %p777, %s20, 0
      %s779 = sadd.s32 %s778, %s776
      %s780 = smul.addr %s779, 8
      %s781 = scalar_lea.vmem %s4, %s780
      // Predicated region
      $region37: #{vargdarknet_forward.14} parent=35 // pred_check
        %p782 = pneg %p153
      $region38: #{vargdarknet_forward.14} parent=35 // pred_check_branch
        %784 = sbr.rel (%p782) target = $region40
      $region39: #{vargdarknet_forward.14} parent=35 // pred_region
        %s785 = smul.u32 32, %s19
      $region40: #{vargdarknet_forward.14} parent=35 // pred_fallthru
        _
    $region36: #{vargdarknet_forward.14} parent=5 // pred_fallthru
      _
    %p786 = scmp.le.s32.totalorder 2, %s10
    // Predicated region
    $region41: #{vargdarknet_forward.14} parent=5 // pred_check
      %p787 = pneg %p786
    $region42: #{vargdarknet_forward.14} parent=5 // pred_check_branch
      %789 = sbr.rel (%p787) target = $region44
    $region43: #{vargdarknet_forward.14} parent=5 // pred_region
      %s790 = ssub.s32 %s10, 2
      // Predicated region
      $region45: #{vargdarknet_forward.14} parent=43 // pred_check
        %p791 = pneg %p159
      $region46: #{vargdarknet_forward.14} parent=43 // pred_check_branch
        %793 = sbr.rel (%p791) target = $region48
      $region47: #{vargdarknet_forward.14} parent=43 // pred_region
        %s794 = smul.u32 32, %s21
        %p795 = scmp.lt.s32.totalorder %s794, 63
        %s796 = scalar_select %p795, %s794, 63
        %p797 = scmp.lt.s32.totalorder %s22, 0
        %s798 = scalar_select %p797, %s22, 0
        %s799 = sadd.s32 %s798, %s796
        %s800 = smul.addr %s799, 8
        %s801 = scalar_lea.vmem %s4, %s800
      $region48: #{vargdarknet_forward.14} parent=43 // pred_fallthru
        _
    $region44: #{vargdarknet_forward.14} parent=5 // pred_fallthru
      _
  $region6: #{vargdarknet_forward.14} parent=0 // loop_footer
    %s14 = sadd.s32 1, %s10
  $region7: #{vargdarknet_forward.14} parent=0 // loop_footer_branch
    %9 = sbr.rel target = $region3
  $region8: #{vargdarknet_forward.14} parent=0 // loop_exit
    _

// kernel: vargdarknet_forward.15
$region0: #{vargdarknet_forward.15}
  #allocation0 [shape = 'u32[]', space=smem, size = 0x4, offset = 0x4, fixed_abs, tag = 'smem constant byte address 0x4 - core index']
  #allocation1 [shape = 'u32[144,128]{1,0:T(1,128)}', space=vmem, size = 0x12000, scoped, tag = 'internal scratch']
  %s0 = inlined_call_operand.vmem [shape: bf16[104,256], index: 0, kind: input, shape index: {}]
  %s1 = inlined_call_operand.vmem [shape: bf16[256,128], index: 1, kind: input, shape index: {}]
  %s2 = inlined_call_operand.vmem [shape: f32[1,128], index: 2, kind: input, shape index: {}]
  %s3 = inlined_call_operand.vmem [shape: f32[104,128], index: 3, kind: output, shape index: {}]
  %s4 = sld [smem:[#allocation0]]
  $region22: #{vargdarknet_forward.15} parent=0
    _
  %s6 = ssub.s32 1, %s4
  %s7 = scalar_select 0, %s6, %s4
  // Predicated region
  $region2: #{vargdarknet_forward.15} parent=0 // pred_check
    _
  $region3: #{vargdarknet_forward.15} parent=0 // pred_check_branch
    %9 = sbr.rel (0) target = $region5
  $region4: #{vargdarknet_forward.15} parent=0 // pred_region
    _
  $region5: #{vargdarknet_forward.15} parent=0 // pred_fallthru
    _
  // Predicated region
  $region6: #{vargdarknet_forward.15} parent=0 // pred_check
    _
  $region7: #{vargdarknet_forward.15} parent=0 // pred_check_branch
    %11 = sbr.rel (0) target = $region9
  $region8: #{vargdarknet_forward.15} parent=0 // pred_region
    _
  $region9: #{vargdarknet_forward.15} parent=0 // pred_fallthru
    _
  // Predicated region
  $region10: #{vargdarknet_forward.15} parent=0 // pred_check
    _
  $region11: #{vargdarknet_forward.15} parent=0 // pred_check_branch
    %13 = sbr.rel (0) target = $region13
  $region12: #{vargdarknet_forward.15} parent=0 // pred_region
    _
  $region13: #{vargdarknet_forward.15} parent=0 // pred_fallthru
    _
  %v15 = vld [vmem:[%s0] sm:$0xff]
  %v16 = vld [vmem:[%s0 + $0x8] sm:$0xff]
  %v17 = vld [vmem:[%s0 + $0x10] sm:$0xff]
  %v18 = vld [vmem:[%s0 + $0x18] sm:$0xff]
  %v19 = vld [vmem:[%s0 + $0x20] sm:$0xff]
  %v20 = vld [vmem:[%s0 + $0x28] sm:$0xff]
  %v21 = vld [vmem:[%s0 + $0x30] sm:$0xff]
  %v22 = vld [vmem:[%s0 + $0x38] sm:$0xff]
  %v23 = vld [vmem:[%s0 + $0x40] sm:$0xff]
  %v24 = vld [vmem:[%s0 + $0x48] sm:$0xff]
  %v25 = vld [vmem:[%s0 + $0x50] sm:$0xff]
  %v26 = vld [vmem:[%s0 + $0x58] sm:$0xff]
  %v27 = vld [vmem:[%s0 + $0x60] sm:$0xff]
  %v28 = vld [vmem:[%s1] sm:$0xf]
  %v29 = vld [vmem:[%s1 + $0x4] sm:$0xf]
  %v30 = vld [vmem:[%s1 + $0x8] sm:$0xf]
  %v31 = vld [vmem:[%s1 + $0xc] sm:$0xf]
  %v32 = vld [vmem:[%s1 + $0x10] sm:$0xf]
  %v33 = vld [vmem:[%s1 + $0x14] sm:$0xf]
  %v34 = vld [vmem:[%s1 + $0x18] sm:$0xf]
  %v35 = vld [vmem:[%s1 + $0x1c] sm:$0xf]
  %v36 = vld [vmem:[%s1 + $0x20] sm:$0xf]
  %v37 = vld [vmem:[%s1 + $0x24] sm:$0xf]
  %v38 = vld [vmem:[%s1 + $0x28] sm:$0xf]
  %v39 = vld [vmem:[%s1 + $0x2c] sm:$0xf]
  %v40 = vld [vmem:[%s1 + $0x30] sm:$0xf]
  %v41 = vld [vmem:[%s1 + $0x34] sm:$0xf]
  %v42 = vld [vmem:[%s1 + $0x38] sm:$0xf]
  %v43 = vld [vmem:[%s1 + $0x3c] sm:$0xf]
  %v44 = vld [vmem:[%s1 + $0x40] sm:$0xf]
  %v45 = vld [vmem:[%s1 + $0x44] sm:$0xf]
  %v46 = vld [vmem:[%s1 + $0x48] sm:$0xf]
  %v47 = vld [vmem:[%s1 + $0x4c] sm:$0xf]
  %v48 = vld [vmem:[%s1 + $0x50] sm:$0xf]
  %v49 = vld [vmem:[%s1 + $0x54] sm:$0xf]
  %v50 = vld [vmem:[%s1 + $0x58] sm:$0xf]
  %v51 = vld [vmem:[%s1 + $0x5c] sm:$0xf]
  %v52 = vld [vmem:[%s1 + $0x60] sm:$0xf]
  %v53 = vld [vmem:[%s1 + $0x64] sm:$0xf]
  %v54 = vld [vmem:[%s1 + $0x68] sm:$0xf]
  %v55 = vld [vmem:[%s1 + $0x6c] sm:$0xf]
  %v56 = vld [vmem:[%s1 + $0x70] sm:$0xf]
  %v57 = vld [vmem:[%s1 + $0x74] sm:$0xf]
  %v58 = vld [vmem:[%s1 + $0x78] sm:$0xf]
  %v59 = vld [vmem:[%s1 + $0x7c] sm:$0xf]
  %v60 = vld [vmem:[%s2] sm:$0x1]
  %v62 = vlaneseq
  %v63 = vshrl.u32 %v62, 7
  %v64 = vsub.s32 0, %v63
  %v65 = vrot.slane %v60, %v64
  %v80 = vunpack.c.l.b16 %v15
  %v81 = vunpack.c.h.b16 %v15
  %v82 = vunpack.c.l.b16 %v16
  %v83 = vunpack.c.h.b16 %v16
  %v84 = vunpack.c.l.b16 %v17
  %v85 = vunpack.c.h.b16 %v17
  %v86 = vunpack.c.l.b16 %v18
  %v87 = vunpack.c.h.b16 %v18
  %v88 = vunpack.c.l.b16 %v19
  %v89 = vunpack.c.h.b16 %v19
  %v90 = vunpack.c.l.b16 %v20
  %v91 = vunpack.c.h.b16 %v20
  %v92 = vunpack.c.l.b16 %v21
  %v93 = vunpack.c.h.b16 %v21
  %v94 = vunpack.c.l.b16 %v22
  %v95 = vunpack.c.h.b16 %v22
  %v96 = vunpack.c.l.b16 %v23
  %v97 = vunpack.c.h.b16 %v23
  %v98 = vunpack.c.l.b16 %v24
  %v99 = vunpack.c.h.b16 %v24
  %v100 = vunpack.c.l.b16 %v25
  %v101 = vunpack.c.h.b16 %v25
  %v102 = vunpack.c.l.b16 %v26
  %v103 = vunpack.c.h.b16 %v26
  %v104 = vunpack.c.l.b16 %v27
  %v105 = vunpack.c.h.b16 %v27
  %v106 = vpack.c.b16 %v82, %v80
  %v107 = vpack.c.b16 %v83, %v81
  %v108 = vpack.c.b16 %v86, %v84
  %v109 = vpack.c.b16 %v87, %v85
  %v110 = vpack.c.b16 %v90, %v88
  %v111 = vpack.c.b16 %v91, %v89
  %v112 = vpack.c.b16 %v94, %v92
  %v113 = vpack.c.b16 %v95, %v93
  %v114 = vpack.c.b16 %v98, %v96
  %v115 = vpack.c.b16 %v99, %v97
  %v116 = vpack.c.b16 %v102, %v100
  %v117 = vpack.c.b16 %v103, %v101
  %v118 = vpack.c.b16 %v104, %v104
  %v119 = vpack.c.b16 %v105, %v105
  %v166 = vunpack.c.l.b16 %v28
  %v167 = vunpack.c.l.b16 %v29
  %v168 = vunpack.c.l.b16 %v30
  %v169 = vunpack.c.l.b16 %v31
  %v170 = vunpack.c.l.b16 %v32
  %v171 = vunpack.c.l.b16 %v33
  %v172 = vunpack.c.l.b16 %v34
  %v173 = vunpack.c.l.b16 %v35
  %v174 = vunpack.c.l.b16 %v36
  %v175 = vunpack.c.l.b16 %v37
  %v176 = vunpack.c.l.b16 %v38
  %v177 = vunpack.c.l.b16 %v39
  %v178 = vunpack.c.l.b16 %v40
  %v179 = vunpack.c.l.b16 %v41
  %v180 = vunpack.c.l.b16 %v42
  %v181 = vunpack.c.l.b16 %v43
  %v182 = vunpack.c.l.b16 %v44
  %v183 = vunpack.c.l.b16 %v45
  %v184 = vunpack.c.l.b16 %v46
  %v185 = vunpack.c.l.b16 %v47
  %v186 = vunpack.c.l.b16 %v48
  %v187 = vunpack.c.l.b16 %v49
  %v188 = vunpack.c.l.b16 %v50
  %v189 = vunpack.c.l.b16 %v51
  %v190 = vunpack.c.l.b16 %v52
  %v191 = vunpack.c.l.b16 %v53
  %v192 = vunpack.c.l.b16 %v54
  %v193 = vunpack.c.l.b16 %v55
  %v194 = vunpack.c.l.b16 %v56
  %v195 = vunpack.c.l.b16 %v57
  %v196 = vunpack.c.l.b16 %v58
  %v197 = vunpack.c.l.b16 %v59
  %v198 = vpack.c.b16 %v167, %v166
  %v199 = vpack.c.b16 %v169, %v168
  %v200 = vpack.c.b16 %v171, %v170
  %v201 = vpack.c.b16 %v173, %v172
  %v202 = vpack.c.b16 %v175, %v174
  %v203 = vpack.c.b16 %v177, %v176
  %v204 = vpack.c.b16 %v179, %v178
  %v205 = vpack.c.b16 %v181, %v180
  %v206 = vpack.c.b16 %v183, %v182
  %v207 = vpack.c.b16 %v185, %v184
  %v208 = vpack.c.b16 %v187, %v186
  %v209 = vpack.c.b16 %v189, %v188
  %v210 = vpack.c.b16 %v191, %v190
  %v211 = vpack.c.b16 %v193, %v192
  %v212 = vpack.c.b16 %v195, %v194
  %v213 = vpack.c.b16 %v197, %v196
  %230 = vmatprep.subr.bf16.mxu0 0
  %231 = vmatpush1.bf16.msra.mxu0 %v198
  %232 = vmatprep.subr.bf16.mxu0 0
  %233 = vmatpush1.bf16.msra.mxu0 %v199
  %234 = vmatprep.subr.bf16.mxu0 0
  %235 = vmatpush1.bf16.msra.mxu0 %v200
  %236 = vmatprep.subr.bf16.mxu0 0
  %237 = vmatpush1.bf16.msra.mxu0 %v201
  %238 = vmatprep.subr.bf16.mxu0 0
  %239 = vmatpush1.bf16.msra.mxu0 %v202
  %240 = vmatprep.subr.bf16.mxu0 0
  %241 = vmatpush1.bf16.msra.mxu0 %v203
  %242 = vmatprep.subr.bf16.mxu0 0
  %243 = vmatpush1.bf16.msra.mxu0 %v204
  %244 = vmatprep.subr.bf16.mxu0 0
  %245 = vmatpush1.bf16.msra.mxu0 %v205
  %246 = vmatprep.subr.bf16.mxu0 0
  %247 = vmatpush1.bf16.msra.mxu0 %v206
  %248 = vmatprep.subr.bf16.mxu0 0
  %249 = vmatpush1.bf16.msra.mxu0 %v207
  %250 = vmatprep.subr.bf16.mxu0 0
  %251 = vmatpush1.bf16.msra.mxu0 %v208
  %252 = vmatprep.subr.bf16.mxu0 0
  %253 = vmatpush1.bf16.msra.mxu0 %v209
  %254 = vmatprep.subr.bf16.mxu0 0
  %255 = vmatpush1.bf16.msra.mxu0 %v210
  %256 = vmatprep.subr.bf16.mxu0 0
  %257 = vmatpush1.bf16.msra.mxu0 %v211
  %258 = vmatprep.subr.bf16.mxu0 0
  %259 = vmatpush1.bf16.msra.mxu0 %v212
  %260 = vmatprep.subr.bf16.mxu0 0
  %261 = vmatpush1.bf16.msra.mxu0 %v213
  %262 = vmatprep.mubr.bf16.mxu0 %v107
  %263 = vmatmul.mubr.bf16.gmra.mrb[0].mxu0 %v106
  %v264 = vpop.f32.mrb[0].mxu0
  %v265 = vadd.f32 %v65, %v264
  %v266 = vpop.f32.mrb[0].mxu0
  %v267 = vpop.f32.mrb[0].mxu0
  %v268 = vadd.f32 %v65, %v267
  %v269 = vpop.f32.mrb[0].mxu0
  %270 = vmatprep.mubr.bf16.mxu0 %v109
  %271 = vmatmul.mubr.bf16.gmra.mrb[0].mxu0 %v108
  %v272 = vpop.f32.mrb[0].mxu0
  %v273 = vadd.f32 %v65, %v272
  %v274 = vpop.f32.mrb[0].mxu0
  %v275 = vpop.f32.mrb[0].mxu0
  %v276 = vadd.f32 %v65, %v275
  %v277 = vpop.f32.mrb[0].mxu0
  %278 = vmatprep.mubr.bf16.mxu0 %v111
  %279 = vmatmul.mubr.bf16.gmra.mrb[0].mxu0 %v110
  %v280 = vpop.f32.mrb[0].mxu0
  %v281 = vadd.f32 %v65, %v280
  %v282 = vpop.f32.mrb[0].mxu0
  %v283 = vpop.f32.mrb[0].mxu0
  %v284 = vadd.f32 %v65, %v283
  %v285 = vpop.f32.mrb[0].mxu0
  %286 = vmatprep.mubr.bf16.mxu0 %v113
  %287 = vmatmul.mubr.bf16.gmra.mrb[0].mxu0 %v112
  %v288 = vpop.f32.mrb[0].mxu0
  %v289 = vadd.f32 %v65, %v288
  %v290 = vpop.f32.mrb[0].mxu0
  %v291 = vpop.f32.mrb[0].mxu0
  %v292 = vadd.f32 %v65, %v291
  %v293 = vpop.f32.mrb[0].mxu0
  %294 = vmatprep.mubr.bf16.mxu0 %v115
  %295 = vmatmul.mubr.bf16.gmra.mrb[0].mxu0 %v114
  %v296 = vpop.f32.mrb[0].mxu0
  %v297 = vadd.f32 %v65, %v296
  %v298 = vpop.f32.mrb[0].mxu0
  %v299 = vpop.f32.mrb[0].mxu0
  %v300 = vadd.f32 %v65, %v299
  %v301 = vpop.f32.mrb[0].mxu0
  %302 = vmatprep.mubr.bf16.mxu0 %v117
  %303 = vmatmul.mubr.bf16.gmra.mrb[0].mxu0 %v116
  %v304 = vpop.f32.mrb[0].mxu0
  %v305 = vadd.f32 %v65, %v304
  %v306 = vpop.f32.mrb[0].mxu0
  %v307 = vpop.f32.mrb[0].mxu0
  %v308 = vadd.f32 %v65, %v307
  %v309 = vpop.f32.mrb[0].mxu0
  %310 = vmatprep.mubr.bf16.mxu0 %v119
  %311 = vmatmul.mubr.bf16.gmra.mrb[0].mxu0 %v118
  %v312 = vpop.f32.mrb[0].mxu0
  %v313 = vadd.f32 %v65, %v312
  %v314 = vpop.f32.mrb[0].mxu0
  %v315 = vpop.f32.mrb[0].mxu0
  %v316 = vpop.f32.mrb[0].mxu0
  %317 = vdwg.mxu0
  %v318 = vmax.f32 %v265, 0.0
  %v319 = vmax.f32 %v268, 0.0
  %v320 = vmax.f32 %v273, 0.0
  %v321 = vmax.f32 %v276, 0.0
  %v322 = vmax.f32 %v281, 0.0
  %v323 = vmax.f32 %v284, 0.0
  %v324 = vmax.f32 %v289, 0.0
  %v325 = vmax.f32 %v292, 0.0
  %v326 = vmax.f32 %v297, 0.0
  %v327 = vmax.f32 %v300, 0.0
  %v328 = vmax.f32 %v305, 0.0
  %v329 = vmax.f32 %v308, 0.0
  %v330 = vmax.f32 %v313, 0.0
  %331 = vst [vmem:[%s3] sm:$0xff] %v318
  %332 = vst [vmem:[%s3 + $0x8] sm:$0xff] %v319
  %333 = vst [vmem:[%s3 + $0x10] sm:$0xff] %v320
  %334 = vst [vmem:[%s3 + $0x18] sm:$0xff] %v321
  %335 = vst [vmem:[%s3 + $0x20] sm:$0xff] %v322
  %336 = vst [vmem:[%s3 + $0x28] sm:$0xff] %v323
  %337 = vst [vmem:[%s3 + $0x30] sm:$0xff] %v324
  %338 = vst [vmem:[%s3 + $0x38] sm:$0xff] %v325
  %339 = vst [vmem:[%s3 + $0x40] sm:$0xff] %v326
  %340 = vst [vmem:[%s3 + $0x48] sm:$0xff] %v327
  %341 = vst [vmem:[%s3 + $0x50] sm:$0xff] %v328
  %342 = vst [vmem:[%s3 + $0x58] sm:$0xff] %v329
  %343 = vst [vmem:[%s3 + $0x60] sm:$0xff] %v330
  // Predicated region
  $region14: #{vargdarknet_forward.15} parent=0 // pred_check
    _
  $region15: #{vargdarknet_forward.15} parent=0 // pred_check_branch
    %345 = sbr.rel (0) target = $region17
  $region16: #{vargdarknet_forward.15} parent=0 // pred_region
    _
  $region17: #{vargdarknet_forward.15} parent=0 // pred_fallthru
    _
  // Predicated region
  $region18: #{vargdarknet_forward.15} parent=0 // pred_check
    _
  $region19: #{vargdarknet_forward.15} parent=0 // pred_check_branch
    %347 = sbr.rel (0) target = $region21
  $region20: #{vargdarknet_forward.15} parent=0 // pred_region
    _
  $region21: #{vargdarknet_forward.15} parent=0 // pred_fallthru
    _

// kernel: vargdarknet_forward.16
$region0: #{vargdarknet_forward.16}
  #allocation0 [shape = 'u32[]', space=smem, size = 0x4, offset = 0x4, fixed_abs, tag = 'smem constant byte address 0x4 - core index']
  #allocation1 [shape = 'u32[144,128]{1,0:T(1,128)}', space=vmem, size = 0x12000, scoped, tag = 'internal scratch']
  %s0 = inlined_call_operand.vmem [shape: bf16[104,128], index: 0, kind: input, shape index: {}]
  %s1 = inlined_call_operand.vmem [shape: bf16[128,128], index: 1, kind: input, shape index: {}]
  %s2 = inlined_call_operand.vmem [shape: f32[1,128], index: 2, kind: input, shape index: {}]
  %s3 = inlined_call_operand.vmem [shape: f32[104,128], index: 3, kind: output, shape index: {}]
  %s4 = sld [smem:[#allocation0]]
  $region22: #{vargdarknet_forward.16} parent=0
    _
  %s6 = ssub.s32 1, %s4
  %s7 = scalar_select 0, %s6, %s4
  // Predicated region
  $region2: #{vargdarknet_forward.16} parent=0 // pred_check
    _
  $region3: #{vargdarknet_forward.16} parent=0 // pred_check_branch
    %9 = sbr.rel (0) target = $region5
  $region4: #{vargdarknet_forward.16} parent=0 // pred_region
    _
  $region5: #{vargdarknet_forward.16} parent=0 // pred_fallthru
    _
  // Predicated region
  $region6: #{vargdarknet_forward.16} parent=0 // pred_check
    _
  $region7: #{vargdarknet_forward.16} parent=0 // pred_check_branch
    %11 = sbr.rel (0) target = $region9
  $region8: #{vargdarknet_forward.16} parent=0 // pred_region
    _
  $region9: #{vargdarknet_forward.16} parent=0 // pred_fallthru
    _
  // Predicated region
  $region10: #{vargdarknet_forward.16} parent=0 // pred_check
    _
  $region11: #{vargdarknet_forward.16} parent=0 // pred_check_branch
    %13 = sbr.rel (0) target = $region13
  $region12: #{vargdarknet_forward.16} parent=0 // pred_region
    _
  $region13: #{vargdarknet_forward.16} parent=0 // pred_fallthru
    _
  %v15 = vld [vmem:[%s0] sm:$0xf]
  %v16 = vld [vmem:[%s0 + $0x4] sm:$0xf]
  %v17 = vld [vmem:[%s0 + $0x8] sm:$0xf]
  %v18 = vld [vmem:[%s0 + $0xc] sm:$0xf]
  %v19 = vld [vmem:[%s0 + $0x10] sm:$0xf]
  %v20 = vld [vmem:[%s0 + $0x14] sm:$0xf]
  %v21 = vld [vmem:[%s0 + $0x18] sm:$0xf]
  %v22 = vld [vmem:[%s0 + $0x1c] sm:$0xf]
  %v23 = vld [vmem:[%s0 + $0x20] sm:$0xf]
  %v24 = vld [vmem:[%s0 + $0x24] sm:$0xf]
  %v25 = vld [vmem:[%s0 + $0x28] sm:$0xf]
  %v26 = vld [vmem:[%s0 + $0x2c] sm:$0xf]
  %v27 = vld [vmem:[%s0 + $0x30] sm:$0xf]
  %v28 = vld [vmem:[%s1] sm:$0xf]
  %v29 = vld [vmem:[%s1 + $0x4] sm:$0xf]
  %v30 = vld [vmem:[%s1 + $0x8] sm:$0xf]
  %v31 = vld [vmem:[%s1 + $0xc] sm:$0xf]
  %v32 = vld [vmem:[%s1 + $0x10] sm:$0xf]
  %v33 = vld [vmem:[%s1 + $0x14] sm:$0xf]
  %v34 = vld [vmem:[%s1 + $0x18] sm:$0xf]
  %v35 = vld [vmem:[%s1 + $0x1c] sm:$0xf]
  %v36 = vld [vmem:[%s1 + $0x20] sm:$0xf]
  %v37 = vld [vmem:[%s1 + $0x24] sm:$0xf]
  %v38 = vld [vmem:[%s1 + $0x28] sm:$0xf]
  %v39 = vld [vmem:[%s1 + $0x2c] sm:$0xf]
  %v40 = vld [vmem:[%s1 + $0x30] sm:$0xf]
  %v41 = vld [vmem:[%s1 + $0x34] sm:$0xf]
  %v42 = vld [vmem:[%s1 + $0x38] sm:$0xf]
  %v43 = vld [vmem:[%s1 + $0x3c] sm:$0xf]
  %v44 = vld [vmem:[%s2] sm:$0x1]
  %v46 = vlaneseq
  %v47 = vshrl.u32 %v46, 7
  %v48 = vsub.s32 0, %v47
  %v49 = vrot.slane %v44, %v48
  %v64 = vunpack.c.l.b16 %v15
  %v65 = vunpack.c.l.b16 %v16
  %v66 = vunpack.c.l.b16 %v17
  %v67 = vunpack.c.l.b16 %v18
  %v68 = vunpack.c.l.b16 %v19
  %v69 = vunpack.c.l.b16 %v20
  %v70 = vunpack.c.l.b16 %v21
  %v71 = vunpack.c.l.b16 %v22
  %v72 = vunpack.c.l.b16 %v23
  %v73 = vunpack.c.l.b16 %v24
  %v74 = vunpack.c.l.b16 %v25
  %v75 = vunpack.c.l.b16 %v26
  %v76 = vunpack.c.l.b16 %v27
  %v77 = vpack.c.b16 %v65, %v64
  %v78 = vpack.c.b16 %v67, %v66
  %v79 = vpack.c.b16 %v69, %v68
  %v80 = vpack.c.b16 %v71, %v70
  %v81 = vpack.c.b16 %v73, %v72
  %v82 = vpack.c.b16 %v75, %v74
  %v83 = vpack.c.b16 %v76, %v76
  %v107 = vunpack.c.l.b16 %v28
  %v108 = vunpack.c.l.b16 %v29
  %v109 = vunpack.c.l.b16 %v30
  %v110 = vunpack.c.l.b16 %v31
  %v111 = vunpack.c.l.b16 %v32
  %v112 = vunpack.c.l.b16 %v33
  %v113 = vunpack.c.l.b16 %v34
  %v114 = vunpack.c.l.b16 %v35
  %v115 = vunpack.c.l.b16 %v36
  %v116 = vunpack.c.l.b16 %v37
  %v117 = vunpack.c.l.b16 %v38
  %v118 = vunpack.c.l.b16 %v39
  %v119 = vunpack.c.l.b16 %v40
  %v120 = vunpack.c.l.b16 %v41
  %v121 = vunpack.c.l.b16 %v42
  %v122 = vunpack.c.l.b16 %v43
  %v123 = vpack.c.b16 %v108, %v107
  %v124 = vpack.c.b16 %v110, %v109
  %v125 = vpack.c.b16 %v112, %v111
  %v126 = vpack.c.b16 %v114, %v113
  %v127 = vpack.c.b16 %v116, %v115
  %v128 = vpack.c.b16 %v118, %v117
  %v129 = vpack.c.b16 %v120, %v119
  %v130 = vpack.c.b16 %v122, %v121
  %139 = vmatprep.subr.bf16.mxu0 0
  %140 = vmatpush1.bf16.msra.mxu0 %v123
  %141 = vmatprep.subr.bf16.mxu0 0
  %142 = vmatpush1.bf16.msra.mxu0 %v124
  %143 = vmatprep.subr.bf16.mxu0 0
  %144 = vmatpush1.bf16.msra.mxu0 %v125
  %145 = vmatprep.subr.bf16.mxu0 0
  %146 = vmatpush1.bf16.msra.mxu0 %v126
  %147 = vmatprep.subr.bf16.mxu0 0
  %148 = vmatpush1.bf16.msra.mxu0 %v127
  %149 = vmatprep.subr.bf16.mxu0 0
  %150 = vmatpush1.bf16.msra.mxu0 %v128
  %151 = vmatprep.subr.bf16.mxu0 0
  %152 = vmatpush1.bf16.msra.mxu0 %v129
  %153 = vmatprep.subr.bf16.mxu0 0
  %154 = vmatpush1.bf16.msra.mxu0 %v130
  %155 = vmatprep.subr.bf16.mxu0 0
  %156 = vmatpush1.bf16.msra.mxu0 0
  %157 = vmatprep.subr.bf16.mxu0 0
  %158 = vmatpush1.bf16.msra.mxu0 0
  %159 = vmatprep.subr.bf16.mxu0 0
  %160 = vmatpush1.bf16.msra.mxu0 0
  %161 = vmatprep.subr.bf16.mxu0 0
  %162 = vmatpush1.bf16.msra.mxu0 0
  %163 = vmatprep.subr.bf16.mxu0 0
  %164 = vmatpush1.bf16.msra.mxu0 0
  %165 = vmatprep.subr.bf16.mxu0 0
  %166 = vmatpush1.bf16.msra.mxu0 0
  %167 = vmatprep.subr.bf16.mxu0 0
  %168 = vmatpush1.bf16.msra.mxu0 0
  %169 = vmatprep.subr.bf16.mxu0 0
  %170 = vmatpush1.bf16.msra.mxu0 0
  %171 = vmatprep.mubr.bf16.mxu0 0
  %172 = vmatmul.mubr.bf16.gmra.mrb[0].mxu0 %v77
  %v173 = vpop.f32.mrb[0].mxu0
  %v174 = vadd.f32 %v49, %v173
  %v175 = vpop.f32.mrb[0].mxu0
  %v176 = vpop.f32.mrb[0].mxu0
  %v177 = vadd.f32 %v49, %v176
  %v178 = vpop.f32.mrb[0].mxu0
  %179 = vmatprep.mubr.bf16.mxu0 0
  %180 = vmatmul.mubr.bf16.gmra.mrb[0].mxu0 %v78
  %v181 = vpop.f32.mrb[0].mxu0
  %v182 = vadd.f32 %v49, %v181
  %v183 = vpop.f32.mrb[0].mxu0
  %v184 = vpop.f32.mrb[0].mxu0
  %v185 = vadd.f32 %v49, %v184
  %v186 = vpop.f32.mrb[0].mxu0
  %187 = vmatprep.mubr.bf16.mxu0 0
  %188 = vmatmul.mubr.bf16.gmra.mrb[0].mxu0 %v79
  %v189 = vpop.f32.mrb[0].mxu0
  %v190 = vadd.f32 %v49, %v189
  %v191 = vpop.f32.mrb[0].mxu0
  %v192 = vpop.f32.mrb[0].mxu0
  %v193 = vadd.f32 %v49, %v192
  %v194 = vpop.f32.mrb[0].mxu0
  %195 = vmatprep.mubr.bf16.mxu0 0
  %196 = vmatmul.mubr.bf16.gmra.mrb[0].mxu0 %v80
  %v197 = vpop.f32.mrb[0].mxu0
  %v198 = vadd.f32 %v49, %v197
  %v199 = vpop.f32.mrb[0].mxu0
  %v200 = vpop.f32.mrb[0].mxu0
  %v201 = vadd.f32 %v49, %v200
  %v202 = vpop.f32.mrb[0].mxu0
  %203 = vmatprep.mubr.bf16.mxu0 0
  %204 = vmatmul.mubr.bf16.gmra.mrb[0].mxu0 %v81
  %v205 = vpop.f32.mrb[0].mxu0
  %v206 = vadd.f32 %v49, %v205
  %v207 = vpop.f32.mrb[0].mxu0
  %v208 = vpop.f32.mrb[0].mxu0
  %v209 = vadd.f32 %v49, %v208
  %v210 = vpop.f32.mrb[0].mxu0
  %211 = vmatprep.mubr.bf16.mxu0 0
  %212 = vmatmul.mubr.bf16.gmra.mrb[0].mxu0 %v82
  %v213 = vpop.f32.mrb[0].mxu0
  %v214 = vadd.f32 %v49, %v213
  %v215 = vpop.f32.mrb[0].mxu0
  %v216 = vpop.f32.mrb[0].mxu0
  %v217 = vadd.f32 %v49, %v216
  %v218 = vpop.f32.mrb[0].mxu0
  %219 = vmatprep.mubr.bf16.mxu0 0
  %220 = vmatmul.mubr.bf16.gmra.mrb[0].mxu0 %v83
  %v221 = vpop.f32.mrb[0].mxu0
  %v222 = vadd.f32 %v49, %v221
  %v223 = vpop.f32.mrb[0].mxu0
  %v224 = vpop.f32.mrb[0].mxu0
  %v225 = vpop.f32.mrb[0].mxu0
  %226 = vdwg.mxu0
  %v227 = vmax.f32 %v174, 0.0
  %v228 = vmax.f32 %v177, 0.0
  %v229 = vmax.f32 %v182, 0.0
  %v230 = vmax.f32 %v185, 0.0
  %v231 = vmax.f32 %v190, 0.0
  %v232 = vmax.f32 %v193, 0.0
  %v233 = vmax.f32 %v198, 0.0
  %v234 = vmax.f32 %v201, 0.0
  %v235 = vmax.f32 %v206, 0.0
  %v236 = vmax.f32 %v209, 0.0
  %v237 = vmax.f32 %v214, 0.0
  %v238 = vmax.f32 %v217, 0.0
  %v239 = vmax.f32 %v222, 0.0
  %240 = vst [vmem:[%s3] sm:$0xff] %v227
  %241 = vst [vmem:[%s3 + $0x8] sm:$0xff] %v228
  %242 = vst [vmem:[%s3 + $0x10] sm:$0xff] %v229
  %243 = vst [vmem:[%s3 + $0x18] sm:$0xff] %v230
  %244 = vst [vmem:[%s3 + $0x20] sm:$0xff] %v231
  %245 = vst [vmem:[%s3 + $0x28] sm:$0xff] %v232
  %246 = vst [vmem:[%s3 + $0x30] sm:$0xff] %v233
  %247 = vst [vmem:[%s3 + $0x38] sm:$0xff] %v234
  %248 = vst [vmem:[%s3 + $0x40] sm:$0xff] %v235
  %249 = vst [vmem:[%s3 + $0x48] sm:$0xff] %v236
  %250 = vst [vmem:[%s3 + $0x50] sm:$0xff] %v237
  %251 = vst [vmem:[%s3 + $0x58] sm:$0xff] %v238
  %252 = vst [vmem:[%s3 + $0x60] sm:$0xff] %v239
  // Predicated region
  $region14: #{vargdarknet_forward.16} parent=0 // pred_check
    _
  $region15: #{vargdarknet_forward.16} parent=0 // pred_check_branch
    %254 = sbr.rel (0) target = $region17
  $region16: #{vargdarknet_forward.16} parent=0 // pred_region
    _
  $region17: #{vargdarknet_forward.16} parent=0 // pred_fallthru
    _
  // Predicated region
  $region18: #{vargdarknet_forward.16} parent=0 // pred_check
    _
  $region19: #{vargdarknet_forward.16} parent=0 // pred_check_branch
    %256 = sbr.rel (0) target = $region21
  $region20: #{vargdarknet_forward.16} parent=0 // pred_region
    _
  $region21: #{vargdarknet_forward.16} parent=0 // pred_fallthru
    _

// kernel: vargdarknet_forward.18
$region0: #{vargdarknet_forward.18}
  #allocation0 [shape = 'u32[]', space=smem, size = 0x4, offset = 0x4, fixed_abs, tag = 'smem constant byte address 0x4 - core index']
  #allocation1 [shape = 'u32[144,128]{1,0:T(1,128)}', space=vmem, size = 0x12000, scoped, tag = 'internal scratch']
  %s0 = inlined_call_operand.vmem [shape: bf16[104,128], index: 0, kind: input, shape index: {}]
  %s1 = inlined_call_operand.vmem [shape: bf16[128,128], index: 1, kind: input, shape index: {}]
  %s2 = inlined_call_operand.vmem [shape: f32[1,128], index: 2, kind: input, shape index: {}]
  %s3 = inlined_call_operand.vmem [shape: f32[104,128], index: 3, kind: input, shape index: {}]
  %s4 = inlined_call_operand.vmem [shape: f32[104,128], index: 4, kind: output, shape index: {}]
  %s5 = sld [smem:[#allocation0]]
  $region26: #{vargdarknet_forward.18} parent=0
    _
  %s7 = ssub.s32 1, %s5
  %s8 = scalar_select 0, %s7, %s5
  // Predicated region
  $region2: #{vargdarknet_forward.18} parent=0 // pred_check
    _
  $region3: #{vargdarknet_forward.18} parent=0 // pred_check_branch
    %10 = sbr.rel (0) target = $region5
  $region4: #{vargdarknet_forward.18} parent=0 // pred_region
    _
  $region5: #{vargdarknet_forward.18} parent=0 // pred_fallthru
    _
  // Predicated region
  $region6: #{vargdarknet_forward.18} parent=0 // pred_check
    _
  $region7: #{vargdarknet_forward.18} parent=0 // pred_check_branch
    %12 = sbr.rel (0) target = $region9
  $region8: #{vargdarknet_forward.18} parent=0 // pred_region
    _
  $region9: #{vargdarknet_forward.18} parent=0 // pred_fallthru
    _
  // Predicated region
  $region10: #{vargdarknet_forward.18} parent=0 // pred_check
    _
  $region11: #{vargdarknet_forward.18} parent=0 // pred_check_branch
    %14 = sbr.rel (0) target = $region13
  $region12: #{vargdarknet_forward.18} parent=0 // pred_region
    _
  $region13: #{vargdarknet_forward.18} parent=0 // pred_fallthru
    _
  // Predicated region
  $region14: #{vargdarknet_forward.18} parent=0 // pred_check
    _
  $region15: #{vargdarknet_forward.18} parent=0 // pred_check_branch
    %16 = sbr.rel (0) target = $region17
  $region16: #{vargdarknet_forward.18} parent=0 // pred_region
    _
  $region17: #{vargdarknet_forward.18} parent=0 // pred_fallthru
    _
  %v18 = vld [vmem:[%s0] sm:$0xf]
  %v19 = vld [vmem:[%s0 + $0x4] sm:$0xf]
  %v20 = vld [vmem:[%s0 + $0x8] sm:$0xf]
  %v21 = vld [vmem:[%s0 + $0xc] sm:$0xf]
  %v22 = vld [vmem:[%s0 + $0x10] sm:$0xf]
  %v23 = vld [vmem:[%s0 + $0x14] sm:$0xf]
  %v24 = vld [vmem:[%s0 + $0x18] sm:$0xf]
  %v25 = vld [vmem:[%s0 + $0x1c] sm:$0xf]
  %v26 = vld [vmem:[%s0 + $0x20] sm:$0xf]
  %v27 = vld [vmem:[%s0 + $0x24] sm:$0xf]
  %v28 = vld [vmem:[%s0 + $0x28] sm:$0xf]
  %v29 = vld [vmem:[%s0 + $0x2c] sm:$0xf]
  %v30 = vld [vmem:[%s0 + $0x30] sm:$0xf]
  %v31 = vld [vmem:[%s1] sm:$0xf]
  %v32 = vld [vmem:[%s1 + $0x4] sm:$0xf]
  %v33 = vld [vmem:[%s1 + $0x8] sm:$0xf]
  %v34 = vld [vmem:[%s1 + $0xc] sm:$0xf]
  %v35 = vld [vmem:[%s1 + $0x10] sm:$0xf]
  %v36 = vld [vmem:[%s1 + $0x14] sm:$0xf]
  %v37 = vld [vmem:[%s1 + $0x18] sm:$0xf]
  %v38 = vld [vmem:[%s1 + $0x1c] sm:$0xf]
  %v39 = vld [vmem:[%s1 + $0x20] sm:$0xf]
  %v40 = vld [vmem:[%s1 + $0x24] sm:$0xf]
  %v41 = vld [vmem:[%s1 + $0x28] sm:$0xf]
  %v42 = vld [vmem:[%s1 + $0x2c] sm:$0xf]
  %v43 = vld [vmem:[%s1 + $0x30] sm:$0xf]
  %v44 = vld [vmem:[%s1 + $0x34] sm:$0xf]
  %v45 = vld [vmem:[%s1 + $0x38] sm:$0xf]
  %v46 = vld [vmem:[%s1 + $0x3c] sm:$0xf]
  %v47 = vld [vmem:[%s2] sm:$0x1]
  %v49 = vlaneseq
  %v50 = vshrl.u32 %v49, 7
  %v51 = vsub.s32 0, %v50
  %v52 = vrot.slane %v47, %v51
  %v67 = vunpack.c.l.b16 %v18
  %v68 = vunpack.c.l.b16 %v19
  %v69 = vunpack.c.l.b16 %v20
  %v70 = vunpack.c.l.b16 %v21
  %v71 = vunpack.c.l.b16 %v22
  %v72 = vunpack.c.l.b16 %v23
  %v73 = vunpack.c.l.b16 %v24
  %v74 = vunpack.c.l.b16 %v25
  %v75 = vunpack.c.l.b16 %v26
  %v76 = vunpack.c.l.b16 %v27
  %v77 = vunpack.c.l.b16 %v28
  %v78 = vunpack.c.l.b16 %v29
  %v79 = vunpack.c.l.b16 %v30
  %v80 = vpack.c.b16 %v68, %v67
  %v81 = vpack.c.b16 %v70, %v69
  %v82 = vpack.c.b16 %v72, %v71
  %v83 = vpack.c.b16 %v74, %v73
  %v84 = vpack.c.b16 %v76, %v75
  %v85 = vpack.c.b16 %v78, %v77
  %v86 = vpack.c.b16 %v79, %v79
  %v110 = vunpack.c.l.b16 %v31
  %v111 = vunpack.c.l.b16 %v32
  %v112 = vunpack.c.l.b16 %v33
  %v113 = vunpack.c.l.b16 %v34
  %v114 = vunpack.c.l.b16 %v35
  %v115 = vunpack.c.l.b16 %v36
  %v116 = vunpack.c.l.b16 %v37
  %v117 = vunpack.c.l.b16 %v38
  %v118 = vunpack.c.l.b16 %v39
  %v119 = vunpack.c.l.b16 %v40
  %v120 = vunpack.c.l.b16 %v41
  %v121 = vunpack.c.l.b16 %v42
  %v122 = vunpack.c.l.b16 %v43
  %v123 = vunpack.c.l.b16 %v44
  %v124 = vunpack.c.l.b16 %v45
  %v125 = vunpack.c.l.b16 %v46
  %v126 = vpack.c.b16 %v111, %v110
  %v127 = vpack.c.b16 %v113, %v112
  %v128 = vpack.c.b16 %v115, %v114
  %v129 = vpack.c.b16 %v117, %v116
  %v130 = vpack.c.b16 %v119, %v118
  %v131 = vpack.c.b16 %v121, %v120
  %v132 = vpack.c.b16 %v123, %v122
  %v133 = vpack.c.b16 %v125, %v124
  %142 = vmatprep.subr.bf16.mxu0 0
  %143 = vmatpush1.bf16.msra.mxu0 %v126
  %144 = vmatprep.subr.bf16.mxu0 0
  %145 = vmatpush1.bf16.msra.mxu0 %v127
  %146 = vmatprep.subr.bf16.mxu0 0
  %147 = vmatpush1.bf16.msra.mxu0 %v128
  %148 = vmatprep.subr.bf16.mxu0 0
  %149 = vmatpush1.bf16.msra.mxu0 %v129
  %150 = vmatprep.subr.bf16.mxu0 0
  %151 = vmatpush1.bf16.msra.mxu0 %v130
  %152 = vmatprep.subr.bf16.mxu0 0
  %153 = vmatpush1.bf16.msra.mxu0 %v131
  %154 = vmatprep.subr.bf16.mxu0 0
  %155 = vmatpush1.bf16.msra.mxu0 %v132
  %156 = vmatprep.subr.bf16.mxu0 0
  %157 = vmatpush1.bf16.msra.mxu0 %v133
  %158 = vmatprep.subr.bf16.mxu0 0
  %159 = vmatpush1.bf16.msra.mxu0 0
  %160 = vmatprep.subr.bf16.mxu0 0
  %161 = vmatpush1.bf16.msra.mxu0 0
  %162 = vmatprep.subr.bf16.mxu0 0
  %163 = vmatpush1.bf16.msra.mxu0 0
  %164 = vmatprep.subr.bf16.mxu0 0
  %165 = vmatpush1.bf16.msra.mxu0 0
  %166 = vmatprep.subr.bf16.mxu0 0
  %167 = vmatpush1.bf16.msra.mxu0 0
  %168 = vmatprep.subr.bf16.mxu0 0
  %169 = vmatpush1.bf16.msra.mxu0 0
  %170 = vmatprep.subr.bf16.mxu0 0
  %171 = vmatpush1.bf16.msra.mxu0 0
  %172 = vmatprep.subr.bf16.mxu0 0
  %173 = vmatpush1.bf16.msra.mxu0 0
  %174 = vmatprep.mubr.bf16.mxu0 0
  %175 = vmatmul.mubr.bf16.gmra.mrb[0].mxu0 %v80
  %v176 = vpop.f32.mrb[0].mxu0
  %v177 = vadd.f32 %v52, %v176
  %v178 = vpop.f32.mrb[0].mxu0
  %v179 = vpop.f32.mrb[0].mxu0
  %v180 = vadd.f32 %v52, %v179
  %v181 = vpop.f32.mrb[0].mxu0
  %182 = vmatprep.mubr.bf16.mxu0 0
  %183 = vmatmul.mubr.bf16.gmra.mrb[0].mxu0 %v81
  %v184 = vpop.f32.mrb[0].mxu0
  %v185 = vadd.f32 %v52, %v184
  %v186 = vpop.f32.mrb[0].mxu0
  %v187 = vpop.f32.mrb[0].mxu0
  %v188 = vadd.f32 %v52, %v187
  %v189 = vpop.f32.mrb[0].mxu0
  %190 = vmatprep.mubr.bf16.mxu0 0
  %191 = vmatmul.mubr.bf16.gmra.mrb[0].mxu0 %v82
  %v192 = vpop.f32.mrb[0].mxu0
  %v193 = vadd.f32 %v52, %v192
  %v194 = vpop.f32.mrb[0].mxu0
  %v195 = vpop.f32.mrb[0].mxu0
  %v196 = vadd.f32 %v52, %v195
  %v197 = vpop.f32.mrb[0].mxu0
  %198 = vmatprep.mubr.bf16.mxu0 0
  %199 = vmatmul.mubr.bf16.gmra.mrb[0].mxu0 %v83
  %v200 = vpop.f32.mrb[0].mxu0
  %v201 = vadd.f32 %v52, %v200
  %v202 = vpop.f32.mrb[0].mxu0
  %v203 = vpop.f32.mrb[0].mxu0
  %v204 = vadd.f32 %v52, %v203
  %v205 = vpop.f32.mrb[0].mxu0
  %206 = vmatprep.mubr.bf16.mxu0 0
  %207 = vmatmul.mubr.bf16.gmra.mrb[0].mxu0 %v84
  %v208 = vpop.f32.mrb[0].mxu0
  %v209 = vadd.f32 %v52, %v208
  %v210 = vpop.f32.mrb[0].mxu0
  %v211 = vpop.f32.mrb[0].mxu0
  %v212 = vadd.f32 %v52, %v211
  %v213 = vpop.f32.mrb[0].mxu0
  %214 = vmatprep.mubr.bf16.mxu0 0
  %215 = vmatmul.mubr.bf16.gmra.mrb[0].mxu0 %v85
  %v216 = vpop.f32.mrb[0].mxu0
  %v217 = vadd.f32 %v52, %v216
  %v218 = vpop.f32.mrb[0].mxu0
  %v219 = vpop.f32.mrb[0].mxu0
  %v220 = vadd.f32 %v52, %v219
  %v221 = vpop.f32.mrb[0].mxu0
  %222 = vmatprep.mubr.bf16.mxu0 0
  %223 = vmatmul.mubr.bf16.gmra.mrb[0].mxu0 %v86
  %v224 = vpop.f32.mrb[0].mxu0
  %v225 = vadd.f32 %v52, %v224
  %v226 = vpop.f32.mrb[0].mxu0
  %v227 = vpop.f32.mrb[0].mxu0
  %v228 = vpop.f32.mrb[0].mxu0
  %229 = vdwg.mxu0
  %v230 = vld [vmem:[%s3] sm:$0xff]
  %v231 = vld [vmem:[%s3 + $0x8] sm:$0xff]
  %v232 = vld [vmem:[%s3 + $0x10] sm:$0xff]
  %v233 = vld [vmem:[%s3 + $0x18] sm:$0xff]
  %v234 = vld [vmem:[%s3 + $0x20] sm:$0xff]
  %v235 = vld [vmem:[%s3 + $0x28] sm:$0xff]
  %v236 = vld [vmem:[%s3 + $0x30] sm:$0xff]
  %v237 = vld [vmem:[%s3 + $0x38] sm:$0xff]
  %v238 = vld [vmem:[%s3 + $0x40] sm:$0xff]
  %v239 = vld [vmem:[%s3 + $0x48] sm:$0xff]
  %v240 = vld [vmem:[%s3 + $0x50] sm:$0xff]
  %v241 = vld [vmem:[%s3 + $0x58] sm:$0xff]
  %v242 = vld [vmem:[%s3 + $0x60] sm:$0xff]
  %v243 = vadd.f32 %v177, %v230
  %v244 = vadd.f32 %v180, %v231
  %v245 = vadd.f32 %v185, %v232
  %v246 = vadd.f32 %v188, %v233
  %v247 = vadd.f32 %v193, %v234
  %v248 = vadd.f32 %v196, %v235
  %v249 = vadd.f32 %v201, %v236
  %v250 = vadd.f32 %v204, %v237
  %v251 = vadd.f32 %v209, %v238
  %v252 = vadd.f32 %v212, %v239
  %v253 = vadd.f32 %v217, %v240
  %v254 = vadd.f32 %v220, %v241
  %v255 = vadd.f32 %v225, %v242
  %v256 = vmax.f32 %v243, 0.0
  %v257 = vmax.f32 %v244, 0.0
  %v258 = vmax.f32 %v245, 0.0
  %v259 = vmax.f32 %v246, 0.0
  %v260 = vmax.f32 %v247, 0.0
  %v261 = vmax.f32 %v248, 0.0
  %v262 = vmax.f32 %v249, 0.0
  %v263 = vmax.f32 %v250, 0.0
  %v264 = vmax.f32 %v251, 0.0
  %v265 = vmax.f32 %v252, 0.0
  %v266 = vmax.f32 %v253, 0.0
  %v267 = vmax.f32 %v254, 0.0
  %v268 = vmax.f32 %v255, 0.0
  %269 = vst [vmem:[%s4] sm:$0xff] %v256
  %270 = vst [vmem:[%s4 + $0x8] sm:$0xff] %v257
  %271 = vst [vmem:[%s4 + $0x10] sm:$0xff] %v258
  %272 = vst [vmem:[%s4 + $0x18] sm:$0xff] %v259
  %273 = vst [vmem:[%s4 + $0x20] sm:$0xff] %v260
  %274 = vst [vmem:[%s4 + $0x28] sm:$0xff] %v261
  %275 = vst [vmem:[%s4 + $0x30] sm:$0xff] %v262
  %276 = vst [vmem:[%s4 + $0x38] sm:$0xff] %v263
  %277 = vst [vmem:[%s4 + $0x40] sm:$0xff] %v264
  %278 = vst [vmem:[%s4 + $0x48] sm:$0xff] %v265
  %279 = vst [vmem:[%s4 + $0x50] sm:$0xff] %v266
  %280 = vst [vmem:[%s4 + $0x58] sm:$0xff] %v267
  %281 = vst [vmem:[%s4 + $0x60] sm:$0xff] %v268
  // Predicated region
  $region18: #{vargdarknet_forward.18} parent=0 // pred_check
    _
  $region19: #{vargdarknet_forward.18} parent=0 // pred_check_branch
    %283 = sbr.rel (0) target = $region21
  $region20: #{vargdarknet_forward.18} parent=0 // pred_region
    _
  $region21: #{vargdarknet_forward.18} parent=0 // pred_fallthru
    _
  // Predicated region
  $region22: #{vargdarknet_forward.18} parent=0 // pred_check
    _
  $region23: #{vargdarknet_forward.18} parent=0 // pred_check_branch
    %285 = sbr.rel (0) target = $region25
  $region24: #{vargdarknet_forward.18} parent=0 // pred_region
    _
  $region25: #{vargdarknet_forward.18} parent=0 // pred_fallthru
    _

// kernel: vargdarknet_forward.19
$region0: #{vargdarknet_forward.19}
  #allocation0 [shape = 'u32[]', space=smem, size = 0x4, offset = 0x4, fixed_abs, tag = 'smem constant byte address 0x4 - core index']
  #allocation1 [shape = 'u32[144,128]{1,0:T(1,128)}', space=vmem, size = 0x12000, scoped, tag = 'internal scratch']
  %s0 = inlined_call_operand.vmem [shape: bf16[8,1664], index: 0, kind: input, shape index: {}]
  %s1 = inlined_call_operand.vmem [shape: bf16[1664,128], index: 1, kind: input, shape index: {}]
  %s2 = inlined_call_operand.vmem [shape: f32[1,128], index: 2, kind: input, shape index: {}]
  %s3 = inlined_call_operand.vmem [shape: f32[8,128], index: 3, kind: output, shape index: {}]
  %s4 = sld [smem:[#allocation0]]
  $region22: #{vargdarknet_forward.19} parent=0
    _
  %s6 = ssub.s32 1, %s4
  %s7 = scalar_select 0, %s6, %s4
  // Predicated region
  $region2: #{vargdarknet_forward.19} parent=0 // pred_check
    _
  $region3: #{vargdarknet_forward.19} parent=0 // pred_check_branch
    %9 = sbr.rel (0) target = $region5
  $region4: #{vargdarknet_forward.19} parent=0 // pred_region
    _
  $region5: #{vargdarknet_forward.19} parent=0 // pred_fallthru
    _
  // Predicated region
  $region6: #{vargdarknet_forward.19} parent=0 // pred_check
    _
  $region7: #{vargdarknet_forward.19} parent=0 // pred_check_branch
    %11 = sbr.rel (0) target = $region9
  $region8: #{vargdarknet_forward.19} parent=0 // pred_region
    _
  $region9: #{vargdarknet_forward.19} parent=0 // pred_fallthru
    _
  // Predicated region
  $region10: #{vargdarknet_forward.19} parent=0 // pred_check
    _
  $region11: #{vargdarknet_forward.19} parent=0 // pred_check_branch
    %13 = sbr.rel (0) target = $region13
  $region12: #{vargdarknet_forward.19} parent=0 // pred_region
    _
  $region13: #{vargdarknet_forward.19} parent=0 // pred_fallthru
    _
  %v15 = vld [vmem:[%s0] sm:$0xff]
  %v16 = vld [vmem:[%s0 + $0x8] sm:$0xff]
  %v17 = vld [vmem:[%s0 + $0x10] sm:$0xff]
  %v18 = vld [vmem:[%s0 + $0x18] sm:$0xff]
  %v19 = vld [vmem:[%s0 + $0x20] sm:$0xff]
  %v20 = vld [vmem:[%s0 + $0x28] sm:$0xff]
  %v21 = vld [vmem:[%s0 + $0x30] sm:$0xf]
  %v22 = vld [vmem:[%s1] sm:$0xf]
  %v23 = vld [vmem:[%s1 + $0x4] sm:$0xf]
  %v24 = vld [vmem:[%s1 + $0x8] sm:$0xf]
  %v25 = vld [vmem:[%s1 + $0xc] sm:$0xf]
  %v26 = vld [vmem:[%s1 + $0x10] sm:$0xf]
  %v27 = vld [vmem:[%s1 + $0x14] sm:$0xf]
  %v28 = vld [vmem:[%s1 + $0x18] sm:$0xf]
  %v29 = vld [vmem:[%s1 + $0x1c] sm:$0xf]
  %v30 = vld [vmem:[%s1 + $0x20] sm:$0xf]
  %v31 = vld [vmem:[%s1 + $0x24] sm:$0xf]
  %v32 = vld [vmem:[%s1 + $0x28] sm:$0xf]
  %v33 = vld [vmem:[%s1 + $0x2c] sm:$0xf]
  %v34 = vld [vmem:[%s1 + $0x30] sm:$0xf]
  %v35 = vld [vmem:[%s1 + $0x34] sm:$0xf]
  %v36 = vld [vmem:[%s1 + $0x38] sm:$0xf]
  %v37 = vld [vmem:[%s1 + $0x3c] sm:$0xf]
  %v38 = vld [vmem:[%s1 + $0x40] sm:$0xf]
  %v39 = vld [vmem:[%s1 + $0x44] sm:$0xf]
  %v40 = vld [vmem:[%s1 + $0x48] sm:$0xf]
  %v41 = vld [vmem:[%s1 + $0x4c] sm:$0xf]
  %v42 = vld [vmem:[%s1 + $0x50] sm:$0xf]
  %v43 = vld [vmem:[%s1 + $0x54] sm:$0xf]
  %v44 = vld [vmem:[%s1 + $0x58] sm:$0xf]
  %v45 = vld [vmem:[%s1 + $0x5c] sm:$0xf]
  %v46 = vld [vmem:[%s1 + $0x60] sm:$0xf]
  %v47 = vld [vmem:[%s1 + $0x64] sm:$0xf]
  %v48 = vld [vmem:[%s1 + $0x68] sm:$0xf]
  %v49 = vld [vmem:[%s1 + $0x6c] sm:$0xf]
  %v50 = vld [vmem:[%s1 + $0x70] sm:$0xf]
  %v51 = vld [vmem:[%s1 + $0x74] sm:$0xf]
  %v52 = vld [vmem:[%s1 + $0x78] sm:$0xf]
  %v53 = vld [vmem:[%s1 + $0x7c] sm:$0xf]
  %v54 = vld [vmem:[%s1 + $0x80] sm:$0xf]
  %v55 = vld [vmem:[%s1 + $0x84] sm:$0xf]
  %v56 = vld [vmem:[%s1 + $0x88] sm:$0xf]
  %v57 = vld [vmem:[%s1 + $0x8c] sm:$0xf]
  %v58 = vld [vmem:[%s1 + $0x90] sm:$0xf]
  %v59 = vld [vmem:[%s1 + $0x94] sm:$0xf]
  %v60 = vld [vmem:[%s1 + $0x98] sm:$0xf]
  %v61 = vld [vmem:[%s1 + $0x9c] sm:$0xf]
  %v62 = vld [vmem:[%s1 + $0xa0] sm:$0xf]
  %v63 = vld [vmem:[%s1 + $0xa4] sm:$0xf]
  %v64 = vld [vmem:[%s1 + $0xa8] sm:$0xf]
  %v65 = vld [vmem:[%s1 + $0xac] sm:$0xf]
  %v66 = vld [vmem:[%s1 + $0xb0] sm:$0xf]
  %v67 = vld [vmem:[%s1 + $0xb4] sm:$0xf]
  %v68 = vld [vmem:[%s1 + $0xb8] sm:$0xf]
  %v69 = vld [vmem:[%s1 + $0xbc] sm:$0xf]
  %v70 = vld [vmem:[%s1 + $0xc0] sm:$0xf]
  %v71 = vld [vmem:[%s1 + $0xc4] sm:$0xf]
  %v72 = vld [vmem:[%s1 + $0xc8] sm:$0xf]
  %v73 = vld [vmem:[%s1 + $0xcc] sm:$0xf]
  %v74 = vld [vmem:[%s1 + $0xd0] sm:$0xf]
  %v75 = vld [vmem:[%s1 + $0xd4] sm:$0xf]
  %v76 = vld [vmem:[%s1 + $0xd8] sm:$0xf]
  %v77 = vld [vmem:[%s1 + $0xdc] sm:$0xf]
  %v78 = vld [vmem:[%s1 + $0xe0] sm:$0xf]
  %v79 = vld [vmem:[%s1 + $0xe4] sm:$0xf]
  %v80 = vld [vmem:[%s1 + $0xe8] sm:$0xf]
  %v81 = vld [vmem:[%s1 + $0xec] sm:$0xf]
  %v82 = vld [vmem:[%s1 + $0xf0] sm:$0xf]
  %v83 = vld [vmem:[%s1 + $0xf4] sm:$0xf]
  %v84 = vld [vmem:[%s1 + $0xf8] sm:$0xf]
  %v85 = vld [vmem:[%s1 + $0xfc] sm:$0xf]
  %v86 = vld [vmem:[%s1 + $0x100] sm:$0xf]
  %v87 = vld [vmem:[%s1 + $0x104] sm:$0xf]
  %v88 = vld [vmem:[%s1 + $0x108] sm:$0xf]
  %v89 = vld [vmem:[%s1 + $0x10c] sm:$0xf]
  %v90 = vld [vmem:[%s1 + $0x110] sm:$0xf]
  %v91 = vld [vmem:[%s1 + $0x114] sm:$0xf]
  %v92 = vld [vmem:[%s1 + $0x118] sm:$0xf]
  %v93 = vld [vmem:[%s1 + $0x11c] sm:$0xf]
  %v94 = vld [vmem:[%s1 + $0x120] sm:$0xf]
  %v95 = vld [vmem:[%s1 + $0x124] sm:$0xf]
  %v96 = vld [vmem:[%s1 + $0x128] sm:$0xf]
  %v97 = vld [vmem:[%s1 + $0x12c] sm:$0xf]
  %v98 = vld [vmem:[%s1 + $0x130] sm:$0xf]
  %v99 = vld [vmem:[%s1 + $0x134] sm:$0xf]
  %v100 = vld [vmem:[%s1 + $0x138] sm:$0xf]
  %v101 = vld [vmem:[%s1 + $0x13c] sm:$0xf]
  %v102 = vld [vmem:[%s1 + $0x140] sm:$0xf]
  %v103 = vld [vmem:[%s1 + $0x144] sm:$0xf]
  %v104 = vld [vmem:[%s1 + $0x148] sm:$0xf]
  %v105 = vld [vmem:[%s1 + $0x14c] sm:$0xf]
  %v106 = vld [vmem:[%s1 + $0x150] sm:$0xf]
  %v107 = vld [vmem:[%s1 + $0x154] sm:$0xf]
  %v108 = vld [vmem:[%s1 + $0x158] sm:$0xf]
  %v109 = vld [vmem:[%s1 + $0x15c] sm:$0xf]
  %v110 = vld [vmem:[%s1 + $0x160] sm:$0xf]
  %v111 = vld [vmem:[%s1 + $0x164] sm:$0xf]
  %v112 = vld [vmem:[%s1 + $0x168] sm:$0xf]
  %v113 = vld [vmem:[%s1 + $0x16c] sm:$0xf]
  %v114 = vld [vmem:[%s1 + $0x170] sm:$0xf]
  %v115 = vld [vmem:[%s1 + $0x174] sm:$0xf]
  %v116 = vld [vmem:[%s1 + $0x178] sm:$0xf]
  %v117 = vld [vmem:[%s1 + $0x17c] sm:$0xf]
  %v118 = vld [vmem:[%s1 + $0x180] sm:$0xf]
  %v119 = vld [vmem:[%s1 + $0x184] sm:$0xf]
  %v120 = vld [vmem:[%s1 + $0x188] sm:$0xf]
  %v121 = vld [vmem:[%s1 + $0x18c] sm:$0xf]
  %v122 = vld [vmem:[%s1 + $0x190] sm:$0xf]
  %v123 = vld [vmem:[%s1 + $0x194] sm:$0xf]
  %v124 = vld [vmem:[%s1 + $0x198] sm:$0xf]
  %v125 = vld [vmem:[%s1 + $0x19c] sm:$0xf]
  %v126 = vld [vmem:[%s1 + $0x1a0] sm:$0xf]
  %v127 = vld [vmem:[%s1 + $0x1a4] sm:$0xf]
  %v128 = vld [vmem:[%s1 + $0x1a8] sm:$0xf]
  %v129 = vld [vmem:[%s1 + $0x1ac] sm:$0xf]
  %v130 = vld [vmem:[%s1 + $0x1b0] sm:$0xf]
  %v131 = vld [vmem:[%s1 + $0x1b4] sm:$0xf]
  %v132 = vld [vmem:[%s1 + $0x1b8] sm:$0xf]
  %v133 = vld [vmem:[%s1 + $0x1bc] sm:$0xf]
  %v134 = vld [vmem:[%s1 + $0x1c0] sm:$0xf]
  %v135 = vld [vmem:[%s1 + $0x1c4] sm:$0xf]
  %v136 = vld [vmem:[%s1 + $0x1c8] sm:$0xf]
  %v137 = vld [vmem:[%s1 + $0x1cc] sm:$0xf]
  %v138 = vld [vmem:[%s1 + $0x1d0] sm:$0xf]
  %v139 = vld [vmem:[%s1 + $0x1d4] sm:$0xf]
  %v140 = vld [vmem:[%s1 + $0x1d8] sm:$0xf]
  %v141 = vld [vmem:[%s1 + $0x1dc] sm:$0xf]
  %v142 = vld [vmem:[%s1 + $0x1e0] sm:$0xf]
  %v143 = vld [vmem:[%s1 + $0x1e4] sm:$0xf]
  %v144 = vld [vmem:[%s1 + $0x1e8] sm:$0xf]
  %v145 = vld [vmem:[%s1 + $0x1ec] sm:$0xf]
  %v146 = vld [vmem:[%s1 + $0x1f0] sm:$0xf]
  %v147 = vld [vmem:[%s1 + $0x1f4] sm:$0xf]
  %v148 = vld [vmem:[%s1 + $0x1f8] sm:$0xf]
  %v149 = vld [vmem:[%s1 + $0x1fc] sm:$0xf]
  %v150 = vld [vmem:[%s1 + $0x200] sm:$0xf]
  %v151 = vld [vmem:[%s1 + $0x204] sm:$0xf]
  %v152 = vld [vmem:[%s1 + $0x208] sm:$0xf]
  %v153 = vld [vmem:[%s1 + $0x20c] sm:$0xf]
  %v154 = vld [vmem:[%s1 + $0x210] sm:$0xf]
  %v155 = vld [vmem:[%s1 + $0x214] sm:$0xf]
  %v156 = vld [vmem:[%s1 + $0x218] sm:$0xf]
  %v157 = vld [vmem:[%s1 + $0x21c] sm:$0xf]
  %v158 = vld [vmem:[%s1 + $0x220] sm:$0xf]
  %v159 = vld [vmem:[%s1 + $0x224] sm:$0xf]
  %v160 = vld [vmem:[%s1 + $0x228] sm:$0xf]
  %v161 = vld [vmem:[%s1 + $0x22c] sm:$0xf]
  %v162 = vld [vmem:[%s1 + $0x230] sm:$0xf]
  %v163 = vld [vmem:[%s1 + $0x234] sm:$0xf]
  %v164 = vld [vmem:[%s1 + $0x238] sm:$0xf]
  %v165 = vld [vmem:[%s1 + $0x23c] sm:$0xf]
  %v166 = vld [vmem:[%s1 + $0x240] sm:$0xf]
  %v167 = vld [vmem:[%s1 + $0x244] sm:$0xf]
  %v168 = vld [vmem:[%s1 + $0x248] sm:$0xf]
  %v169 = vld [vmem:[%s1 + $0x24c] sm:$0xf]
  %v170 = vld [vmem:[%s1 + $0x250] sm:$0xf]
  %v171 = vld [vmem:[%s1 + $0x254] sm:$0xf]
  %v172 = vld [vmem:[%s1 + $0x258] sm:$0xf]
  %v173 = vld [vmem:[%s1 + $0x25c] sm:$0xf]
  %v174 = vld [vmem:[%s1 + $0x260] sm:$0xf]
  %v175 = vld [vmem:[%s1 + $0x264] sm:$0xf]
  %v176 = vld [vmem:[%s1 + $0x268] sm:$0xf]
  %v177 = vld [vmem:[%s1 + $0x26c] sm:$0xf]
  %v178 = vld [vmem:[%s1 + $0x270] sm:$0xf]
  %v179 = vld [vmem:[%s1 + $0x274] sm:$0xf]
  %v180 = vld [vmem:[%s1 + $0x278] sm:$0xf]
  %v181 = vld [vmem:[%s1 + $0x27c] sm:$0xf]
  %v182 = vld [vmem:[%s1 + $0x280] sm:$0xf]
  %v183 = vld [vmem:[%s1 + $0x284] sm:$0xf]
  %v184 = vld [vmem:[%s1 + $0x288] sm:$0xf]
  %v185 = vld [vmem:[%s1 + $0x28c] sm:$0xf]
  %v186 = vld [vmem:[%s1 + $0x290] sm:$0xf]
  %v187 = vld [vmem:[%s1 + $0x294] sm:$0xf]
  %v188 = vld [vmem:[%s1 + $0x298] sm:$0xf]
  %v189 = vld [vmem:[%s1 + $0x29c] sm:$0xf]
  %v190 = vld [vmem:[%s1 + $0x2a0] sm:$0xf]
  %v191 = vld [vmem:[%s1 + $0x2a4] sm:$0xf]
  %v192 = vld [vmem:[%s1 + $0x2a8] sm:$0xf]
  %v193 = vld [vmem:[%s1 + $0x2ac] sm:$0xf]
  %v194 = vld [vmem:[%s1 + $0x2b0] sm:$0xf]
  %v195 = vld [vmem:[%s1 + $0x2b4] sm:$0xf]
  %v196 = vld [vmem:[%s1 + $0x2b8] sm:$0xf]
  %v197 = vld [vmem:[%s1 + $0x2bc] sm:$0xf]
  %v198 = vld [vmem:[%s1 + $0x2c0] sm:$0xf]
  %v199 = vld [vmem:[%s1 + $0x2c4] sm:$0xf]
  %v200 = vld [vmem:[%s1 + $0x2c8] sm:$0xf]
  %v201 = vld [vmem:[%s1 + $0x2cc] sm:$0xf]
  %v202 = vld [vmem:[%s1 + $0x2d0] sm:$0xf]
  %v203 = vld [vmem:[%s1 + $0x2d4] sm:$0xf]
  %v204 = vld [vmem:[%s1 + $0x2d8] sm:$0xf]
  %v205 = vld [vmem:[%s1 + $0x2dc] sm:$0xf]
  %v206 = vld [vmem:[%s1 + $0x2e0] sm:$0xf]
  %v207 = vld [vmem:[%s1 + $0x2e4] sm:$0xf]
  %v208 = vld [vmem:[%s1 + $0x2e8] sm:$0xf]
  %v209 = vld [vmem:[%s1 + $0x2ec] sm:$0xf]
  %v210 = vld [vmem:[%s1 + $0x2f0] sm:$0xf]
  %v211 = vld [vmem:[%s1 + $0x2f4] sm:$0xf]
  %v212 = vld [vmem:[%s1 + $0x2f8] sm:$0xf]
  %v213 = vld [vmem:[%s1 + $0x2fc] sm:$0xf]
  %v214 = vld [vmem:[%s1 + $0x300] sm:$0xf]
  %v215 = vld [vmem:[%s1 + $0x304] sm:$0xf]
  %v216 = vld [vmem:[%s1 + $0x308] sm:$0xf]
  %v217 = vld [vmem:[%s1 + $0x30c] sm:$0xf]
  %v218 = vld [vmem:[%s1 + $0x310] sm:$0xf]
  %v219 = vld [vmem:[%s1 + $0x314] sm:$0xf]
  %v220 = vld [vmem:[%s1 + $0x318] sm:$0xf]
  %v221 = vld [vmem:[%s1 + $0x31c] sm:$0xf]
  %v222 = vld [vmem:[%s1 + $0x320] sm:$0xf]
  %v223 = vld [vmem:[%s1 + $0x324] sm:$0xf]
  %v224 = vld [vmem:[%s1 + $0x328] sm:$0xf]
  %v225 = vld [vmem:[%s1 + $0x32c] sm:$0xf]
  %v226 = vld [vmem:[%s1 + $0x330] sm:$0xf]
  %v227 = vld [vmem:[%s1 + $0x334] sm:$0xf]
  %v228 = vld [vmem:[%s1 + $0x338] sm:$0xf]
  %v229 = vld [vmem:[%s1 + $0x33c] sm:$0xf]
  %v230 = vld [vmem:[%s2] sm:$0x1]
  %v232 = vlaneseq
  %v233 = vshrl.u32 %v232, 7
  %v234 = vsub.s32 0, %v233
  %v235 = vrot.slane %v230, %v234
  %v244 = vunpack.c.l.b16 %v15
  %v245 = vunpack.c.h.b16 %v15
  %v246 = vunpack.c.l.b16 %v16
  %v247 = vunpack.c.h.b16 %v16
  %v248 = vunpack.c.l.b16 %v17
  %v249 = vunpack.c.h.b16 %v17
  %v250 = vunpack.c.l.b16 %v18
  %v251 = vunpack.c.h.b16 %v18
  %v252 = vunpack.c.l.b16 %v19
  %v253 = vunpack.c.h.b16 %v19
  %v254 = vunpack.c.l.b16 %v20
  %v255 = vunpack.c.h.b16 %v20
  %v256 = vunpack.c.l.b16 %v21
  %v257 = vpack.c.b16 %v244, %v244
  %v258 = vpack.c.b16 %v245, %v245
  %v259 = vpack.c.b16 %v246, %v246
  %v260 = vpack.c.b16 %v247, %v247
  %v261 = vpack.c.b16 %v248, %v248
  %v262 = vpack.c.b16 %v249, %v249
  %v263 = vpack.c.b16 %v250, %v250
  %v264 = vpack.c.b16 %v251, %v251
  %v265 = vpack.c.b16 %v252, %v252
  %v266 = vpack.c.b16 %v253, %v253
  %v267 = vpack.c.b16 %v254, %v254
  %v268 = vpack.c.b16 %v255, %v255
  %v269 = vpack.c.b16 %v256, %v256
  %v491 = vunpack.c.l.b16 %v22
  %v492 = vunpack.c.l.b16 %v23
  %v493 = vunpack.c.l.b16 %v24
  %v494 = vunpack.c.l.b16 %v25
  %v495 = vunpack.c.l.b16 %v26
  %v496 = vunpack.c.l.b16 %v27
  %v497 = vunpack.c.l.b16 %v28
  %v498 = vunpack.c.l.b16 %v29
  %v499 = vunpack.c.l.b16 %v30
  %v500 = vunpack.c.l.b16 %v31
  %v501 = vunpack.c.l.b16 %v32
  %v502 = vunpack.c.l.b16 %v33
  %v503 = vunpack.c.l.b16 %v34
  %v504 = vunpack.c.l.b16 %v35
  %v505 = vunpack.c.l.b16 %v36
  %v506 = vunpack.c.l.b16 %v37
  %v507 = vunpack.c.l.b16 %v38
  %v508 = vunpack.c.l.b16 %v39
  %v509 = vunpack.c.l.b16 %v40
  %v510 = vunpack.c.l.b16 %v41
  %v511 = vunpack.c.l.b16 %v42
  %v512 = vunpack.c.l.b16 %v43
  %v513 = vunpack.c.l.b16 %v44
  %v514 = vunpack.c.l.b16 %v45
  %v515 = vunpack.c.l.b16 %v46
  %v516 = vunpack.c.l.b16 %v47
  %v517 = vunpack.c.l.b16 %v48
  %v518 = vunpack.c.l.b16 %v49
  %v519 = vunpack.c.l.b16 %v50
  %v520 = vunpack.c.l.b16 %v51
  %v521 = vunpack.c.l.b16 %v52
  %v522 = vunpack.c.l.b16 %v53
  %v523 = vunpack.c.l.b16 %v54
  %v524 = vunpack.c.l.b16 %v55
  %v525 = vunpack.c.l.b16 %v56
  %v526 = vunpack.c.l.b16 %v57
  %v527 = vunpack.c.l.b16 %v58
  %v528 = vunpack.c.l.b16 %v59
  %v529 = vunpack.c.l.b16 %v60
  %v530 = vunpack.c.l.b16 %v61
  %v531 = vunpack.c.l.b16 %v62
  %v532 = vunpack.c.l.b16 %v63
  %v533 = vunpack.c.l.b16 %v64
  %v534 = vunpack.c.l.b16 %v65
  %v535 = vunpack.c.l.b16 %v66
  %v536 = vunpack.c.l.b16 %v67
  %v537 = vunpack.c.l.b16 %v68
  %v538 = vunpack.c.l.b16 %v69
  %v539 = vunpack.c.l.b16 %v70
  %v540 = vunpack.c.l.b16 %v71
  %v541 = vunpack.c.l.b16 %v72
  %v542 = vunpack.c.l.b16 %v73
  %v543 = vunpack.c.l.b16 %v74
  %v544 = vunpack.c.l.b16 %v75
  %v545 = vunpack.c.l.b16 %v76
  %v546 = vunpack.c.l.b16 %v77
  %v547 = vunpack.c.l.b16 %v78
  %v548 = vunpack.c.l.b16 %v79
  %v549 = vunpack.c.l.b16 %v80
  %v550 = vunpack.c.l.b16 %v81
  %v551 = vunpack.c.l.b16 %v82
  %v552 = vunpack.c.l.b16 %v83
  %v553 = vunpack.c.l.b16 %v84
  %v554 = vunpack.c.l.b16 %v85
  %v555 = vunpack.c.l.b16 %v86
  %v556 = vunpack.c.l.b16 %v87
  %v557 = vunpack.c.l.b16 %v88
  %v558 = vunpack.c.l.b16 %v89
  %v559 = vunpack.c.l.b16 %v90
  %v560 = vunpack.c.l.b16 %v91
  %v561 = vunpack.c.l.b16 %v92
  %v562 = vunpack.c.l.b16 %v93
  %v563 = vunpack.c.l.b16 %v94
  %v564 = vunpack.c.l.b16 %v95
  %v565 = vunpack.c.l.b16 %v96
  %v566 = vunpack.c.l.b16 %v97
  %v567 = vunpack.c.l.b16 %v98
  %v568 = vunpack.c.l.b16 %v99
  %v569 = vunpack.c.l.b16 %v100
  %v570 = vunpack.c.l.b16 %v101
  %v571 = vunpack.c.l.b16 %v102
  %v572 = vunpack.c.l.b16 %v103
  %v573 = vunpack.c.l.b16 %v104
  %v574 = vunpack.c.l.b16 %v105
  %v575 = vunpack.c.l.b16 %v106
  %v576 = vunpack.c.l.b16 %v107
  %v577 = vunpack.c.l.b16 %v108
  %v578 = vunpack.c.l.b16 %v109
  %v579 = vunpack.c.l.b16 %v110
  %v580 = vunpack.c.l.b16 %v111
  %v581 = vunpack.c.l.b16 %v112
  %v582 = vunpack.c.l.b16 %v113
  %v583 = vunpack.c.l.b16 %v114
  %v584 = vunpack.c.l.b16 %v115
  %v585 = vunpack.c.l.b16 %v116
  %v586 = vunpack.c.l.b16 %v117
  %v587 = vunpack.c.l.b16 %v118
  %v588 = vunpack.c.l.b16 %v119
  %v589 = vunpack.c.l.b16 %v120
  %v590 = vunpack.c.l.b16 %v121
  %v591 = vunpack.c.l.b16 %v122
  %v592 = vunpack.c.l.b16 %v123
  %v593 = vunpack.c.l.b16 %v124
  %v594 = vunpack.c.l.b16 %v125
  %v595 = vunpack.c.l.b16 %v126
  %v596 = vunpack.c.l.b16 %v127
  %v597 = vunpack.c.l.b16 %v128
  %v598 = vunpack.c.l.b16 %v129
  %v599 = vunpack.c.l.b16 %v130
  %v600 = vunpack.c.l.b16 %v131
  %v601 = vunpack.c.l.b16 %v132
  %v602 = vunpack.c.l.b16 %v133
  %v603 = vunpack.c.l.b16 %v134
  %v604 = vunpack.c.l.b16 %v135
  %v605 = vunpack.c.l.b16 %v136
  %v606 = vunpack.c.l.b16 %v137
  %v607 = vunpack.c.l.b16 %v138
  %v608 = vunpack.c.l.b16 %v139
  %v609 = vunpack.c.l.b16 %v140
  %v610 = vunpack.c.l.b16 %v141
  %v611 = vunpack.c.l.b16 %v142
  %v612 = vunpack.c.l.b16 %v143
  %v613 = vunpack.c.l.b16 %v144
  %v614 = vunpack.c.l.b16 %v145
  %v615 = vunpack.c.l.b16 %v146
  %v616 = vunpack.c.l.b16 %v147
  %v617 = vunpack.c.l.b16 %v148
  %v618 = vunpack.c.l.b16 %v149
  %v619 = vunpack.c.l.b16 %v150
  %v620 = vunpack.c.l.b16 %v151
  %v621 = vunpack.c.l.b16 %v152
  %v622 = vunpack.c.l.b16 %v153
  %v623 = vunpack.c.l.b16 %v154
  %v624 = vunpack.c.l.b16 %v155
  %v625 = vunpack.c.l.b16 %v156
  %v626 = vunpack.c.l.b16 %v157
  %v627 = vunpack.c.l.b16 %v158
  %v628 = vunpack.c.l.b16 %v159
  %v629 = vunpack.c.l.b16 %v160
  %v630 = vunpack.c.l.b16 %v161
  %v631 = vunpack.c.l.b16 %v162
  %v632 = vunpack.c.l.b16 %v163
  %v633 = vunpack.c.l.b16 %v164
  %v634 = vunpack.c.l.b16 %v165
  %v635 = vunpack.c.l.b16 %v166
  %v636 = vunpack.c.l.b16 %v167
  %v637 = vunpack.c.l.b16 %v168
  %v638 = vunpack.c.l.b16 %v169
  %v639 = vunpack.c.l.b16 %v170
  %v640 = vunpack.c.l.b16 %v171
  %v641 = vunpack.c.l.b16 %v172
  %v642 = vunpack.c.l.b16 %v173
  %v643 = vunpack.c.l.b16 %v174
  %v644 = vunpack.c.l.b16 %v175
  %v645 = vunpack.c.l.b16 %v176
  %v646 = vunpack.c.l.b16 %v177
  %v647 = vunpack.c.l.b16 %v178
  %v648 = vunpack.c.l.b16 %v179
  %v649 = vunpack.c.l.b16 %v180
  %v650 = vunpack.c.l.b16 %v181
  %v651 = vunpack.c.l.b16 %v182
  %v652 = vunpack.c.l.b16 %v183
  %v653 = vunpack.c.l.b16 %v184
  %v654 = vunpack.c.l.b16 %v185
  %v655 = vunpack.c.l.b16 %v186
  %v656 = vunpack.c.l.b16 %v187
  %v657 = vunpack.c.l.b16 %v188
  %v658 = vunpack.c.l.b16 %v189
  %v659 = vunpack.c.l.b16 %v190
  %v660 = vunpack.c.l.b16 %v191
  %v661 = vunpack.c.l.b16 %v192
  %v662 = vunpack.c.l.b16 %v193
  %v663 = vunpack.c.l.b16 %v194
  %v664 = vunpack.c.l.b16 %v195
  %v665 = vunpack.c.l.b16 %v196
  %v666 = vunpack.c.l.b16 %v197
  %v667 = vunpack.c.l.b16 %v198
  %v668 = vunpack.c.l.b16 %v199
  %v669 = vunpack.c.l.b16 %v200
  %v670 = vunpack.c.l.b16 %v201
  %v671 = vunpack.c.l.b16 %v202
  %v672 = vunpack.c.l.b16 %v203
  %v673 = vunpack.c.l.b16 %v204
  %v674 = vunpack.c.l.b16 %v205
  %v675 = vunpack.c.l.b16 %v206
  %v676 = vunpack.c.l.b16 %v207
  %v677 = vunpack.c.l.b16 %v208
  %v678 = vunpack.c.l.b16 %v209
  %v679 = vunpack.c.l.b16 %v210
  %v680 = vunpack.c.l.b16 %v211
  %v681 = vunpack.c.l.b16 %v212
  %v682 = vunpack.c.l.b16 %v213
  %v683 = vunpack.c.l.b16 %v214
  %v684 = vunpack.c.l.b16 %v215
  %v685 = vunpack.c.l.b16 %v216
  %v686 = vunpack.c.l.b16 %v217
  %v687 = vunpack.c.l.b16 %v218
  %v688 = vunpack.c.l.b16 %v219
  %v689 = vunpack.c.l.b16 %v220
  %v690 = vunpack.c.l.b16 %v221
  %v691 = vunpack.c.l.b16 %v222
  %v692 = vunpack.c.l.b16 %v223
  %v693 = vunpack.c.l.b16 %v224
  %v694 = vunpack.c.l.b16 %v225
  %v695 = vunpack.c.l.b16 %v226
  %v696 = vunpack.c.l.b16 %v227
  %v697 = vunpack.c.l.b16 %v228
  %v698 = vunpack.c.l.b16 %v229
  %v699 = vpack.c.b16 %v492, %v491
  %v700 = vpack.c.b16 %v494, %v493
  %v701 = vpack.c.b16 %v496, %v495
  %v702 = vpack.c.b16 %v498, %v497
  %v703 = vpack.c.b16 %v500, %v499
  %v704 = vpack.c.b16 %v502, %v501
  %v705 = vpack.c.b16 %v504, %v503
  %v706 = vpack.c.b16 %v506, %v505
  %v707 = vpack.c.b16 %v508, %v507
  %v708 = vpack.c.b16 %v510, %v509
  %v709 = vpack.c.b16 %v512, %v511
  %v710 = vpack.c.b16 %v514, %v513
  %v711 = vpack.c.b16 %v516, %v515
  %v712 = vpack.c.b16 %v518, %v517
  %v713 = vpack.c.b16 %v520, %v519
  %v714 = vpack.c.b16 %v522, %v521
  %v715 = vpack.c.b16 %v524, %v523
  %v716 = vpack.c.b16 %v526, %v525
  %v717 = vpack.c.b16 %v528, %v527
  %v718 = vpack.c.b16 %v530, %v529
  %v719 = vpack.c.b16 %v532, %v531
  %v720 = vpack.c.b16 %v534, %v533
  %v721 = vpack.c.b16 %v536, %v535
  %v722 = vpack.c.b16 %v538, %v537
  %v723 = vpack.c.b16 %v540, %v539
  %v724 = vpack.c.b16 %v542, %v541
  %v725 = vpack.c.b16 %v544, %v543
  %v726 = vpack.c.b16 %v546, %v545
  %v727 = vpack.c.b16 %v548, %v547
  %v728 = vpack.c.b16 %v550, %v549
  %v729 = vpack.c.b16 %v552, %v551
  %v730 = vpack.c.b16 %v554, %v553
  %v731 = vpack.c.b16 %v556, %v555
  %v732 = vpack.c.b16 %v558, %v557
  %v733 = vpack.c.b16 %v560, %v559
  %v734 = vpack.c.b16 %v562, %v561
  %v735 = vpack.c.b16 %v564, %v563
  %v736 = vpack.c.b16 %v566, %v565
  %v737 = vpack.c.b16 %v568, %v567
  %v738 = vpack.c.b16 %v570, %v569
  %v739 = vpack.c.b16 %v572, %v571
  %v740 = vpack.c.b16 %v574, %v573
  %v741 = vpack.c.b16 %v576, %v575
  %v742 = vpack.c.b16 %v578, %v577
  %v743 = vpack.c.b16 %v580, %v579
  %v744 = vpack.c.b16 %v582, %v581
  %v745 = vpack.c.b16 %v584, %v583
  %v746 = vpack.c.b16 %v586, %v585
  %v747 = vpack.c.b16 %v588, %v587
  %v748 = vpack.c.b16 %v590, %v589
  %v749 = vpack.c.b16 %v592, %v591
  %v750 = vpack.c.b16 %v594, %v593
  %v751 = vpack.c.b16 %v596, %v595
  %v752 = vpack.c.b16 %v598, %v597
  %v753 = vpack.c.b16 %v600, %v599
  %v754 = vpack.c.b16 %v602, %v601
  %v755 = vpack.c.b16 %v604, %v603
  %v756 = vpack.c.b16 %v606, %v605
  %v757 = vpack.c.b16 %v608, %v607
  %v758 = vpack.c.b16 %v610, %v609
  %v759 = vpack.c.b16 %v612, %v611
  %v760 = vpack.c.b16 %v614, %v613
  %v761 = vpack.c.b16 %v616, %v615
  %v762 = vpack.c.b16 %v618, %v617
  %v763 = vpack.c.b16 %v620, %v619
  %v764 = vpack.c.b16 %v622, %v621
  %v765 = vpack.c.b16 %v624, %v623
  %v766 = vpack.c.b16 %v626, %v625
  %v767 = vpack.c.b16 %v628, %v627
  %v768 = vpack.c.b16 %v630, %v629
  %v769 = vpack.c.b16 %v632, %v631
  %v770 = vpack.c.b16 %v634, %v633
  %v771 = vpack.c.b16 %v636, %v635
  %v772 = vpack.c.b16 %v638, %v637
  %v773 = vpack.c.b16 %v640, %v639
  %v774 = vpack.c.b16 %v642, %v641
  %v775 = vpack.c.b16 %v644, %v643
  %v776 = vpack.c.b16 %v646, %v645
  %v777 = vpack.c.b16 %v648, %v647
  %v778 = vpack.c.b16 %v650, %v649
  %v779 = vpack.c.b16 %v652, %v651
  %v780 = vpack.c.b16 %v654, %v653
  %v781 = vpack.c.b16 %v656, %v655
  %v782 = vpack.c.b16 %v658, %v657
  %v783 = vpack.c.b16 %v660, %v659
  %v784 = vpack.c.b16 %v662, %v661
  %v785 = vpack.c.b16 %v664, %v663
  %v786 = vpack.c.b16 %v666, %v665
  %v787 = vpack.c.b16 %v668, %v667
  %v788 = vpack.c.b16 %v670, %v669
  %v789 = vpack.c.b16 %v672, %v671
  %v790 = vpack.c.b16 %v674, %v673
  %v791 = vpack.c.b16 %v676, %v675
  %v792 = vpack.c.b16 %v678, %v677
  %v793 = vpack.c.b16 %v680, %v679
  %v794 = vpack.c.b16 %v682, %v681
  %v795 = vpack.c.b16 %v684, %v683
  %v796 = vpack.c.b16 %v686, %v685
  %v797 = vpack.c.b16 %v688, %v687
  %v798 = vpack.c.b16 %v690, %v689
  %v799 = vpack.c.b16 %v692, %v691
  %v800 = vpack.c.b16 %v694, %v693
  %v801 = vpack.c.b16 %v696, %v695
  %v802 = vpack.c.b16 %v698, %v697
  %907 = vmatprep.subr.bf16.mxu0 0
  %908 = vmatpush1.bf16.msra.mxu0 %v699
  %909 = vmatprep.subr.bf16.mxu0 0
  %910 = vmatpush1.bf16.msra.mxu0 %v700
  %911 = vmatprep.subr.bf16.mxu0 0
  %912 = vmatpush1.bf16.msra.mxu0 %v701
  %913 = vmatprep.subr.bf16.mxu0 0
  %914 = vmatpush1.bf16.msra.mxu0 %v702
  %915 = vmatprep.subr.bf16.mxu0 0
  %916 = vmatpush1.bf16.msra.mxu0 %v703
  %917 = vmatprep.subr.bf16.mxu0 0
  %918 = vmatpush1.bf16.msra.mxu0 %v704
  %919 = vmatprep.subr.bf16.mxu0 0
  %920 = vmatpush1.bf16.msra.mxu0 %v705
  %921 = vmatprep.subr.bf16.mxu0 0
  %922 = vmatpush1.bf16.msra.mxu0 %v706
  %923 = vmatprep.subr.bf16.mxu0 0
  %924 = vmatpush1.bf16.msra.mxu0 %v707
  %925 = vmatprep.subr.bf16.mxu0 0
  %926 = vmatpush1.bf16.msra.mxu0 %v708
  %927 = vmatprep.subr.bf16.mxu0 0
  %928 = vmatpush1.bf16.msra.mxu0 %v709
  %929 = vmatprep.subr.bf16.mxu0 0
  %930 = vmatpush1.bf16.msra.mxu0 %v710
  %931 = vmatprep.subr.bf16.mxu0 0
  %932 = vmatpush1.bf16.msra.mxu0 %v711
  %933 = vmatprep.subr.bf16.mxu0 0
  %934 = vmatpush1.bf16.msra.mxu0 %v712
  %935 = vmatprep.subr.bf16.mxu0 0
  %936 = vmatpush1.bf16.msra.mxu0 %v713
  %937 = vmatprep.subr.bf16.mxu0 0
  %938 = vmatpush1.bf16.msra.mxu0 %v714
  %939 = vmatprep.mubr.bf16.mxu0 %v258
  %940 = vmatmul.mubr.bf16.gmra.mrb[0].mxu0 %v257
  %v941 = vpop.f32.mrb[0].mxu0
  %v942 = vadd.f32 %v235, %v941
  %v943 = vpop.f32.mrb[0].mxu0
  %v944 = vpop.f32.mrb[0].mxu0
  %v945 = vpop.f32.mrb[0].mxu0
  %946 = vdwg.mxu0
  %947 = vmatprep.subr.bf16.mxu0 0
  %948 = vmatpush1.bf16.msra.mxu0 %v715
  %949 = vmatprep.subr.bf16.mxu0 0
  %950 = vmatpush1.bf16.msra.mxu0 %v716
  %951 = vmatprep.subr.bf16.mxu0 0
  %952 = vmatpush1.bf16.msra.mxu0 %v717
  %953 = vmatprep.subr.bf16.mxu0 0
  %954 = vmatpush1.bf16.msra.mxu0 %v718
  %955 = vmatprep.subr.bf16.mxu0 0
  %956 = vmatpush1.bf16.msra.mxu0 %v719
  %957 = vmatprep.subr.bf16.mxu0 0
  %958 = vmatpush1.bf16.msra.mxu0 %v720
  %959 = vmatprep.subr.bf16.mxu0 0
  %960 = vmatpush1.bf16.msra.mxu0 %v721
  %961 = vmatprep.subr.bf16.mxu0 0
  %962 = vmatpush1.bf16.msra.mxu0 %v722
  %963 = vmatprep.subr.bf16.mxu0 0
  %964 = vmatpush1.bf16.msra.mxu0 %v723
  %965 = vmatprep.subr.bf16.mxu0 0
  %966 = vmatpush1.bf16.msra.mxu0 %v724
  %967 = vmatprep.subr.bf16.mxu0 0
  %968 = vmatpush1.bf16.msra.mxu0 %v725
  %969 = vmatprep.subr.bf16.mxu0 0
  %970 = vmatpush1.bf16.msra.mxu0 %v726
  %971 = vmatprep.subr.bf16.mxu0 0
  %972 = vmatpush1.bf16.msra.mxu0 %v727
  %973 = vmatprep.subr.bf16.mxu0 0
  %974 = vmatpush1.bf16.msra.mxu0 %v728
  %975 = vmatprep.subr.bf16.mxu0 0
  %976 = vmatpush1.bf16.msra.mxu0 %v729
  %977 = vmatprep.subr.bf16.mxu0 0
  %978 = vmatpush1.bf16.msra.mxu0 %v730
  %979 = vmatprep.mubr.bf16.mxu0 %v260
  %980 = vmatmul.mubr.bf16.gmra.mrb[0].mxu0 %v259
  %v981 = vpop.f32.mrb[0].mxu0
  %v982 = vadd.f32 %v942, %v981
  %v983 = vpop.f32.mrb[0].mxu0
  %v984 = vpop.f32.mrb[0].mxu0
  %v985 = vpop.f32.mrb[0].mxu0
  %986 = vdwg.mxu0
  %987 = vmatprep.subr.bf16.mxu0 0
  %988 = vmatpush1.bf16.msra.mxu0 %v731
  %989 = vmatprep.subr.bf16.mxu0 0
  %990 = vmatpush1.bf16.msra.mxu0 %v732
  %991 = vmatprep.subr.bf16.mxu0 0
  %992 = vmatpush1.bf16.msra.mxu0 %v733
  %993 = vmatprep.subr.bf16.mxu0 0
  %994 = vmatpush1.bf16.msra.mxu0 %v734
  %995 = vmatprep.subr.bf16.mxu0 0
  %996 = vmatpush1.bf16.msra.mxu0 %v735
  %997 = vmatprep.subr.bf16.mxu0 0
  %998 = vmatpush1.bf16.msra.mxu0 %v736
  %999 = vmatprep.subr.bf16.mxu0 0
  %1000 = vmatpush1.bf16.msra.mxu0 %v737
  %1001 = vmatprep.subr.bf16.mxu0 0
  %1002 = vmatpush1.bf16.msra.mxu0 %v738
  %1003 = vmatprep.subr.bf16.mxu0 0
  %1004 = vmatpush1.bf16.msra.mxu0 %v739
  %1005 = vmatprep.subr.bf16.mxu0 0
  %1006 = vmatpush1.bf16.msra.mxu0 %v740
  %1007 = vmatprep.subr.bf16.mxu0 0
  %1008 = vmatpush1.bf16.msra.mxu0 %v741
  %1009 = vmatprep.subr.bf16.mxu0 0
  %1010 = vmatpush1.bf16.msra.mxu0 %v742
  %1011 = vmatprep.subr.bf16.mxu0 0
  %1012 = vmatpush1.bf16.msra.mxu0 %v743
  %1013 = vmatprep.subr.bf16.mxu0 0
  %1014 = vmatpush1.bf16.msra.mxu0 %v744
  %1015 = vmatprep.subr.bf16.mxu0 0
  %1016 = vmatpush1.bf16.msra.mxu0 %v745
  %1017 = vmatprep.subr.bf16.mxu0 0
  %1018 = vmatpush1.bf16.msra.mxu0 %v746
  %1019 = vmatprep.mubr.bf16.mxu0 %v262
  %1020 = vmatmul.mubr.bf16.gmra.mrb[0].mxu0 %v261
  %v1021 = vpop.f32.mrb[0].mxu0
  %v1022 = vadd.f32 %v982, %v1021
  %v1023 = vpop.f32.mrb[0].mxu0
  %v1024 = vpop.f32.mrb[0].mxu0
  %v1025 = vpop.f32.mrb[0].mxu0
  %1026 = vdwg.mxu0
  %1027 = vmatprep.subr.bf16.mxu0 0
  %1028 = vmatpush1.bf16.msra.mxu0 %v747
  %1029 = vmatprep.subr.bf16.mxu0 0
  %1030 = vmatpush1.bf16.msra.mxu0 %v748
  %1031 = vmatprep.subr.bf16.mxu0 0
  %1032 = vmatpush1.bf16.msra.mxu0 %v749
  %1033 = vmatprep.subr.bf16.mxu0 0
  %1034 = vmatpush1.bf16.msra.mxu0 %v750
  %1035 = vmatprep.subr.bf16.mxu0 0
  %1036 = vmatpush1.bf16.msra.mxu0 %v751
  %1037 = vmatprep.subr.bf16.mxu0 0
  %1038 = vmatpush1.bf16.msra.mxu0 %v752
  %1039 = vmatprep.subr.bf16.mxu0 0
  %1040 = vmatpush1.bf16.msra.mxu0 %v753
  %1041 = vmatprep.subr.bf16.mxu0 0
  %1042 = vmatpush1.bf16.msra.mxu0 %v754
  %1043 = vmatprep.subr.bf16.mxu0 0
  %1044 = vmatpush1.bf16.msra.mxu0 %v755
  %1045 = vmatprep.subr.bf16.mxu0 0
  %1046 = vmatpush1.bf16.msra.mxu0 %v756
  %1047 = vmatprep.subr.bf16.mxu0 0
  %1048 = vmatpush1.bf16.msra.mxu0 %v757
  %1049 = vmatprep.subr.bf16.mxu0 0
  %1050 = vmatpush1.bf16.msra.mxu0 %v758
  %1051 = vmatprep.subr.bf16.mxu0 0
  %1052 = vmatpush1.bf16.msra.mxu0 %v759
  %1053 = vmatprep.subr.bf16.mxu0 0
  %1054 = vmatpush1.bf16.msra.mxu0 %v760
  %1055 = vmatprep.subr.bf16.mxu0 0
  %1056 = vmatpush1.bf16.msra.mxu0 %v761
  %1057 = vmatprep.subr.bf16.mxu0 0
  %1058 = vmatpush1.bf16.msra.mxu0 %v762
  %1059 = vmatprep.mubr.bf16.mxu0 %v264
  %1060 = vmatmul.mubr.bf16.gmra.mrb[0].mxu0 %v263
  %v1061 = vpop.f32.mrb[0].mxu0
  %v1062 = vadd.f32 %v1022, %v1061
  %v1063 = vpop.f32.mrb[0].mxu0
  %v1064 = vpop.f32.mrb[0].mxu0
  %v1065 = vpop.f32.mrb[0].mxu0
  %1066 = vdwg.mxu0
  %1067 = vmatprep.subr.bf16.mxu0 0
  %1068 = vmatpush1.bf16.msra.mxu0 %v763
  %1069 = vmatprep.subr.bf16.mxu0 0
  %1070 = vmatpush1.bf16.msra.mxu0 %v764
  %1071 = vmatprep.subr.bf16.mxu0 0
  %1072 = vmatpush1.bf16.msra.mxu0 %v765
  %1073 = vmatprep.subr.bf16.mxu0 0
  %1074 = vmatpush1.bf16.msra.mxu0 %v766
  %1075 = vmatprep.subr.bf16.mxu0 0
  %1076 = vmatpush1.bf16.msra.mxu0 %v767
  %1077 = vmatprep.subr.bf16.mxu0 0
  %1078 = vmatpush1.bf16.msra.mxu0 %v768
  %1079 = vmatprep.subr.bf16.mxu0 0
  %1080 = vmatpush1.bf16.msra.mxu0 %v769
  %1081 = vmatprep.subr.bf16.mxu0 0
  %1082 = vmatpush1.bf16.msra.mxu0 %v770
  %1083 = vmatprep.subr.bf16.mxu0 0
  %1084 = vmatpush1.bf16.msra.mxu0 %v771
  %1085 = vmatprep.subr.bf16.mxu0 0
  %1086 = vmatpush1.bf16.msra.mxu0 %v772
  %1087 = vmatprep.subr.bf16.mxu0 0
  %1088 = vmatpush1.bf16.msra.mxu0 %v773
  %1089 = vmatprep.subr.bf16.mxu0 0
  %1090 = vmatpush1.bf16.msra.mxu0 %v774
  %1091 = vmatprep.subr.bf16.mxu0 0
  %1092 = vmatpush1.bf16.msra.mxu0 %v775
  %1093 = vmatprep.subr.bf16.mxu0 0
  %1094 = vmatpush1.bf16.msra.mxu0 %v776
  %1095 = vmatprep.subr.bf16.mxu0 0
  %1096 = vmatpush1.bf16.msra.mxu0 %v777
  %1097 = vmatprep.subr.bf16.mxu0 0
  %1098 = vmatpush1.bf16.msra.mxu0 %v778
  %1099 = vmatprep.mubr.bf16.mxu0 %v266
  %1100 = vmatmul.mubr.bf16.gmra.mrb[0].mxu0 %v265
  %v1101 = vpop.f32.mrb[0].mxu0
  %v1102 = vadd.f32 %v1062, %v1101
  %v1103 = vpop.f32.mrb[0].mxu0
  %v1104 = vpop.f32.mrb[0].mxu0
  %v1105 = vpop.f32.mrb[0].mxu0
  %1106 = vdwg.mxu0
  %1107 = vmatprep.subr.bf16.mxu0 0
  %1108 = vmatpush1.bf16.msra.mxu0 %v779
  %1109 = vmatprep.subr.bf16.mxu0 0
  %1110 = vmatpush1.bf16.msra.mxu0 %v780
  %1111 = vmatprep.subr.bf16.mxu0 0
  %1112 = vmatpush1.bf16.msra.mxu0 %v781
  %1113 = vmatprep.subr.bf16.mxu0 0
  %1114 = vmatpush1.bf16.msra.mxu0 %v782
  %1115 = vmatprep.subr.bf16.mxu0 0
  %1116 = vmatpush1.bf16.msra.mxu0 %v783
  %1117 = vmatprep.subr.bf16.mxu0 0
  %1118 = vmatpush1.bf16.msra.mxu0 %v784
  %1119 = vmatprep.subr.bf16.mxu0 0
  %1120 = vmatpush1.bf16.msra.mxu0 %v785
  %1121 = vmatprep.subr.bf16.mxu0 0
  %1122 = vmatpush1.bf16.msra.mxu0 %v786
  %1123 = vmatprep.subr.bf16.mxu0 0
  %1124 = vmatpush1.bf16.msra.mxu0 %v787
  %1125 = vmatprep.subr.bf16.mxu0 0
  %1126 = vmatpush1.bf16.msra.mxu0 %v788
  %1127 = vmatprep.subr.bf16.mxu0 0
  %1128 = vmatpush1.bf16.msra.mxu0 %v789
  %1129 = vmatprep.subr.bf16.mxu0 0
  %1130 = vmatpush1.bf16.msra.mxu0 %v790
  %1131 = vmatprep.subr.bf16.mxu0 0
  %1132 = vmatpush1.bf16.msra.mxu0 %v791
  %1133 = vmatprep.subr.bf16.mxu0 0
  %1134 = vmatpush1.bf16.msra.mxu0 %v792
  %1135 = vmatprep.subr.bf16.mxu0 0
  %1136 = vmatpush1.bf16.msra.mxu0 %v793
  %1137 = vmatprep.subr.bf16.mxu0 0
  %1138 = vmatpush1.bf16.msra.mxu0 %v794
  %1139 = vmatprep.mubr.bf16.mxu0 %v268
  %1140 = vmatmul.mubr.bf16.gmra.mrb[0].mxu0 %v267
  %v1141 = vpop.f32.mrb[0].mxu0
  %v1142 = vadd.f32 %v1102, %v1141
  %v1143 = vpop.f32.mrb[0].mxu0
  %v1144 = vpop.f32.mrb[0].mxu0
  %v1145 = vpop.f32.mrb[0].mxu0
  %1146 = vdwg.mxu0
  %1147 = vmatprep.subr.bf16.mxu0 0
  %1148 = vmatpush1.bf16.msra.mxu0 %v795
  %1149 = vmatprep.subr.bf16.mxu0 0
  %1150 = vmatpush1.bf16.msra.mxu0 %v796
  %1151 = vmatprep.subr.bf16.mxu0 0
  %1152 = vmatpush1.bf16.msra.mxu0 %v797
  %1153 = vmatprep.subr.bf16.mxu0 0
  %1154 = vmatpush1.bf16.msra.mxu0 %v798
  %1155 = vmatprep.subr.bf16.mxu0 0
  %1156 = vmatpush1.bf16.msra.mxu0 %v799
  %1157 = vmatprep.subr.bf16.mxu0 0
  %1158 = vmatpush1.bf16.msra.mxu0 %v800
  %1159 = vmatprep.subr.bf16.mxu0 0
  %1160 = vmatpush1.bf16.msra.mxu0 %v801
  %1161 = vmatprep.subr.bf16.mxu0 0
  %1162 = vmatpush1.bf16.msra.mxu0 %v802
  %1163 = vmatprep.subr.bf16.mxu0 0
  %1164 = vmatpush1.bf16.msra.mxu0 0
  %1165 = vmatprep.subr.bf16.mxu0 0
  %1166 = vmatpush1.bf16.msra.mxu0 0
  %1167 = vmatprep.subr.bf16.mxu0 0
  %1168 = vmatpush1.bf16.msra.mxu0 0
  %1169 = vmatprep.subr.bf16.mxu0 0
  %1170 = vmatpush1.bf16.msra.mxu0 0
  %1171 = vmatprep.subr.bf16.mxu0 0
  %1172 = vmatpush1.bf16.msra.mxu0 0
  %1173 = vmatprep.subr.bf16.mxu0 0
  %1174 = vmatpush1.bf16.msra.mxu0 0
  %1175 = vmatprep.subr.bf16.mxu0 0
  %1176 = vmatpush1.bf16.msra.mxu0 0
  %1177 = vmatprep.subr.bf16.mxu0 0
  %1178 = vmatpush1.bf16.msra.mxu0 0
  %1179 = vmatprep.mubr.bf16.mxu0 0
  %1180 = vmatmul.mubr.bf16.gmra.mrb[0].mxu0 %v269
  %v1181 = vpop.f32.mrb[0].mxu0
  %v1182 = vadd.f32 %v1142, %v1181
  %v1183 = vpop.f32.mrb[0].mxu0
  %v1184 = vpop.f32.mrb[0].mxu0
  %v1185 = vpop.f32.mrb[0].mxu0
  %1186 = vdwg.mxu0
  %1187 = vst [vmem:[%s3] sm:$0xff] %v1182
  // Predicated region
  $region14: #{vargdarknet_forward.19} parent=0 // pred_check
    _
  $region15: #{vargdarknet_forward.19} parent=0 // pred_check_branch
    %1189 = sbr.rel (0) target = $region17
  $region16: #{vargdarknet_forward.19} parent=0 // pred_region
    _
  $region17: #{vargdarknet_forward.19} parent=0 // pred_fallthru
    _
  // Predicated region
  $region18: #{vargdarknet_forward.19} parent=0 // pred_check
    _
  $region19: #{vargdarknet_forward.19} parent=0 // pred_check_branch
    %1191 = sbr.rel (0) target = $region21
  $region20: #{vargdarknet_forward.19} parent=0 // pred_region
    _
  $region21: #{vargdarknet_forward.19} parent=0 // pred_fallthru
    _

</llo_original>
